<compile_context>
chip_gen: v7x
topology: tpu7x:2x2x1
jax: 0.10.0
libtpu: 0.0.40
codegen_flags: <defaults>
</compile_context>

<pallas_src>
import jax
import jax.numpy as jnp
import numpy as np
from jax import lax
from jax.experimental import pallas as pl
from jax.experimental.pallas import tpu as pltpu


def _round_up(x, m):
    return ((x + m - 1) // m) * m


def gated_conv(x, w1, b1, w2, b2):
    """x: (N, C, D, H, W) f32.  w1: (c_hidden, C, 3, 3, 3), b1: (c_hidden,),
    w2: (2*C, 2*c_hidden, 1, 1, 1), b2: (2*C,).  Returns (N, C, D, H, W) f32."""
    N, C, D, H, W = x.shape
    c_hidden = w1.shape[0]
    Dp, Hp, Wp = D + 2, H + 2, W + 2
    plane, row = Hp * Wp, Wp
    P = Dp * plane                               # padded volume, flattened onto lanes
    shifts = tuple(kd * plane + kh * row + kw
                   for kd in range(3) for kh in range(3) for kw in range(3))
    s_center = plane + row + 1                   # tap (1,1,1) = residual input position
    s_max = shifts[-1]

    # Lane tiling: grid step (n, v) computes output lanes [v*V_TILE, (v+1)*V_TILE);
    # its input window [v*V_TILE, v*V_TILE + V_TILE + s_max) is covered by chunks
    # v and v+1 as long as V_TILE >= s_max.
    V_TILE = max(512, _round_up(s_max, 128))
    n_v = (P + V_TILE - 1) // V_TILE
    P_comp = n_v * V_TILE                        # compute/output lane width (mult of 128)
    n_chunk = n_v + 1
    L_in = n_chunk * V_TILE                      # input lane width (>= P_comp + s_max)

    # ---- glue (plain JAX, ~1x the input size): pad, flatten, chunk, cast ----
    xp = jnp.pad(x, ((0, 0), (0, 0), (1, 1), (1, 1), (1, 1)))
    xp_flat = jnp.pad(xp.reshape(N, C, P), ((0, 0), (0, 0), (0, L_in - P)))
    xp_chunks = (xp_flat.reshape(N, C, n_chunk, V_TILE)
                 .transpose(0, 2, 1, 3)
                 .reshape(N * n_chunk, C, V_TILE)
                 .astype(jnp.bfloat16))
    # Per-tap conv1 weights, tap-major to match `shifts`: (27, c_hidden, C).
    w1_taps = (jnp.transpose(w1, (2, 3, 4, 0, 1))
               .reshape(27, c_hidden, C).astype(jnp.bfloat16))
    b1_col = b1.reshape(c_hidden, 1).astype(jnp.float32)
    w2_flat = w2.reshape(2 * C, 2 * c_hidden)
    w2a = w2_flat[:, :c_hidden].astype(jnp.bfloat16)   # acts on elu(h)
    w2b = w2_flat[:, c_hidden:].astype(jnp.bfloat16)   # acts on elu(-h)
    b2_col = b2.reshape(2 * C, 1).astype(jnp.float32)

    def kernel(xp_ref, w1_ref, b1_ref, w2a_ref, w2b_ref, b2_ref, out_ref):
        v = pl.program_id(1)
        # Two V_TILE-wide chunks = output tile + conv halo.  Chunk loads are
        # major-axis dynamic indices (cheap address math); every lane slice
        # below uses a static offset.
        wide = jnp.concatenate([xp_ref[v], xp_ref[v + 1]], axis=-1)  # (C, 2*V_TILE) bf16

        # Conv3d 3x3x3 (padding=1) as 27 shifted-slice matmuls, f32 accumulation.
        acc = jnp.zeros((c_hidden, V_TILE), jnp.float32)
        for i, s in enumerate(shifts):
            acc = acc + jnp.dot(w1_ref[i], wide[:, s:s + V_TILE],
                                preferred_element_type=jnp.float32)
        h = acc + b1_ref[...]                                        # (c_hidden, V_TILE) f32

        # ConcatELU with one shared transcendental: e = exp(-|h|) - 1
        #   elu(h)  = h if h > 0 else e
        #   elu(-h) = e if h > 0 else -h
        e = jnp.exp(-jnp.abs(h)) - 1.0
        pos = h > 0.0
        act_p = jnp.where(pos, h, e).astype(jnp.bfloat16)
        act_n = jnp.where(pos, e, -h).astype(jnp.bfloat16)

        # Conv3d 1x1x1 on the (virtually) concatenated activations: split
        # weights instead of materializing the sublane concat.
        o = (jnp.dot(w2a_ref[...], act_p, preferred_element_type=jnp.float32)
             + jnp.dot(w2b_ref[...], act_n, preferred_element_type=jnp.float32)
             + b2_ref[...])                                          # (2C, V_TILE) f32

        val = o[:C]
        gate = o[C:]
        sig = pl.reciprocal(1.0 + jnp.exp(jnp.minimum(-gate, 80.0)), approx=True)
        x_res = wide[:, s_center:s_center + V_TILE].astype(jnp.float32)
        out_ref[0] = (x_res + val * sig).astype(out_ref.dtype)

    # VMEM budget: only raise the scoped limit if the default (~32 MiB) would be
    # exceeded, and keep headroom under v7x's 64 MiB physical VMEM.
    vmem_need = (2 * (n_chunk * C * V_TILE * 2 + C * V_TILE * 4)      # double-buffered in/out blocks
                 + (6 * c_hidden + 4 * C) * V_TILE * 4                # f32 intermediates
                 + 6 * C * V_TILE * 2                                 # bf16 window + activations
                 + (27 + 4) * c_hidden * C * 2 + 4 * (c_hidden + 2 * C)
                 + (1 << 20))
    cp = dict(dimension_semantics=("parallel", "parallel"))
    if vmem_need > (32 << 20):
        cp["vmem_limit_bytes"] = min(int(1.5 * vmem_need), 56 << 20)

    out_flat = pl.pallas_call(
        kernel,
        out_shape=jax.ShapeDtypeStruct((N, C, P_comp), x.dtype),
        grid=(N, n_v),
        in_specs=[
            pl.BlockSpec((n_chunk, C, V_TILE), lambda n, v: (n, 0, 0)),  # resident across v
            pl.BlockSpec((27, c_hidden, C), lambda n, v: (0, 0, 0)),
            pl.BlockSpec((c_hidden, 1), lambda n, v: (0, 0)),
            pl.BlockSpec((2 * C, c_hidden), lambda n, v: (0, 0)),
            pl.BlockSpec((2 * C, c_hidden), lambda n, v: (0, 0)),
            pl.BlockSpec((2 * C, 1), lambda n, v: (0, 0)),
        ],
        out_specs=pl.BlockSpec((1, C, V_TILE), lambda n, v: (n, 0, v)),
        compiler_params=pltpu.CompilerParams(**cp),
    )(xp_chunks, w1_taps, b1_col, w2a, w2b, b2_col)

    # Un-pad: output for voxel (d,h,w) sits at the "corner" position of the
    # padded grid, i.e. reshape to the padded volume and take the leading block.
    return out_flat[:, :, :P].reshape(N, C, Dp, Hp, Wp)[:, :, :D, :H, :W]


def gated_conv_reference(x, w1, b1, w2, b2):
    """Pure-JAX reference using lax.conv (NCDHW / OIDHW), mirrors the PyTorch module."""
    dn1 = lax.conv_dimension_numbers(x.shape, w1.shape, ('NCDHW', 'OIDHW', 'NCDHW'))
    h = lax.conv_general_dilated(x, w1, (1, 1, 1), [(1, 1)] * 3, dimension_numbers=dn1)
    h = h + b1.reshape(1, -1, 1, 1, 1)
    h2 = jnp.concatenate([jax.nn.elu(h), jax.nn.elu(-h)], axis=1)
    dn2 = lax.conv_dimension_numbers(h2.shape, w2.shape, ('NCDHW', 'OIDHW', 'NCDHW'))
    o = lax.conv_general_dilated(h2, w2, (1, 1, 1), [(0, 0)] * 3, dimension_numbers=dn2)
    o = o + b2.reshape(1, -1, 1, 1, 1)
    val, gate = jnp.split(o, 2, axis=1)
    return x + val * jax.nn.sigmoid(gate)


if __name__ == "__main__":
    # Small shapes consistent with the module: batch=2, c_in=4, c_hidden=8, 8^3 voxels.
    N, c_in, c_hidden, D, H, W = 2, 4, 8, 8, 8, 8

    key = jax.random.PRNGKey(0)
    kx, k1, kb1, k2, kb2 = jax.random.split(key, 5)
    x = jax.random.normal(kx, (N, c_in, D, H, W), dtype=jnp.float32)

    # Conv3d weight layouts: (C_out, C_in, kD, kH, kW).
    w1 = 0.1 * jax.random.normal(k1, (c_hidden, c_in, 3, 3, 3), dtype=jnp.float32)
    b1 = 0.1 * jax.random.normal(kb1, (c_hidden,), dtype=jnp.float32)
    w2 = 0.1 * jax.random.normal(k2, (2 * c_in, 2 * c_hidden, 1, 1, 1), dtype=jnp.float32)
    b2 = 0.1 * jax.random.normal(kb2, (2 * c_in,), dtype=jnp.float32)

    out = jax.block_until_ready(jax.jit(gated_conv)(x, w1, b1, w2, b2))
    ref = jax.block_until_ready(gated_conv_reference(x, w1, b1, w2, b2))

    # bf16 matmul operands (f32 accumulation) -> relax the pure-f32 tolerance.
    np.testing.assert_allclose(np.asarray(out), np.asarray(ref), rtol=2e-2, atol=2e-2)

    print("KERNEL_OK")
</pallas_src>

<mosaic_0001>
module attributes {stable_mosaic.version = 11 : i64} {
  func.func @kernel(%arg0: i32, %arg1: i32, %arg2: memref<3x4x512xbf16, #tpu.memory_space<vmem>>, %arg3: memref<27x8x4xbf16, #tpu.memory_space<vmem>>, %arg4: memref<8x1xf32, #tpu.memory_space<vmem>>, %arg5: memref<8x8xbf16, #tpu.memory_space<vmem>>, %arg6: memref<8x8xbf16, #tpu.memory_space<vmem>>, %arg7: memref<8x1xf32, #tpu.memory_space<vmem>>, %arg8: memref<1x4x512xf32, #tpu.memory_space<vmem>>) attributes {dimension_semantics = [#tpu.dimension_semantics<parallel>, #tpu.dimension_semantics<parallel>], iteration_bounds = array<i64: 2, 2>, scalar_prefetch = 0 : i64, scratch_operands = 0 : i64, tpu.core_type = #tpu.core_type<tc>, window_params = [{transform_indices = @transform_0, window_bounds = array<i64: 3, 4, 512>}, {pipeline_mode = #tpu.pipeline_mode<synchronous>, transform_indices = @transform_1, window_bounds = array<i64: 27, 8, 4>}, {pipeline_mode = #tpu.pipeline_mode<synchronous>, transform_indices = @transform_2, window_bounds = array<i64: 8, 1>}, {pipeline_mode = #tpu.pipeline_mode<synchronous>, transform_indices = @transform_3, window_bounds = array<i64: 8, 8>}, {pipeline_mode = #tpu.pipeline_mode<synchronous>, transform_indices = @transform_4, window_bounds = array<i64: 8, 8>}, {pipeline_mode = #tpu.pipeline_mode<synchronous>, transform_indices = @transform_5, window_bounds = array<i64: 8, 1>}, {transform_indices = @transform_6, window_bounds = array<i64: 1, 4, 512>}]} {
    %0 = arith.index_cast %arg1 : i32 to index
    %c0 = arith.constant 0 : index
    %c0_0 = arith.constant 0 : index
    %1 = vector.load %arg2[%0, %c0, %c0_0] : memref<3x4x512xbf16, #tpu.memory_space<vmem>>, vector<1x4x512xbf16>
    %2 = vector.shape_cast %1 : vector<1x4x512xbf16> to vector<4x512xbf16>
    %c1_i32 = arith.constant 1 : i32
    %3 = arith.addi %arg1, %c1_i32 : i32
    %4 = arith.index_cast %3 : i32 to index
    %c0_1 = arith.constant 0 : index
    %c0_2 = arith.constant 0 : index
    %5 = vector.load %arg2[%4, %c0_1, %c0_2] : memref<3x4x512xbf16, #tpu.memory_space<vmem>>, vector<1x4x512xbf16>
    %6 = vector.shape_cast %5 : vector<1x4x512xbf16> to vector<4x512xbf16>
    %7 = tpu.concatenate %2, %6 in 1 : vector<4x512xbf16>, vector<4x512xbf16> -> vector<4x1024xbf16>
    %cst = arith.constant 0.000000e+00 : f32
    %8 = vector.broadcast %cst : f32 to vector<8x512xf32>
    %c0_3 = arith.constant 0 : index
    %c0_4 = arith.constant 0 : index
    %c0_5 = arith.constant 0 : index
    %9 = vector.load %arg3[%c0_3, %c0_4, %c0_5] : memref<27x8x4xbf16, #tpu.memory_space<vmem>>, vector<1x8x4xbf16>
    %10 = vector.shape_cast %9 : vector<1x8x4xbf16> to vector<8x4xbf16>
    %11 = vector.extract_strided_slice %7 {offsets = [0, 0], sizes = [4, 512], strides = [1, 1]} : vector<4x1024xbf16> to vector<4x512xbf16>
    %cst_6 = arith.constant dense<0.000000e+00> : vector<8x512xf32>
    %12 = tpu.matmul %10, %11, %cst_6 {dimension_numbers = #tpu.dot_dimension_numbers<[1], [0], [0], [1], [0, 0, 1, 1], [], []>} : vector<8x4xbf16>, vector<4x512xbf16>, vector<8x512xf32> -> vector<8x512xf32>
    %13 = arith.addf %8, %12 : vector<8x512xf32>
    %c1 = arith.constant 1 : index
    %c0_7 = arith.constant 0 : index
    %c0_8 = arith.constant 0 : index
    %14 = vector.load %arg3[%c1, %c0_7, %c0_8] : memref<27x8x4xbf16, #tpu.memory_space<vmem>>, vector<1x8x4xbf16>
    %15 = vector.shape_cast %14 : vector<1x8x4xbf16> to vector<8x4xbf16>
    %16 = vector.extract_strided_slice %7 {offsets = [0, 1], sizes = [4, 512], strides = [1, 1]} : vector<4x1024xbf16> to vector<4x512xbf16>
    %cst_9 = arith.constant dense<0.000000e+00> : vector<8x512xf32>
    %17 = tpu.matmul %15, %16, %cst_9 {dimension_numbers = #tpu.dot_dimension_numbers<[1], [0], [0], [1], [0, 0, 1, 1], [], []>} : vector<8x4xbf16>, vector<4x512xbf16>, vector<8x512xf32> -> vector<8x512xf32>
    %18 = arith.addf %13, %17 : vector<8x512xf32>
    %c2 = arith.constant 2 : index
    %c0_10 = arith.constant 0 : index
    %c0_11 = arith.constant 0 : index
    %19 = vector.load %arg3[%c2, %c0_10, %c0_11] : memref<27x8x4xbf16, #tpu.memory_space<vmem>>, vector<1x8x4xbf16>
    %20 = vector.shape_cast %19 : vector<1x8x4xbf16> to vector<8x4xbf16>
    %21 = vector.extract_strided_slice %7 {offsets = [0, 2], sizes = [4, 512], strides = [1, 1]} : vector<4x1024xbf16> to vector<4x512xbf16>
    %cst_12 = arith.constant dense<0.000000e+00> : vector<8x512xf32>
    %22 = tpu.matmul %20, %21, %cst_12 {dimension_numbers = #tpu.dot_dimension_numbers<[1], [0], [0], [1], [0, 0, 1, 1], [], []>} : vector<8x4xbf16>, vector<4x512xbf16>, vector<8x512xf32> -> vector<8x512xf32>
    %23 = arith.addf %18, %22 : vector<8x512xf32>
    %c3 = arith.constant 3 : index
    %c0_13 = arith.constant 0 : index
    %c0_14 = arith.constant 0 : index
    %24 = vector.load %arg3[%c3, %c0_13, %c0_14] : memref<27x8x4xbf16, #tpu.memory_space<vmem>>, vector<1x8x4xbf16>
    %25 = vector.shape_cast %24 : vector<1x8x4xbf16> to vector<8x4xbf16>
    %26 = vector.extract_strided_slice %7 {offsets = [0, 10], sizes = [4, 512], strides = [1, 1]} : vector<4x1024xbf16> to vector<4x512xbf16>
    %cst_15 = arith.constant dense<0.000000e+00> : vector<8x512xf32>
    %27 = tpu.matmul %25, %26, %cst_15 {dimension_numbers = #tpu.dot_dimension_numbers<[1], [0], [0], [1], [0, 0, 1, 1], [], []>} : vector<8x4xbf16>, vector<4x512xbf16>, vector<8x512xf32> -> vector<8x512xf32>
    %28 = arith.addf %23, %27 : vector<8x512xf32>
    %c4 = arith.constant 4 : index
    %c0_16 = arith.constant 0 : index
    %c0_17 = arith.constant 0 : index
    %29 = vector.load %arg3[%c4, %c0_16, %c0_17] : memref<27x8x4xbf16, #tpu.memory_space<vmem>>, vector<1x8x4xbf16>
    %30 = vector.shape_cast %29 : vector<1x8x4xbf16> to vector<8x4xbf16>
    %31 = vector.extract_strided_slice %7 {offsets = [0, 11], sizes = [4, 512], strides = [1, 1]} : vector<4x1024xbf16> to vector<4x512xbf16>
    %cst_18 = arith.constant dense<0.000000e+00> : vector<8x512xf32>
    %32 = tpu.matmul %30, %31, %cst_18 {dimension_numbers = #tpu.dot_dimension_numbers<[1], [0], [0], [1], [0, 0, 1, 1], [], []>} : vector<8x4xbf16>, vector<4x512xbf16>, vector<8x512xf32> -> vector<8x512xf32>
    %33 = arith.addf %28, %32 : vector<8x512xf32>
    %c5 = arith.constant 5 : index
    %c0_19 = arith.constant 0 : index
    %c0_20 = arith.constant 0 : index
    %34 = vector.load %arg3[%c5, %c0_19, %c0_20] : memref<27x8x4xbf16, #tpu.memory_space<vmem>>, vector<1x8x4xbf16>
    %35 = vector.shape_cast %34 : vector<1x8x4xbf16> to vector<8x4xbf16>
    %36 = vector.extract_strided_slice %7 {offsets = [0, 12], sizes = [4, 512], strides = [1, 1]} : vector<4x1024xbf16> to vector<4x512xbf16>
    %cst_21 = arith.constant dense<0.000000e+00> : vector<8x512xf32>
    %37 = tpu.matmul %35, %36, %cst_21 {dimension_numbers = #tpu.dot_dimension_numbers<[1], [0], [0], [1], [0, 0, 1, 1], [], []>} : vector<8x4xbf16>, vector<4x512xbf16>, vector<8x512xf32> -> vector<8x512xf32>
    %38 = arith.addf %33, %37 : vector<8x512xf32>
    %c6 = arith.constant 6 : index
    %c0_22 = arith.constant 0 : index
    %c0_23 = arith.constant 0 : index
    %39 = vector.load %arg3[%c6, %c0_22, %c0_23] : memref<27x8x4xbf16, #tpu.memory_space<vmem>>, vector<1x8x4xbf16>
    %40 = vector.shape_cast %39 : vector<1x8x4xbf16> to vector<8x4xbf16>
    %41 = vector.extract_strided_slice %7 {offsets = [0, 20], sizes = [4, 512], strides = [1, 1]} : vector<4x1024xbf16> to vector<4x512xbf16>
    %cst_24 = arith.constant dense<0.000000e+00> : vector<8x512xf32>
    %42 = tpu.matmul %40, %41, %cst_24 {dimension_numbers = #tpu.dot_dimension_numbers<[1], [0], [0], [1], [0, 0, 1, 1], [], []>} : vector<8x4xbf16>, vector<4x512xbf16>, vector<8x512xf32> -> vector<8x512xf32>
    %43 = arith.addf %38, %42 : vector<8x512xf32>
    %c7 = arith.constant 7 : index
    %c0_25 = arith.constant 0 : index
    %c0_26 = arith.constant 0 : index
    %44 = vector.load %arg3[%c7, %c0_25, %c0_26] : memref<27x8x4xbf16, #tpu.memory_space<vmem>>, vector<1x8x4xbf16>
    %45 = vector.shape_cast %44 : vector<1x8x4xbf16> to vector<8x4xbf16>
    %46 = vector.extract_strided_slice %7 {offsets = [0, 21], sizes = [4, 512], strides = [1, 1]} : vector<4x1024xbf16> to vector<4x512xbf16>
    %cst_27 = arith.constant dense<0.000000e+00> : vector<8x512xf32>
    %47 = tpu.matmul %45, %46, %cst_27 {dimension_numbers = #tpu.dot_dimension_numbers<[1], [0], [0], [1], [0, 0, 1, 1], [], []>} : vector<8x4xbf16>, vector<4x512xbf16>, vector<8x512xf32> -> vector<8x512xf32>
    %48 = arith.addf %43, %47 : vector<8x512xf32>
    %c8 = arith.constant 8 : index
    %c0_28 = arith.constant 0 : index
    %c0_29 = arith.constant 0 : index
    %49 = vector.load %arg3[%c8, %c0_28, %c0_29] : memref<27x8x4xbf16, #tpu.memory_space<vmem>>, vector<1x8x4xbf16>
    %50 = vector.shape_cast %49 : vector<1x8x4xbf16> to vector<8x4xbf16>
    %51 = vector.extract_strided_slice %7 {offsets = [0, 22], sizes = [4, 512], strides = [1, 1]} : vector<4x1024xbf16> to vector<4x512xbf16>
    %cst_30 = arith.constant dense<0.000000e+00> : vector<8x512xf32>
    %52 = tpu.matmul %50, %51, %cst_30 {dimension_numbers = #tpu.dot_dimension_numbers<[1], [0], [0], [1], [0, 0, 1, 1], [], []>} : vector<8x4xbf16>, vector<4x512xbf16>, vector<8x512xf32> -> vector<8x512xf32>
    %53 = arith.addf %48, %52 : vector<8x512xf32>
    %c9 = arith.constant 9 : index
    %c0_31 = arith.constant 0 : index
    %c0_32 = arith.constant 0 : index
    %54 = vector.load %arg3[%c9, %c0_31, %c0_32] : memref<27x8x4xbf16, #tpu.memory_space<vmem>>, vector<1x8x4xbf16>
    %55 = vector.shape_cast %54 : vector<1x8x4xbf16> to vector<8x4xbf16>
    %56 = vector.extract_strided_slice %7 {offsets = [0, 100], sizes = [4, 512], strides = [1, 1]} : vector<4x1024xbf16> to vector<4x512xbf16>
    %cst_33 = arith.constant dense<0.000000e+00> : vector<8x512xf32>
    %57 = tpu.matmul %55, %56, %cst_33 {dimension_numbers = #tpu.dot_dimension_numbers<[1], [0], [0], [1], [0, 0, 1, 1], [], []>} : vector<8x4xbf16>, vector<4x512xbf16>, vector<8x512xf32> -> vector<8x512xf32>
    %58 = arith.addf %53, %57 : vector<8x512xf32>
    %c10 = arith.constant 10 : index
    %c0_34 = arith.constant 0 : index
    %c0_35 = arith.constant 0 : index
    %59 = vector.load %arg3[%c10, %c0_34, %c0_35] : memref<27x8x4xbf16, #tpu.memory_space<vmem>>, vector<1x8x4xbf16>
    %60 = vector.shape_cast %59 : vector<1x8x4xbf16> to vector<8x4xbf16>
    %61 = vector.extract_strided_slice %7 {offsets = [0, 101], sizes = [4, 512], strides = [1, 1]} : vector<4x1024xbf16> to vector<4x512xbf16>
    %cst_36 = arith.constant dense<0.000000e+00> : vector<8x512xf32>
    %62 = tpu.matmul %60, %61, %cst_36 {dimension_numbers = #tpu.dot_dimension_numbers<[1], [0], [0], [1], [0, 0, 1, 1], [], []>} : vector<8x4xbf16>, vector<4x512xbf16>, vector<8x512xf32> -> vector<8x512xf32>
    %63 = arith.addf %58, %62 : vector<8x512xf32>
    %c11 = arith.constant 11 : index
    %c0_37 = arith.constant 0 : index
    %c0_38 = arith.constant 0 : index
    %64 = vector.load %arg3[%c11, %c0_37, %c0_38] : memref<27x8x4xbf16, #tpu.memory_space<vmem>>, vector<1x8x4xbf16>
    %65 = vector.shape_cast %64 : vector<1x8x4xbf16> to vector<8x4xbf16>
    %66 = vector.extract_strided_slice %7 {offsets = [0, 102], sizes = [4, 512], strides = [1, 1]} : vector<4x1024xbf16> to vector<4x512xbf16>
    %cst_39 = arith.constant dense<0.000000e+00> : vector<8x512xf32>
    %67 = tpu.matmul %65, %66, %cst_39 {dimension_numbers = #tpu.dot_dimension_numbers<[1], [0], [0], [1], [0, 0, 1, 1], [], []>} : vector<8x4xbf16>, vector<4x512xbf16>, vector<8x512xf32> -> vector<8x512xf32>
    %68 = arith.addf %63, %67 : vector<8x512xf32>
    %c12 = arith.constant 12 : index
    %c0_40 = arith.constant 0 : index
    %c0_41 = arith.constant 0 : index
    %69 = vector.load %arg3[%c12, %c0_40, %c0_41] : memref<27x8x4xbf16, #tpu.memory_space<vmem>>, vector<1x8x4xbf16>
    %70 = vector.shape_cast %69 : vector<1x8x4xbf16> to vector<8x4xbf16>
    %71 = vector.extract_strided_slice %7 {offsets = [0, 110], sizes = [4, 512], strides = [1, 1]} : vector<4x1024xbf16> to vector<4x512xbf16>
    %cst_42 = arith.constant dense<0.000000e+00> : vector<8x512xf32>
    %72 = tpu.matmul %70, %71, %cst_42 {dimension_numbers = #tpu.dot_dimension_numbers<[1], [0], [0], [1], [0, 0, 1, 1], [], []>} : vector<8x4xbf16>, vector<4x512xbf16>, vector<8x512xf32> -> vector<8x512xf32>
    %73 = arith.addf %68, %72 : vector<8x512xf32>
    %c13 = arith.constant 13 : index
    %c0_43 = arith.constant 0 : index
    %c0_44 = arith.constant 0 : index
    %74 = vector.load %arg3[%c13, %c0_43, %c0_44] : memref<27x8x4xbf16, #tpu.memory_space<vmem>>, vector<1x8x4xbf16>
    %75 = vector.shape_cast %74 : vector<1x8x4xbf16> to vector<8x4xbf16>
    %76 = vector.extract_strided_slice %7 {offsets = [0, 111], sizes = [4, 512], strides = [1, 1]} : vector<4x1024xbf16> to vector<4x512xbf16>
    %cst_45 = arith.constant dense<0.000000e+00> : vector<8x512xf32>
    %77 = tpu.matmul %75, %76, %cst_45 {dimension_numbers = #tpu.dot_dimension_numbers<[1], [0], [0], [1], [0, 0, 1, 1], [], []>} : vector<8x4xbf16>, vector<4x512xbf16>, vector<8x512xf32> -> vector<8x512xf32>
    %78 = arith.addf %73, %77 : vector<8x512xf32>
    %c14 = arith.constant 14 : index
    %c0_46 = arith.constant 0 : index
    %c0_47 = arith.constant 0 : index
    %79 = vector.load %arg3[%c14, %c0_46, %c0_47] : memref<27x8x4xbf16, #tpu.memory_space<vmem>>, vector<1x8x4xbf16>
    %80 = vector.shape_cast %79 : vector<1x8x4xbf16> to vector<8x4xbf16>
    %81 = vector.extract_strided_slice %7 {offsets = [0, 112], sizes = [4, 512], strides = [1, 1]} : vector<4x1024xbf16> to vector<4x512xbf16>
    %cst_48 = arith.constant dense<0.000000e+00> : vector<8x512xf32>
    %82 = tpu.matmul %80, %81, %cst_48 {dimension_numbers = #tpu.dot_dimension_numbers<[1], [0], [0], [1], [0, 0, 1, 1], [], []>} : vector<8x4xbf16>, vector<4x512xbf16>, vector<8x512xf32> -> vector<8x512xf32>
    %83 = arith.addf %78, %82 : vector<8x512xf32>
    %c15 = arith.constant 15 : index
    %c0_49 = arith.constant 0 : index
    %c0_50 = arith.constant 0 : index
    %84 = vector.load %arg3[%c15, %c0_49, %c0_50] : memref<27x8x4xbf16, #tpu.memory_space<vmem>>, vector<1x8x4xbf16>
    %85 = vector.shape_cast %84 : vector<1x8x4xbf16> to vector<8x4xbf16>
    %86 = vector.extract_strided_slice %7 {offsets = [0, 120], sizes = [4, 512], strides = [1, 1]} : vector<4x1024xbf16> to vector<4x512xbf16>
    %cst_51 = arith.constant dense<0.000000e+00> : vector<8x512xf32>
    %87 = tpu.matmul %85, %86, %cst_51 {dimension_numbers = #tpu.dot_dimension_numbers<[1], [0], [0], [1], [0, 0, 1, 1], [], []>} : vector<8x4xbf16>, vector<4x512xbf16>, vector<8x512xf32> -> vector<8x512xf32>
    %88 = arith.addf %83, %87 : vector<8x512xf32>
    %c16 = arith.constant 16 : index
    %c0_52 = arith.constant 0 : index
    %c0_53 = arith.constant 0 : index
    %89 = vector.load %arg3[%c16, %c0_52, %c0_53] : memref<27x8x4xbf16, #tpu.memory_space<vmem>>, vector<1x8x4xbf16>
    %90 = vector.shape_cast %89 : vector<1x8x4xbf16> to vector<8x4xbf16>
    %91 = vector.extract_strided_slice %7 {offsets = [0, 121], sizes = [4, 512], strides = [1, 1]} : vector<4x1024xbf16> to vector<4x512xbf16>
    %cst_54 = arith.constant dense<0.000000e+00> : vector<8x512xf32>
    %92 = tpu.matmul %90, %91, %cst_54 {dimension_numbers = #tpu.dot_dimension_numbers<[1], [0], [0], [1], [0, 0, 1, 1], [], []>} : vector<8x4xbf16>, vector<4x512xbf16>, vector<8x512xf32> -> vector<8x512xf32>
    %93 = arith.addf %88, %92 : vector<8x512xf32>
    %c17 = arith.constant 17 : index
    %c0_55 = arith.constant 0 : index
    %c0_56 = arith.constant 0 : index
    %94 = vector.load %arg3[%c17, %c0_55, %c0_56] : memref<27x8x4xbf16, #tpu.memory_space<vmem>>, vector<1x8x4xbf16>
    %95 = vector.shape_cast %94 : vector<1x8x4xbf16> to vector<8x4xbf16>
    %96 = vector.extract_strided_slice %7 {offsets = [0, 122], sizes = [4, 512], strides = [1, 1]} : vector<4x1024xbf16> to vector<4x512xbf16>
    %cst_57 = arith.constant dense<0.000000e+00> : vector<8x512xf32>
    %97 = tpu.matmul %95, %96, %cst_57 {dimension_numbers = #tpu.dot_dimension_numbers<[1], [0], [0], [1], [0, 0, 1, 1], [], []>} : vector<8x4xbf16>, vector<4x512xbf16>, vector<8x512xf32> -> vector<8x512xf32>
    %98 = arith.addf %93, %97 : vector<8x512xf32>
    %c18 = arith.constant 18 : index
    %c0_58 = arith.constant 0 : index
    %c0_59 = arith.constant 0 : index
    %99 = vector.load %arg3[%c18, %c0_58, %c0_59] : memref<27x8x4xbf16, #tpu.memory_space<vmem>>, vector<1x8x4xbf16>
    %100 = vector.shape_cast %99 : vector<1x8x4xbf16> to vector<8x4xbf16>
    %101 = vector.extract_strided_slice %7 {offsets = [0, 200], sizes = [4, 512], strides = [1, 1]} : vector<4x1024xbf16> to vector<4x512xbf16>
    %cst_60 = arith.constant dense<0.000000e+00> : vector<8x512xf32>
    %102 = tpu.matmul %100, %101, %cst_60 {dimension_numbers = #tpu.dot_dimension_numbers<[1], [0], [0], [1], [0, 0, 1, 1], [], []>} : vector<8x4xbf16>, vector<4x512xbf16>, vector<8x512xf32> -> vector<8x512xf32>
    %103 = arith.addf %98, %102 : vector<8x512xf32>
    %c19 = arith.constant 19 : index
    %c0_61 = arith.constant 0 : index
    %c0_62 = arith.constant 0 : index
    %104 = vector.load %arg3[%c19, %c0_61, %c0_62] : memref<27x8x4xbf16, #tpu.memory_space<vmem>>, vector<1x8x4xbf16>
    %105 = vector.shape_cast %104 : vector<1x8x4xbf16> to vector<8x4xbf16>
    %106 = vector.extract_strided_slice %7 {offsets = [0, 201], sizes = [4, 512], strides = [1, 1]} : vector<4x1024xbf16> to vector<4x512xbf16>
    %cst_63 = arith.constant dense<0.000000e+00> : vector<8x512xf32>
    %107 = tpu.matmul %105, %106, %cst_63 {dimension_numbers = #tpu.dot_dimension_numbers<[1], [0], [0], [1], [0, 0, 1, 1], [], []>} : vector<8x4xbf16>, vector<4x512xbf16>, vector<8x512xf32> -> vector<8x512xf32>
    %108 = arith.addf %103, %107 : vector<8x512xf32>
    %c20 = arith.constant 20 : index
    %c0_64 = arith.constant 0 : index
    %c0_65 = arith.constant 0 : index
    %109 = vector.load %arg3[%c20, %c0_64, %c0_65] : memref<27x8x4xbf16, #tpu.memory_space<vmem>>, vector<1x8x4xbf16>
    %110 = vector.shape_cast %109 : vector<1x8x4xbf16> to vector<8x4xbf16>
    %111 = vector.extract_strided_slice %7 {offsets = [0, 202], sizes = [4, 512], strides = [1, 1]} : vector<4x1024xbf16> to vector<4x512xbf16>
    %cst_66 = arith.constant dense<0.000000e+00> : vector<8x512xf32>
    %112 = tpu.matmul %110, %111, %cst_66 {dimension_numbers = #tpu.dot_dimension_numbers<[1], [0], [0], [1], [0, 0, 1, 1], [], []>} : vector<8x4xbf16>, vector<4x512xbf16>, vector<8x512xf32> -> vector<8x512xf32>
    %113 = arith.addf %108, %112 : vector<8x512xf32>
    %c21 = arith.constant 21 : index
    %c0_67 = arith.constant 0 : index
    %c0_68 = arith.constant 0 : index
    %114 = vector.load %arg3[%c21, %c0_67, %c0_68] : memref<27x8x4xbf16, #tpu.memory_space<vmem>>, vector<1x8x4xbf16>
    %115 = vector.shape_cast %114 : vector<1x8x4xbf16> to vector<8x4xbf16>
    %116 = vector.extract_strided_slice %7 {offsets = [0, 210], sizes = [4, 512], strides = [1, 1]} : vector<4x1024xbf16> to vector<4x512xbf16>
    %cst_69 = arith.constant dense<0.000000e+00> : vector<8x512xf32>
    %117 = tpu.matmul %115, %116, %cst_69 {dimension_numbers = #tpu.dot_dimension_numbers<[1], [0], [0], [1], [0, 0, 1, 1], [], []>} : vector<8x4xbf16>, vector<4x512xbf16>, vector<8x512xf32> -> vector<8x512xf32>
    %118 = arith.addf %113, %117 : vector<8x512xf32>
    %c22 = arith.constant 22 : index
    %c0_70 = arith.constant 0 : index
    %c0_71 = arith.constant 0 : index
    %119 = vector.load %arg3[%c22, %c0_70, %c0_71] : memref<27x8x4xbf16, #tpu.memory_space<vmem>>, vector<1x8x4xbf16>
    %120 = vector.shape_cast %119 : vector<1x8x4xbf16> to vector<8x4xbf16>
    %121 = vector.extract_strided_slice %7 {offsets = [0, 211], sizes = [4, 512], strides = [1, 1]} : vector<4x1024xbf16> to vector<4x512xbf16>
    %cst_72 = arith.constant dense<0.000000e+00> : vector<8x512xf32>
    %122 = tpu.matmul %120, %121, %cst_72 {dimension_numbers = #tpu.dot_dimension_numbers<[1], [0], [0], [1], [0, 0, 1, 1], [], []>} : vector<8x4xbf16>, vector<4x512xbf16>, vector<8x512xf32> -> vector<8x512xf32>
    %123 = arith.addf %118, %122 : vector<8x512xf32>
    %c23 = arith.constant 23 : index
    %c0_73 = arith.constant 0 : index
    %c0_74 = arith.constant 0 : index
    %124 = vector.load %arg3[%c23, %c0_73, %c0_74] : memref<27x8x4xbf16, #tpu.memory_space<vmem>>, vector<1x8x4xbf16>
    %125 = vector.shape_cast %124 : vector<1x8x4xbf16> to vector<8x4xbf16>
    %126 = vector.extract_strided_slice %7 {offsets = [0, 212], sizes = [4, 512], strides = [1, 1]} : vector<4x1024xbf16> to vector<4x512xbf16>
    %cst_75 = arith.constant dense<0.000000e+00> : vector<8x512xf32>
    %127 = tpu.matmul %125, %126, %cst_75 {dimension_numbers = #tpu.dot_dimension_numbers<[1], [0], [0], [1], [0, 0, 1, 1], [], []>} : vector<8x4xbf16>, vector<4x512xbf16>, vector<8x512xf32> -> vector<8x512xf32>
    %128 = arith.addf %123, %127 : vector<8x512xf32>
    %c24 = arith.constant 24 : index
    %c0_76 = arith.constant 0 : index
    %c0_77 = arith.constant 0 : index
    %129 = vector.load %arg3[%c24, %c0_76, %c0_77] : memref<27x8x4xbf16, #tpu.memory_space<vmem>>, vector<1x8x4xbf16>
    %130 = vector.shape_cast %129 : vector<1x8x4xbf16> to vector<8x4xbf16>
    %131 = vector.extract_strided_slice %7 {offsets = [0, 220], sizes = [4, 512], strides = [1, 1]} : vector<4x1024xbf16> to vector<4x512xbf16>
    %cst_78 = arith.constant dense<0.000000e+00> : vector<8x512xf32>
    %132 = tpu.matmul %130, %131, %cst_78 {dimension_numbers = #tpu.dot_dimension_numbers<[1], [0], [0], [1], [0, 0, 1, 1], [], []>} : vector<8x4xbf16>, vector<4x512xbf16>, vector<8x512xf32> -> vector<8x512xf32>
    %133 = arith.addf %128, %132 : vector<8x512xf32>
    %c25 = arith.constant 25 : index
    %c0_79 = arith.constant 0 : index
    %c0_80 = arith.constant 0 : index
    %134 = vector.load %arg3[%c25, %c0_79, %c0_80] : memref<27x8x4xbf16, #tpu.memory_space<vmem>>, vector<1x8x4xbf16>
    %135 = vector.shape_cast %134 : vector<1x8x4xbf16> to vector<8x4xbf16>
    %136 = vector.extract_strided_slice %7 {offsets = [0, 221], sizes = [4, 512], strides = [1, 1]} : vector<4x1024xbf16> to vector<4x512xbf16>
    %cst_81 = arith.constant dense<0.000000e+00> : vector<8x512xf32>
    %137 = tpu.matmul %135, %136, %cst_81 {dimension_numbers = #tpu.dot_dimension_numbers<[1], [0], [0], [1], [0, 0, 1, 1], [], []>} : vector<8x4xbf16>, vector<4x512xbf16>, vector<8x512xf32> -> vector<8x512xf32>
    %138 = arith.addf %133, %137 : vector<8x512xf32>
    %c26 = arith.constant 26 : index
    %c0_82 = arith.constant 0 : index
    %c0_83 = arith.constant 0 : index
    %139 = vector.load %arg3[%c26, %c0_82, %c0_83] : memref<27x8x4xbf16, #tpu.memory_space<vmem>>, vector<1x8x4xbf16>
    %140 = vector.shape_cast %139 : vector<1x8x4xbf16> to vector<8x4xbf16>
    %141 = vector.extract_strided_slice %7 {offsets = [0, 222], sizes = [4, 512], strides = [1, 1]} : vector<4x1024xbf16> to vector<4x512xbf16>
    %cst_84 = arith.constant dense<0.000000e+00> : vector<8x512xf32>
    %142 = tpu.matmul %140, %141, %cst_84 {dimension_numbers = #tpu.dot_dimension_numbers<[1], [0], [0], [1], [0, 0, 1, 1], [], []>} : vector<8x4xbf16>, vector<4x512xbf16>, vector<8x512xf32> -> vector<8x512xf32>
    %143 = arith.addf %138, %142 : vector<8x512xf32>
    %c0_85 = arith.constant 0 : index
    %c0_86 = arith.constant 0 : index
    %144 = vector.load %arg4[%c0_85, %c0_86] : memref<8x1xf32, #tpu.memory_space<vmem>>, vector<8x1xf32>
    %145 = vector.broadcast %144 : vector<8x1xf32> to vector<8x512xf32>
    %146 = arith.addf %143, %145 : vector<8x512xf32>
    %147 = math.absf %146 : vector<8x512xf32>
    %cst_87 = arith.constant 0.000000e+00 : f32
    %148 = vector.broadcast %cst_87 : f32 to vector<8x512xf32>
    %149 = arith.subf %148, %147 : vector<8x512xf32>
    %150 = math.exp %149 : vector<8x512xf32>
    %cst_88 = arith.constant 1.000000e+00 : f32
    %151 = vector.broadcast %cst_88 : f32 to vector<8x512xf32>
    %152 = arith.subf %150, %151 : vector<8x512xf32>
    %cst_89 = arith.constant 0.000000e+00 : f32
    %153 = vector.broadcast %cst_89 : f32 to vector<8x512xf32>
    %154 = arith.cmpf ogt, %146, %153 : vector<8x512xf32>
    %155 = arith.select %154, %146, %152 : vector<8x512xi1>, vector<8x512xf32>
    %156 = arith.truncf %155 : vector<8x512xf32> to vector<8x512xbf16>
    %cst_90 = arith.constant 0.000000e+00 : f32
    %157 = vector.broadcast %cst_90 : f32 to vector<8x512xf32>
    %158 = arith.subf %157, %146 : vector<8x512xf32>
    %159 = arith.select %154, %152, %158 : vector<8x512xi1>, vector<8x512xf32>
    %160 = arith.truncf %159 : vector<8x512xf32> to vector<8x512xbf16>
    %c0_91 = arith.constant 0 : index
    %c0_92 = arith.constant 0 : index
    %161 = vector.load %arg5[%c0_91, %c0_92] : memref<8x8xbf16, #tpu.memory_space<vmem>>, vector<8x8xbf16>
    %cst_93 = arith.constant dense<0.000000e+00> : vector<8x512xf32>
    %162 = tpu.matmul %161, %156, %cst_93 {dimension_numbers = #tpu.dot_dimension_numbers<[1], [0], [0], [1], [0, 0, 1, 1], [], []>} : vector<8x8xbf16>, vector<8x512xbf16>, vector<8x512xf32> -> vector<8x512xf32>
    %c0_94 = arith.constant 0 : index
    %c0_95 = arith.constant 0 : index
    %163 = vector.load %arg6[%c0_94, %c0_95] : memref<8x8xbf16, #tpu.memory_space<vmem>>, vector<8x8xbf16>
    %cst_96 = arith.constant dense<0.000000e+00> : vector<8x512xf32>
    %164 = tpu.matmul %163, %160, %cst_96 {dimension_numbers = #tpu.dot_dimension_numbers<[1], [0], [0], [1], [0, 0, 1, 1], [], []>} : vector<8x8xbf16>, vector<8x512xbf16>, vector<8x512xf32> -> vector<8x512xf32>
    %165 = arith.addf %162, %164 : vector<8x512xf32>
    %c0_97 = arith.constant 0 : index
    %c0_98 = arith.constant 0 : index
    %166 = vector.load %arg7[%c0_97, %c0_98] : memref<8x1xf32, #tpu.memory_space<vmem>>, vector<8x1xf32>
    %167 = vector.broadcast %166 : vector<8x1xf32> to vector<8x512xf32>
    %168 = arith.addf %165, %167 : vector<8x512xf32>
    %169 = vector.extract_strided_slice %168 {offsets = [0, 0], sizes = [4, 512], strides = [1, 1]} : vector<8x512xf32> to vector<4x512xf32>
    %170 = vector.extract_strided_slice %168 {offsets = [4, 0], sizes = [4, 512], strides = [1, 1]} : vector<8x512xf32> to vector<4x512xf32>
    %cst_99 = arith.constant 0.000000e+00 : f32
    %171 = vector.broadcast %cst_99 : f32 to vector<4x512xf32>
    %172 = arith.subf %171, %170 : vector<4x512xf32>
    %cst_100 = arith.constant 8.000000e+01 : f32
    %173 = vector.broadcast %cst_100 : f32 to vector<4x512xf32>
    %174 = arith.minimumf %172, %173 : vector<4x512xf32>
    %175 = math.exp %174 : vector<4x512xf32>
    %cst_101 = arith.constant 1.000000e+00 : f32
    %176 = vector.broadcast %cst_101 : f32 to vector<4x512xf32>
    %177 = arith.addf %176, %175 : vector<4x512xf32>
    %178 = tpu.reciprocal %177 {approx = true} : vector<4x512xf32> -> vector<4x512xf32>
    %179 = vector.extract_strided_slice %7 {offsets = [0, 111], sizes = [4, 512], strides = [1, 1]} : vector<4x1024xbf16> to vector<4x512xbf16>
    %180 = arith.extf %179 : vector<4x512xbf16> to vector<4x512xf32>
    %181 = arith.mulf %169, %178 : vector<4x512xf32>
    %182 = arith.addf %180, %181 : vector<4x512xf32>
    %c0_102 = arith.constant 0 : index
    %c0_103 = arith.constant 0 : index
    %c0_104 = arith.constant 0 : index
    %183 = vector.load %arg8[%c0_102, %c0_103, %c0_104] : memref<1x4x512xf32, #tpu.memory_space<vmem>>, vector<1x4x512xf32>
    %184 = vector.shape_cast %183 : vector<1x4x512xf32> to vector<4x512xf32>
    %185 = vector.shape_cast %182 : vector<4x512xf32> to vector<1x4x512xf32>
    tpu.vector_store %arg8[%c0_102, %c0_103, %c0_104], %185 {strides = array<i32>} : memref<1x4x512xf32, #tpu.memory_space<vmem>>, vector<1x4x512xf32>,
    return
  }
  func.func @transform_0(%arg0: i32, %arg1: i32) -> (i32, i32, i32) {
    %c0_i32 = arith.constant 0 : i32
    %c0_i32_0 = arith.constant 0 : i32
    %c0_i32_1 = arith.constant 0 : i32
    return %arg0, %c0_i32, %c0_i32_0 : i32, i32, i32
  }
  func.func @transform_1(%arg0: i32, %arg1: i32) -> (i32, i32, i32) {
    %c0_i32 = arith.constant 0 : i32
    %c0_i32_0 = arith.constant 0 : i32
    %c0_i32_1 = arith.constant 0 : i32
    %c0_i32_2 = arith.constant 0 : i32
    return %c0_i32, %c0_i32_0, %c0_i32_1 : i32, i32, i32
  }
  func.func @transform_2(%arg0: i32, %arg1: i32) -> (i32, i32) {
    %c0_i32 = arith.constant 0 : i32
    %c0_i32_0 = arith.constant 0 : i32
    %c0_i32_1 = arith.constant 0 : i32
    return %c0_i32, %c0_i32_0 : i32, i32
  }
  func.func @transform_3(%arg0: i32, %arg1: i32) -> (i32, i32) {
    %c0_i32 = arith.constant 0 : i32
    %c0_i32_0 = arith.constant 0 : i32
    %c0_i32_1 = arith.constant 0 : i32
    return %c0_i32, %c0_i32_0 : i32, i32
  }
  func.func @transform_4(%arg0: i32, %arg1: i32) -> (i32, i32) {
    %c0_i32 = arith.constant 0 : i32
    %c0_i32_0 = arith.constant 0 : i32
    %c0_i32_1 = arith.constant 0 : i32
    return %c0_i32, %c0_i32_0 : i32, i32
  }
  func.func @transform_5(%arg0: i32, %arg1: i32) -> (i32, i32) {
    %c0_i32 = arith.constant 0 : i32
    %c0_i32_0 = arith.constant 0 : i32
    %c0_i32_1 = arith.constant 0 : i32
    return %c0_i32, %c0_i32_0 : i32, i32
  }
  func.func @transform_6(%arg0: i32, %arg1: i32) -> (i32, i32, i32) {
    %c0_i32 = arith.constant 0 : i32
    %c0_i32_0 = arith.constant 0 : i32
    return %arg0, %c0_i32, %arg1 : i32, i32, i32
  }
}

</mosaic_0001>

<llo_original>
// kernel: gated_conv.1
$region0: #{gated_conv.1}
  #allocation0 [shape = 'u32[]', space=smem, size = 0x4, offset = 0x4, fixed_abs, tag = 'smem constant byte address 0x4 - core index']
  #allocation1 [shape = 'u32[144,128]{1,0:T(1,128)}', space=vmem, size = 0x12000, scoped, tag = 'internal scratch']
  %s0 = inlined_call_operand.vmem [shape: bf16[6,4,512], index: 0, kind: input, shape index: {}]
  %s1 = inlined_call_operand.vmem [shape: bf16[27,8,4], index: 1, kind: input, shape index: {}]
  %s2 = inlined_call_operand.vmem [shape: f32[8,1], index: 2, kind: input, shape index: {}]
  %s3 = inlined_call_operand.vmem [shape: bf16[8,8], index: 3, kind: input, shape index: {}]
  %s4 = inlined_call_operand.vmem [shape: bf16[8,8], index: 4, kind: input, shape index: {}]
  %s5 = inlined_call_operand.vmem [shape: f32[8,1], index: 5, kind: input, shape index: {}]
  %s6 = inlined_call_operand.vmem [shape: f32[2,4,1024], index: 6, kind: output, shape index: {}]
  %s7 = sld [smem:[#allocation0]]
  $region57: #{gated_conv.1} parent=0
    _
  %s9 = ssub.s32 1, %s7
  %s10 = scalar_select 0, %s9, %s7
  loop: start=0, step=1, limit=6
  $region2: #{gated_conv.1} parent=0 // loop_pre_header
    _
  $region3: #{gated_conv.1} parent=0 // loop_header
    %s12 = sphi 0, %s16
    %p13 = scmp.ge.s32.totalorder %s12, 6
    %s19 = sphi 0, %s31
    %s20 = sphi 0, %s27
    %s21 = sphi 0, %s19
    %s22 = sphi 0, %s20
    %s23 = sphi 0, %s21
    %s24 = sphi 0, %s22
    %s34 = sphi 0, %s36
    %s37 = sphi 0, %s34
    %s38 = sphi 0, %s37
    %s54 = sphi 0, %s38
    %s58 = sphi 0, %s58
    %s60 = sphi 0, %s58
    %s61 = sphi 0, %s60
    %s75 = sphi 0, %s61
    %s79 = sphi 0, %s79
    %s81 = sphi 0, %s79
    %s82 = sphi 0, %s81
    %s96 = sphi 0, %s82
    %s100 = sphi 0, %s100
    %s102 = sphi 0, %s100
    %s103 = sphi 0, %s102
    %s117 = sphi 0, %s103
    %s121 = sphi 0, %s121
    %s123 = sphi 0, %s121
    %s124 = sphi 0, %s123
    %s138 = sphi 0, %s124
    %s142 = sphi 0, %s142
    %s144 = sphi 0, %s142
    %s145 = sphi 0, %s144
    %s159 = sphi 0, %s145
    %s167 = sphi 0, %s169
    %s170 = sphi 0, %s167
    %s171 = sphi 0, %s170
    %s187 = sphi 0, %s171
  $region4: #{gated_conv.1} parent=0 // loop_header_branch
    %15 = sbr.rel (%p13) target = $region8
  $region5: #{gated_conv.1} parent=0 // loop_body
    %s17 = ssub.s32 %s12, 1
    %s18 = ssub.s32 %s12, 2
    %s25 = sadd.s32 1, %s20
    %p26 = scmp.ge.s32.totalorder %s25, 2
    %s27 = scalar_select %p26, 0, %s25
    %s28 = sadd.s32 1, %s19
    %s29 = scalar_select %p26, %s28, %s19
    %p30 = scmp.ge.s32.totalorder %s29, 2
    %s31 = scalar_select %p30, 0, %s29
    %s32 = ssub.s32 %s19, %s31
    %p33 = scmp.eq.s32.totalorder %s32, 0
    %s35 = sadd.s32 %s34, 1
    %s36 = scalar_select %p33, %s34, %s35
    %p39 = pneg %p33
    %p40 = scmp.eq.s32.totalorder %s12, 3
    %p41 = por %p39, %p40
    %p42 = scmp.ne.s32.totalorder %s34, %s37
    %p43 = scmp.eq.s32.totalorder %s12, 0
    %p44 = por %p42, %p43
    %p45 = scmp.ne.s32.totalorder %s34, %s37
    %p46 = scmp.eq.s32.totalorder %s17, 3
    %p47 = por %p45, %p46
    %p48 = scmp.ne.s32.totalorder %s37, %s38
    %p49 = scmp.eq.s32.totalorder %s17, 0
    %p50 = por %p48, %p49
    %p51 = scmp.ne.s32.totalorder %s37, %s38
    %p52 = scmp.eq.s32.totalorder %s18, 3
    %p53 = por %p51, %p52
    %p55 = scmp.ne.s32.totalorder %s38, %s54
    %p56 = scmp.eq.s32.totalorder %s18, 0
    %p57 = por %p55, %p56
    %s59 = sadd.s32 %s58, 1
    %p62 = scmp.eq.s32.totalorder %s12, 3
    %p63 = scmp.ne.s32.totalorder %s58, %s60
    %p64 = scmp.eq.s32.totalorder %s12, 0
    %p65 = por %p63, %p64
    %p66 = scmp.ne.s32.totalorder %s58, %s60
    %p67 = scmp.eq.s32.totalorder %s17, 3
    %p68 = por %p66, %p67
    %p69 = scmp.ne.s32.totalorder %s60, %s61
    %p70 = scmp.eq.s32.totalorder %s17, 0
    %p71 = por %p69, %p70
    %p72 = scmp.ne.s32.totalorder %s60, %s61
    %p73 = scmp.eq.s32.totalorder %s18, 3
    %p74 = por %p72, %p73
    %p76 = scmp.ne.s32.totalorder %s61, %s75
    %p77 = scmp.eq.s32.totalorder %s18, 0
    %p78 = por %p76, %p77
    %s80 = sadd.s32 %s79, 1
    %p83 = scmp.eq.s32.totalorder %s12, 3
    %p84 = scmp.ne.s32.totalorder %s79, %s81
    %p85 = scmp.eq.s32.totalorder %s12, 0
    %p86 = por %p84, %p85
    %p87 = scmp.ne.s32.totalorder %s79, %s81
    %p88 = scmp.eq.s32.totalorder %s17, 3
    %p89 = por %p87, %p88
    %p90 = scmp.ne.s32.totalorder %s81, %s82
    %p91 = scmp.eq.s32.totalorder %s17, 0
    %p92 = por %p90, %p91
    %p93 = scmp.ne.s32.totalorder %s81, %s82
    %p94 = scmp.eq.s32.totalorder %s18, 3
    %p95 = por %p93, %p94
    %p97 = scmp.ne.s32.totalorder %s82, %s96
    %p98 = scmp.eq.s32.totalorder %s18, 0
    %p99 = por %p97, %p98
    %s101 = sadd.s32 %s100, 1
    %p104 = scmp.eq.s32.totalorder %s12, 3
    %p105 = scmp.ne.s32.totalorder %s100, %s102
    %p106 = scmp.eq.s32.totalorder %s12, 0
    %p107 = por %p105, %p106
    %p108 = scmp.ne.s32.totalorder %s100, %s102
    %p109 = scmp.eq.s32.totalorder %s17, 3
    %p110 = por %p108, %p109
    %p111 = scmp.ne.s32.totalorder %s102, %s103
    %p112 = scmp.eq.s32.totalorder %s17, 0
    %p113 = por %p111, %p112
    %p114 = scmp.ne.s32.totalorder %s102, %s103
    %p115 = scmp.eq.s32.totalorder %s18, 3
    %p116 = por %p114, %p115
    %p118 = scmp.ne.s32.totalorder %s103, %s117
    %p119 = scmp.eq.s32.totalorder %s18, 0
    %p120 = por %p118, %p119
    %s122 = sadd.s32 %s121, 1
    %p125 = scmp.eq.s32.totalorder %s12, 3
    %p126 = scmp.ne.s32.totalorder %s121, %s123
    %p127 = scmp.eq.s32.totalorder %s12, 0
    %p128 = por %p126, %p127
    %p129 = scmp.ne.s32.totalorder %s121, %s123
    %p130 = scmp.eq.s32.totalorder %s17, 3
    %p131 = por %p129, %p130
    %p132 = scmp.ne.s32.totalorder %s123, %s124
    %p133 = scmp.eq.s32.totalorder %s17, 0
    %p134 = por %p132, %p133
    %p135 = scmp.ne.s32.totalorder %s123, %s124
    %p136 = scmp.eq.s32.totalorder %s18, 3
    %p137 = por %p135, %p136
    %p139 = scmp.ne.s32.totalorder %s124, %s138
    %p140 = scmp.eq.s32.totalorder %s18, 0
    %p141 = por %p139, %p140
    %s143 = sadd.s32 %s142, 1
    %p146 = scmp.eq.s32.totalorder %s12, 3
    %p147 = scmp.ne.s32.totalorder %s142, %s144
    %p148 = scmp.eq.s32.totalorder %s12, 0
    %p149 = por %p147, %p148
    %p150 = scmp.ne.s32.totalorder %s142, %s144
    %p151 = scmp.eq.s32.totalorder %s17, 3
    %p152 = por %p150, %p151
    %p153 = scmp.ne.s32.totalorder %s144, %s145
    %p154 = scmp.eq.s32.totalorder %s17, 0
    %p155 = por %p153, %p154
    %p156 = scmp.ne.s32.totalorder %s144, %s145
    %p157 = scmp.eq.s32.totalorder %s18, 3
    %p158 = por %p156, %p157
    %p160 = scmp.ne.s32.totalorder %s145, %s159
    %p161 = scmp.eq.s32.totalorder %s18, 0
    %p162 = por %p160, %p161
    %s163 = ssub.s32 %s19, %s31
    %s164 = ssub.s32 %s20, %s27
    %s165 = sor.u32 %s163, %s164
    %p166 = scmp.eq.s32.totalorder %s165, 0
    %s168 = sadd.s32 %s167, 1
    %s169 = scalar_select %p166, %s167, %s168
    %p172 = pneg %p166
    %p173 = scmp.eq.s32.totalorder %s12, 3
    %p174 = por %p172, %p173
    %p175 = scmp.ne.s32.totalorder %s167, %s170
    %p176 = scmp.eq.s32.totalorder %s12, 0
    %p177 = por %p175, %p176
    %p178 = scmp.ne.s32.totalorder %s167, %s170
    %p179 = scmp.eq.s32.totalorder %s17, 3
    %p180 = por %p178, %p179
    %p181 = scmp.ne.s32.totalorder %s170, %s171
    %p182 = scmp.eq.s32.totalorder %s17, 0
    %p183 = por %p181, %p182
    %p184 = scmp.ne.s32.totalorder %s170, %s171
    %p185 = scmp.eq.s32.totalorder %s18, 3
    %p186 = por %p184, %p185
    %p188 = scmp.ne.s32.totalorder %s171, %s187
    %p189 = scmp.eq.s32.totalorder %s18, 0
    %p190 = por %p188, %p189
    %p191 = scmp.le.s32.totalorder 1, %s12
    %p192 = scmp.lt.s32.totalorder %s12, 5
    %p193 = pnand %p191, %p192
    %p194 = pneg %p193
    // Predicated region
    $region9: #{gated_conv.1} parent=5 // pred_check
      _
    $region10: #{gated_conv.1} parent=5 // pred_check_branch
      %196 = sbr.rel (%p193) target = $region12
    $region11: #{gated_conv.1} parent=5 // pred_region
      %s197 = ssub.s32 %s12, 1
      // Predicated region
      $region13: #{gated_conv.1} parent=11 // pred_check
        %p198 = pneg %p71
      $region14: #{gated_conv.1} parent=11 // pred_check_branch
        %200 = sbr.rel (%p198) target = $region16
      $region15: #{gated_conv.1} parent=11 // pred_region
        _
      $region16: #{gated_conv.1} parent=11 // pred_fallthru
        _
      // Predicated region
      $region17: #{gated_conv.1} parent=11 // pred_check
        %p201 = pneg %p92
      $region18: #{gated_conv.1} parent=11 // pred_check_branch
        %203 = sbr.rel (%p201) target = $region20
      $region19: #{gated_conv.1} parent=11 // pred_region
        _
      $region20: #{gated_conv.1} parent=11 // pred_fallthru
        _
      // Predicated region
      $region21: #{gated_conv.1} parent=11 // pred_check
        %p204 = pneg %p113
      $region22: #{gated_conv.1} parent=11 // pred_check_branch
        %206 = sbr.rel (%p204) target = $region24
      $region23: #{gated_conv.1} parent=11 // pred_region
        _
      $region24: #{gated_conv.1} parent=11 // pred_fallthru
        _
      // Predicated region
      $region25: #{gated_conv.1} parent=11 // pred_check
        %p207 = pneg %p134
      $region26: #{gated_conv.1} parent=11 // pred_check_branch
        %209 = sbr.rel (%p207) target = $region28
      $region27: #{gated_conv.1} parent=11 // pred_region
        _
      $region28: #{gated_conv.1} parent=11 // pred_fallthru
        _
      // Predicated region
      $region29: #{gated_conv.1} parent=11 // pred_check
        %p210 = pneg %p155
      $region30: #{gated_conv.1} parent=11 // pred_check_branch
        %212 = sbr.rel (%p210) target = $region32
      $region31: #{gated_conv.1} parent=11 // pred_region
        _
      $region32: #{gated_conv.1} parent=11 // pred_fallthru
        _
    $region12: #{gated_conv.1} parent=5 // pred_fallthru
      _
    %p213 = scmp.lt.s32.totalorder %s12, 4
    // Predicated region
    $region33: #{gated_conv.1} parent=5 // pred_check
      %p214 = pneg %p213
    $region34: #{gated_conv.1} parent=5 // pred_check_branch
      %216 = sbr.rel (%p214) target = $region36
    $region35: #{gated_conv.1} parent=5 // pred_region
      // Predicated region
      $region37: #{gated_conv.1} parent=35 // pred_check
        %p217 = pneg %p44
      $region38: #{gated_conv.1} parent=35 // pred_check_branch
        %219 = sbr.rel (%p217) target = $region40
      $region39: #{gated_conv.1} parent=35 // pred_region
        %s220 = smul.u32 3, %s19
        %p221 = scmp.lt.s32.totalorder %s220, 5
        %s222 = scalar_select %p221, %s220, 5
        %s223 = smul.addr %s222, 4
        %s224 = smul.addr %s223, 2
        %s225 = scalar_lea.vmem %s0, %s224
        %s226 = smul.u32 3, %s19
      $region40: #{gated_conv.1} parent=35 // pred_fallthru
        _
    $region36: #{gated_conv.1} parent=5 // pred_fallthru
      _
    %p227 = scmp.le.s32.totalorder 1, %s12
    %p228 = scmp.lt.s32.totalorder %s12, 5
    %p229 = pnand %p227, %p228
    %p230 = pneg %p229
    // Predicated region
    $region41: #{gated_conv.1} parent=5 // pred_check
      _
    $region42: #{gated_conv.1} parent=5 // pred_check_branch
      %232 = sbr.rel (%p229) target = $region44
    $region43: #{gated_conv.1} parent=5 // pred_region
      %s233 = ssub.s32 %s12, 1
      %s234 = smul.u32 3, %s21
      %p235 = scmp.lt.s32.totalorder %s234, 5
      %s236 = scalar_select %p235, %s234, 5
      %s237 = smul.addr %s236, 4
      %s238 = smul.addr %s237, 2
      %s239 = scalar_lea.vmem %s0, %s238
      %p240 = pneg %p50
      %p241 = pneg %p47
      %p242 = pneg %p71
      %p243 = pneg %p68
      %p244 = pneg %p92
      %p245 = pneg %p89
      %p246 = pneg %p113
      %p247 = pneg %p110
      %p248 = pneg %p134
      %p249 = pneg %p131
      %p250 = pneg %p155
      %p251 = pneg %p152
      %p252 = pneg %p183
      %p253 = pneg %p180
      %s254 = smul.u32 4, %s22
      %p255 = scmp.lt.s32.totalorder %s21, 1
      %s256 = scalar_select %p255, %s21, 1
      %p257 = scmp.lt.s32.totalorder %s254, 7
      %s258 = scalar_select %p257, %s254, 7
      %s259 = smul.addr %s256, 8
      %s260 = sadd.s32 %s258, %s259
      %s261 = smul.addr %s260, 4
      %s262 = scalar_lea.vmem %s6, %s261
      %s263 = smul.u32 3, %s21
      %p264 = scmp.lt.s32.totalorder %s263, 5
      %s265 = scalar_select %p264, %s263, 5
      %s266 = smul.addr %s265, 4
      %s267 = smul.addr %s266, 2
      %s268 = scalar_lea.vmem %s0, %s267
      %s269 = smul.u32 3, %s21
      %s270 = smul.u32 4, %s22
      %p271 = scmp.lt.s32.totalorder %s21, 1
      %s272 = scalar_select %p271, %s21, 1
      %p273 = scmp.lt.s32.totalorder %s270, 7
      %s274 = scalar_select %p273, %s270, 7
      %s275 = smul.addr %s272, 8
      %s276 = sadd.s32 %s274, %s275
      %s277 = smul.addr %s276, 4
      %s278 = scalar_lea.vmem %s6, %s277
      %s279 = smul.u32 4, %s22
      %s281 = smul.u32 %s22, 4
      %s282 = smul.addr %s281, 2
      %s283 = scalar_lea.vmem %s268, %s282
      %v284 = vld [vmem:[%s283] sm:$0xff]
      %s285 = sadd.s32 %s22, 1
      %s286 = smul.u32 %s285, 4
      %s287 = smul.addr %s286, 2
      %s288 = scalar_lea.vmem %s268, %s287
      %v289 = vld [vmem:[%s288] sm:$0xff]
      %v291 = vcombine.high %v284, %v284
      %v293 = vunpack.c.l.s4 1983009808
      %v294 = vunpack.c.0.s8 %v293
      %v295 = vlaneseq
      %v296 = vshrl.u32 %v295, 7
      %v297 = vsub.s32 %v294, %v296
      %v298 = vrot.slane %v284, %v297
      %v300 = vunpack.c.l.s4 1983009808
      %v301 = vunpack.c.0.s8 %v300
      %v302 = vlaneseq
      %v303 = vshrl.u32 %v302, 7
      %v304 = vsub.s32 %v301, %v303
      %v305 = vrot.slane %v291, %v304
      %v306 = vcombine.high %v298, %v298
      %v307 = vcombine.high %v305, %v305
      %v314 = vunpack.c.l.s4 1983009808
      %v315 = vunpack.c.0.s8 %v314
      %v316 = vlaneseq
      %v317 = vshrl.u32 %v316, 7
      %v318 = vsub.s32 %v315, %v317
      %v319 = vrot.slane %v289, %v318
      %v320 = vcombine.high %v319, %v319
      %v322 = vld [vmem:[%s1] sm:$0xf]
      %s323 = scalar_lea.vmem %s1, 4
      %v324 = vld [vmem:[%s323] sm:$0xf]
      %325 = vrot.lane.b32.xlu0 %v298, 127
      %v326 = vpop.permute.xlu0 %325
      %327 = vrot.lane.b32.xlu0 %v306, 127
      %v328 = vpop.permute.xlu0 %327
      %329 = vrot.lane.b32.xlu0 %v305, 127
      %v330 = vpop.permute.xlu0 %329
      %331 = vrot.lane.b32.xlu0 %v307, 127
      %v332 = vpop.permute.xlu0 %331
      %333 = vrot.lane.b32.xlu0 %v319, 127
      %v334 = vpop.permute.xlu0 %333
      %vm335 = vcmask 1039360
      %v336 = vsel %vm335, %v326, %v328
      %v337 = vsel %vm335, %v328, %v330
      %v338 = vsel %vm335, %v330, %v332
      %v339 = vsel %vm335, %v332, %v334
      %vm340 = vcmask 31744
      %v342 = vsel %vm340, %v324, 0
      %vm344 = vcmask 1041408
      %v346 = vsel %vm344, %v336, 0
      %v349 = vsel %vm344, %v337, 0
      %v352 = vsel %vm344, %v338, 0
      %v355 = vsel %vm344, %v339, 0
      %357 = vmatprep.subr.bf16.mxu0 %v349
      %358 = vmatpush1.bf16.msra.mxu0 %v346
      %359 = vmatprep.subr.bf16.mxu0 0
      %360 = vmatpush1.bf16.msra.mxu0 0
      %361 = vmatprep.subr.bf16.mxu0 0
      %362 = vmatpush1.bf16.msra.mxu0 0
      %363 = vmatprep.subr.bf16.mxu0 0
      %364 = vmatpush1.bf16.msra.mxu0 0
      %365 = vmatprep.subr.bf16.mxu0 0
      %366 = vmatpush1.bf16.msra.mxu0 0
      %367 = vmatprep.subr.bf16.mxu0 0
      %368 = vmatpush1.bf16.msra.mxu0 0
      %369 = vmatprep.subr.bf16.mxu0 0
      %370 = vmatpush1.bf16.msra.mxu0 0
      %371 = vmatprep.subr.bf16.mxu0 0
      %372 = vmatpush1.bf16.msra.mxu0 0
      %373 = vmatprep.subr.bf16.mxu0 0
      %374 = vmatpush1.bf16.msra.mxu0 0
      %375 = vmatprep.subr.bf16.mxu0 0
      %376 = vmatpush1.bf16.msra.mxu0 0
      %377 = vmatprep.subr.bf16.mxu0 0
      %378 = vmatpush1.bf16.msra.mxu0 0
      %379 = vmatprep.subr.bf16.mxu0 0
      %380 = vmatpush1.bf16.msra.mxu0 0
      %381 = vmatprep.subr.bf16.mxu0 0
      %382 = vmatpush1.bf16.msra.mxu0 0
      %383 = vmatprep.subr.bf16.mxu0 0
      %384 = vmatpush1.bf16.msra.mxu0 0
      %385 = vmatprep.subr.bf16.mxu0 0
      %386 = vmatpush1.bf16.msra.mxu0 0
      %387 = vmatprep.subr.bf16.mxu0 0
      %388 = vmatpush1.bf16.msra.mxu0 0
      %389 = vmatprep.mubr.bf16.mxu0 0
      %390 = vmatmul.mubr.bf16.gmra.mrb[0].mxu0 %v342
      %v391 = vpop.f32.mrb[0].mxu0
      %v392 = vadd.f32 0.0, %v391
      %v393 = vpop.f32.mrb[0].mxu0
      %v394 = vadd.f32 0.0, %v393
      %v395 = vpop.f32.mrb[0].mxu0
      %v396 = vpop.f32.mrb[0].mxu0
      %397 = vdwg.mxu0
      %398 = vmatprep.subr.bf16.mxu0 %v355
      %399 = vmatpush1.bf16.msra.mxu0 %v352
      %400 = vmatprep.subr.bf16.mxu0 0
      %401 = vmatpush1.bf16.msra.mxu0 0
      %402 = vmatprep.subr.bf16.mxu0 0
      %403 = vmatpush1.bf16.msra.mxu0 0
      %404 = vmatprep.subr.bf16.mxu0 0
      %405 = vmatpush1.bf16.msra.mxu0 0
      %406 = vmatprep.subr.bf16.mxu0 0
      %407 = vmatpush1.bf16.msra.mxu0 0
      %408 = vmatprep.subr.bf16.mxu0 0
      %409 = vmatpush1.bf16.msra.mxu0 0
      %410 = vmatprep.subr.bf16.mxu0 0
      %411 = vmatpush1.bf16.msra.mxu0 0
      %412 = vmatprep.subr.bf16.mxu0 0
      %413 = vmatpush1.bf16.msra.mxu0 0
      %414 = vmatprep.subr.bf16.mxu0 0
      %415 = vmatpush1.bf16.msra.mxu0 0
      %416 = vmatprep.subr.bf16.mxu0 0
      %417 = vmatpush1.bf16.msra.mxu0 0
      %418 = vmatprep.subr.bf16.mxu0 0
      %419 = vmatpush1.bf16.msra.mxu0 0
      %420 = vmatprep.subr.bf16.mxu0 0
      %421 = vmatpush1.bf16.msra.mxu0 0
      %422 = vmatprep.subr.bf16.mxu0 0
      %423 = vmatpush1.bf16.msra.mxu0 0
      %424 = vmatprep.subr.bf16.mxu0 0
      %425 = vmatpush1.bf16.msra.mxu0 0
      %426 = vmatprep.subr.bf16.mxu0 0
      %427 = vmatpush1.bf16.msra.mxu0 0
      %428 = vmatprep.subr.bf16.mxu0 0
      %429 = vmatpush1.bf16.msra.mxu0 0
      %430 = vmatprep.mubr.bf16.mxu0 0
      %431 = vmatmul.mubr.bf16.gmra.mrb[0].mxu0 %v342
      %v432 = vpop.f32.mrb[0].mxu0
      %v433 = vadd.f32 0.0, %v432
      %v434 = vpop.f32.mrb[0].mxu0
      %v435 = vadd.f32 0.0, %v434
      %v436 = vpop.f32.mrb[0].mxu0
      %v437 = vpop.f32.mrb[0].mxu0
      %438 = vdwg.mxu0
      %v440 = vsel %vm340, %v322, 0
      %v443 = vsel %vm344, %v298, 0
      %v446 = vsel %vm344, %v306, 0
      %v449 = vsel %vm344, %v305, 0
      %v452 = vsel %vm344, %v307, 0
      %454 = vmatprep.subr.bf16.mxu0 %v446
      %455 = vmatpush1.bf16.msra.mxu0 %v443
      %456 = vmatprep.subr.bf16.mxu0 0
      %457 = vmatpush1.bf16.msra.mxu0 0
      %458 = vmatprep.subr.bf16.mxu0 0
      %459 = vmatpush1.bf16.msra.mxu0 0
      %460 = vmatprep.subr.bf16.mxu0 0
      %461 = vmatpush1.bf16.msra.mxu0 0
      %462 = vmatprep.subr.bf16.mxu0 0
      %463 = vmatpush1.bf16.msra.mxu0 0
      %464 = vmatprep.subr.bf16.mxu0 0
      %465 = vmatpush1.bf16.msra.mxu0 0
      %466 = vmatprep.subr.bf16.mxu0 0
      %467 = vmatpush1.bf16.msra.mxu0 0
      %468 = vmatprep.subr.bf16.mxu0 0
      %469 = vmatpush1.bf16.msra.mxu0 0
      %470 = vmatprep.subr.bf16.mxu0 0
      %471 = vmatpush1.bf16.msra.mxu0 0
      %472 = vmatprep.subr.bf16.mxu0 0
      %473 = vmatpush1.bf16.msra.mxu0 0
      %474 = vmatprep.subr.bf16.mxu0 0
      %475 = vmatpush1.bf16.msra.mxu0 0
      %476 = vmatprep.subr.bf16.mxu0 0
      %477 = vmatpush1.bf16.msra.mxu0 0
      %478 = vmatprep.subr.bf16.mxu0 0
      %479 = vmatpush1.bf16.msra.mxu0 0
      %480 = vmatprep.subr.bf16.mxu0 0
      %481 = vmatpush1.bf16.msra.mxu0 0
      %482 = vmatprep.subr.bf16.mxu0 0
      %483 = vmatpush1.bf16.msra.mxu0 0
      %484 = vmatprep.subr.bf16.mxu0 0
      %485 = vmatpush1.bf16.msra.mxu0 0
      %486 = vmatprep.mubr.bf16.mxu0 0
      %487 = vmatmul.mubr.bf16.gmra.mrb[0].mxu0 %v440
      %v488 = vpop.f32.mrb[0].mxu0
      %v489 = vadd.f32 %v392, %v488
      %v490 = vpop.f32.mrb[0].mxu0
      %v491 = vadd.f32 %v394, %v490
      %v492 = vpop.f32.mrb[0].mxu0
      %v493 = vpop.f32.mrb[0].mxu0
      %494 = vdwg.mxu0
      %495 = vmatprep.subr.bf16.mxu0 %v452
      %496 = vmatpush1.bf16.msra.mxu0 %v449
      %497 = vmatprep.subr.bf16.mxu0 0
      %498 = vmatpush1.bf16.msra.mxu0 0
      %499 = vmatprep.subr.bf16.mxu0 0
      %500 = vmatpush1.bf16.msra.mxu0 0
      %501 = vmatprep.subr.bf16.mxu0 0
      %502 = vmatpush1.bf16.msra.mxu0 0
      %503 = vmatprep.subr.bf16.mxu0 0
      %504 = vmatpush1.bf16.msra.mxu0 0
      %505 = vmatprep.subr.bf16.mxu0 0
      %506 = vmatpush1.bf16.msra.mxu0 0
      %507 = vmatprep.subr.bf16.mxu0 0
      %508 = vmatpush1.bf16.msra.mxu0 0
      %509 = vmatprep.subr.bf16.mxu0 0
      %510 = vmatpush1.bf16.msra.mxu0 0
      %511 = vmatprep.subr.bf16.mxu0 0
      %512 = vmatpush1.bf16.msra.mxu0 0
      %513 = vmatprep.subr.bf16.mxu0 0
      %514 = vmatpush1.bf16.msra.mxu0 0
      %515 = vmatprep.subr.bf16.mxu0 0
      %516 = vmatpush1.bf16.msra.mxu0 0
      %517 = vmatprep.subr.bf16.mxu0 0
      %518 = vmatpush1.bf16.msra.mxu0 0
      %519 = vmatprep.subr.bf16.mxu0 0
      %520 = vmatpush1.bf16.msra.mxu0 0
      %521 = vmatprep.subr.bf16.mxu0 0
      %522 = vmatpush1.bf16.msra.mxu0 0
      %523 = vmatprep.subr.bf16.mxu0 0
      %524 = vmatpush1.bf16.msra.mxu0 0
      %525 = vmatprep.subr.bf16.mxu0 0
      %526 = vmatpush1.bf16.msra.mxu0 0
      %527 = vmatprep.mubr.bf16.mxu0 0
      %528 = vmatmul.mubr.bf16.gmra.mrb[0].mxu0 %v440
      %v529 = vpop.f32.mrb[0].mxu0
      %v530 = vadd.f32 %v433, %v529
      %v531 = vpop.f32.mrb[0].mxu0
      %v532 = vadd.f32 %v435, %v531
      %v533 = vpop.f32.mrb[0].mxu0
      %v534 = vpop.f32.mrb[0].mxu0
      %535 = vdwg.mxu0
      %s536 = scalar_lea.vmem %s1, 8
      %v537 = vld [vmem:[%s536] sm:$0xf]
      %538 = vrot.lane.b32.xlu0 %v298, 126
      %v539 = vpop.permute.xlu0 %538
      %540 = vrot.lane.b32.xlu0 %v306, 126
      %v541 = vpop.permute.xlu0 %540
      %542 = vrot.lane.b32.xlu0 %v305, 126
      %v543 = vpop.permute.xlu0 %542
      %544 = vrot.lane.b32.xlu0 %v307, 126
      %v545 = vpop.permute.xlu0 %544
      %546 = vrot.lane.b32.xlu0 %v319, 126
      %v547 = vpop.permute.xlu0 %546
      %vm548 = vcmask 1031168
      %v549 = vsel %vm548, %v539, %v541
      %v550 = vsel %vm548, %v541, %v543
      %v551 = vsel %vm548, %v543, %v545
      %v552 = vsel %vm548, %v545, %v547
      %v554 = vsel %vm340, %v537, 0
      %v557 = vsel %vm344, %v549, 0
      %v560 = vsel %vm344, %v550, 0
      %v563 = vsel %vm344, %v551, 0
      %v566 = vsel %vm344, %v552, 0
      %568 = vmatprep.subr.bf16.mxu0 %v560
      %569 = vmatpush1.bf16.msra.mxu0 %v557
      %570 = vmatprep.subr.bf16.mxu0 0
      %571 = vmatpush1.bf16.msra.mxu0 0
      %572 = vmatprep.subr.bf16.mxu0 0
      %573 = vmatpush1.bf16.msra.mxu0 0
      %574 = vmatprep.subr.bf16.mxu0 0
      %575 = vmatpush1.bf16.msra.mxu0 0
      %576 = vmatprep.subr.bf16.mxu0 0
      %577 = vmatpush1.bf16.msra.mxu0 0
      %578 = vmatprep.subr.bf16.mxu0 0
      %579 = vmatpush1.bf16.msra.mxu0 0
      %580 = vmatprep.subr.bf16.mxu0 0
      %581 = vmatpush1.bf16.msra.mxu0 0
      %582 = vmatprep.subr.bf16.mxu0 0
      %583 = vmatpush1.bf16.msra.mxu0 0
      %584 = vmatprep.subr.bf16.mxu0 0
      %585 = vmatpush1.bf16.msra.mxu0 0
      %586 = vmatprep.subr.bf16.mxu0 0
      %587 = vmatpush1.bf16.msra.mxu0 0
      %588 = vmatprep.subr.bf16.mxu0 0
      %589 = vmatpush1.bf16.msra.mxu0 0
      %590 = vmatprep.subr.bf16.mxu0 0
      %591 = vmatpush1.bf16.msra.mxu0 0
      %592 = vmatprep.subr.bf16.mxu0 0
      %593 = vmatpush1.bf16.msra.mxu0 0
      %594 = vmatprep.subr.bf16.mxu0 0
      %595 = vmatpush1.bf16.msra.mxu0 0
      %596 = vmatprep.subr.bf16.mxu0 0
      %597 = vmatpush1.bf16.msra.mxu0 0
      %598 = vmatprep.subr.bf16.mxu0 0
      %599 = vmatpush1.bf16.msra.mxu0 0
      %600 = vmatprep.mubr.bf16.mxu0 0
      %601 = vmatmul.mubr.bf16.gmra.mrb[0].mxu0 %v554
      %v602 = vpop.f32.mrb[0].mxu0
      %v603 = vadd.f32 0.0, %v602
      %v604 = vpop.f32.mrb[0].mxu0
      %v605 = vadd.f32 0.0, %v604
      %v606 = vpop.f32.mrb[0].mxu0
      %v607 = vpop.f32.mrb[0].mxu0
      %608 = vdwg.mxu0
      %609 = vmatprep.subr.bf16.mxu0 %v566
      %610 = vmatpush1.bf16.msra.mxu0 %v563
      %611 = vmatprep.subr.bf16.mxu0 0
      %612 = vmatpush1.bf16.msra.mxu0 0
      %613 = vmatprep.subr.bf16.mxu0 0
      %614 = vmatpush1.bf16.msra.mxu0 0
      %615 = vmatprep.subr.bf16.mxu0 0
      %616 = vmatpush1.bf16.msra.mxu0 0
      %617 = vmatprep.subr.bf16.mxu0 0
      %618 = vmatpush1.bf16.msra.mxu0 0
      %619 = vmatprep.subr.bf16.mxu0 0
      %620 = vmatpush1.bf16.msra.mxu0 0
      %621 = vmatprep.subr.bf16.mxu0 0
      %622 = vmatpush1.bf16.msra.mxu0 0
      %623 = vmatprep.subr.bf16.mxu0 0
      %624 = vmatpush1.bf16.msra.mxu0 0
      %625 = vmatprep.subr.bf16.mxu0 0
      %626 = vmatpush1.bf16.msra.mxu0 0
      %627 = vmatprep.subr.bf16.mxu0 0
      %628 = vmatpush1.bf16.msra.mxu0 0
      %629 = vmatprep.subr.bf16.mxu0 0
      %630 = vmatpush1.bf16.msra.mxu0 0
      %631 = vmatprep.subr.bf16.mxu0 0
      %632 = vmatpush1.bf16.msra.mxu0 0
      %633 = vmatprep.subr.bf16.mxu0 0
      %634 = vmatpush1.bf16.msra.mxu0 0
      %635 = vmatprep.subr.bf16.mxu0 0
      %636 = vmatpush1.bf16.msra.mxu0 0
      %637 = vmatprep.subr.bf16.mxu0 0
      %638 = vmatpush1.bf16.msra.mxu0 0
      %639 = vmatprep.subr.bf16.mxu0 0
      %640 = vmatpush1.bf16.msra.mxu0 0
      %641 = vmatprep.mubr.bf16.mxu0 0
      %642 = vmatmul.mubr.bf16.gmra.mrb[0].mxu0 %v554
      %v643 = vpop.f32.mrb[0].mxu0
      %v644 = vadd.f32 0.0, %v643
      %v645 = vpop.f32.mrb[0].mxu0
      %v646 = vadd.f32 0.0, %v645
      %v647 = vpop.f32.mrb[0].mxu0
      %v648 = vpop.f32.mrb[0].mxu0
      %649 = vdwg.mxu0
      %v650 = vadd.f32 %v489, %v603
      %v651 = vadd.f32 %v491, %v605
      %v652 = vadd.f32 %v530, %v644
      %v653 = vadd.f32 %v532, %v646
      %s654 = scalar_lea.vmem %s1, 12
      %v655 = vld [vmem:[%s654] sm:$0xf]
      %656 = vrot.lane.b32.xlu0 %v298, 118
      %v657 = vpop.permute.xlu0 %656
      %658 = vrot.lane.b32.xlu0 %v306, 118
      %v659 = vpop.permute.xlu0 %658
      %660 = vrot.lane.b32.xlu0 %v305, 118
      %v661 = vpop.permute.xlu0 %660
      %662 = vrot.lane.b32.xlu0 %v307, 118
      %v663 = vpop.permute.xlu0 %662
      %664 = vrot.lane.b32.xlu0 %v319, 118
      %v665 = vpop.permute.xlu0 %664
      %vm666 = vcmask 965632
      %v667 = vsel %vm666, %v657, %v659
      %v668 = vsel %vm666, %v659, %v661
      %v669 = vsel %vm666, %v661, %v663
      %v670 = vsel %vm666, %v663, %v665
      %v672 = vsel %vm340, %v655, 0
      %v675 = vsel %vm344, %v667, 0
      %v678 = vsel %vm344, %v668, 0
      %v681 = vsel %vm344, %v669, 0
      %v684 = vsel %vm344, %v670, 0
      %686 = vmatprep.subr.bf16.mxu0 %v678
      %687 = vmatpush1.bf16.msra.mxu0 %v675
      %688 = vmatprep.subr.bf16.mxu0 0
      %689 = vmatpush1.bf16.msra.mxu0 0
      %690 = vmatprep.subr.bf16.mxu0 0
      %691 = vmatpush1.bf16.msra.mxu0 0
      %692 = vmatprep.subr.bf16.mxu0 0
      %693 = vmatpush1.bf16.msra.mxu0 0
      %694 = vmatprep.subr.bf16.mxu0 0
      %695 = vmatpush1.bf16.msra.mxu0 0
      %696 = vmatprep.subr.bf16.mxu0 0
      %697 = vmatpush1.bf16.msra.mxu0 0
      %698 = vmatprep.subr.bf16.mxu0 0
      %699 = vmatpush1.bf16.msra.mxu0 0
      %700 = vmatprep.subr.bf16.mxu0 0
      %701 = vmatpush1.bf16.msra.mxu0 0
      %702 = vmatprep.subr.bf16.mxu0 0
      %703 = vmatpush1.bf16.msra.mxu0 0
      %704 = vmatprep.subr.bf16.mxu0 0
      %705 = vmatpush1.bf16.msra.mxu0 0
      %706 = vmatprep.subr.bf16.mxu0 0
      %707 = vmatpush1.bf16.msra.mxu0 0
      %708 = vmatprep.subr.bf16.mxu0 0
      %709 = vmatpush1.bf16.msra.mxu0 0
      %710 = vmatprep.subr.bf16.mxu0 0
      %711 = vmatpush1.bf16.msra.mxu0 0
      %712 = vmatprep.subr.bf16.mxu0 0
      %713 = vmatpush1.bf16.msra.mxu0 0
      %714 = vmatprep.subr.bf16.mxu0 0
      %715 = vmatpush1.bf16.msra.mxu0 0
      %716 = vmatprep.subr.bf16.mxu0 0
      %717 = vmatpush1.bf16.msra.mxu0 0
      %718 = vmatprep.mubr.bf16.mxu0 0
      %719 = vmatmul.mubr.bf16.gmra.mrb[0].mxu0 %v672
      %v720 = vpop.f32.mrb[0].mxu0
      %v721 = vadd.f32 0.0, %v720
      %v722 = vpop.f32.mrb[0].mxu0
      %v723 = vadd.f32 0.0, %v722
      %v724 = vpop.f32.mrb[0].mxu0
      %v725 = vpop.f32.mrb[0].mxu0
      %726 = vdwg.mxu0
      %727 = vmatprep.subr.bf16.mxu0 %v684
      %728 = vmatpush1.bf16.msra.mxu0 %v681
      %729 = vmatprep.subr.bf16.mxu0 0
      %730 = vmatpush1.bf16.msra.mxu0 0
      %731 = vmatprep.subr.bf16.mxu0 0
      %732 = vmatpush1.bf16.msra.mxu0 0
      %733 = vmatprep.subr.bf16.mxu0 0
      %734 = vmatpush1.bf16.msra.mxu0 0
      %735 = vmatprep.subr.bf16.mxu0 0
      %736 = vmatpush1.bf16.msra.mxu0 0
      %737 = vmatprep.subr.bf16.mxu0 0
      %738 = vmatpush1.bf16.msra.mxu0 0
      %739 = vmatprep.subr.bf16.mxu0 0
      %740 = vmatpush1.bf16.msra.mxu0 0
      %741 = vmatprep.subr.bf16.mxu0 0
      %742 = vmatpush1.bf16.msra.mxu0 0
      %743 = vmatprep.subr.bf16.mxu0 0
      %744 = vmatpush1.bf16.msra.mxu0 0
      %745 = vmatprep.subr.bf16.mxu0 0
      %746 = vmatpush1.bf16.msra.mxu0 0
      %747 = vmatprep.subr.bf16.mxu0 0
      %748 = vmatpush1.bf16.msra.mxu0 0
      %749 = vmatprep.subr.bf16.mxu0 0
      %750 = vmatpush1.bf16.msra.mxu0 0
      %751 = vmatprep.subr.bf16.mxu0 0
      %752 = vmatpush1.bf16.msra.mxu0 0
      %753 = vmatprep.subr.bf16.mxu0 0
      %754 = vmatpush1.bf16.msra.mxu0 0
      %755 = vmatprep.subr.bf16.mxu0 0
      %756 = vmatpush1.bf16.msra.mxu0 0
      %757 = vmatprep.subr.bf16.mxu0 0
      %758 = vmatpush1.bf16.msra.mxu0 0
      %759 = vmatprep.mubr.bf16.mxu0 0
      %760 = vmatmul.mubr.bf16.gmra.mrb[0].mxu0 %v672
      %v761 = vpop.f32.mrb[0].mxu0
      %v762 = vadd.f32 0.0, %v761
      %v763 = vpop.f32.mrb[0].mxu0
      %v764 = vadd.f32 0.0, %v763
      %v765 = vpop.f32.mrb[0].mxu0
      %v766 = vpop.f32.mrb[0].mxu0
      %767 = vdwg.mxu0
      %v768 = vadd.f32 %v650, %v721
      %v769 = vadd.f32 %v651, %v723
      %v770 = vadd.f32 %v652, %v762
      %v771 = vadd.f32 %v653, %v764
      %s772 = scalar_lea.vmem %s1, 16
      %v773 = vld [vmem:[%s772] sm:$0xf]
      %774 = vrot.lane.b32.xlu0 %v298, 117
      %v775 = vpop.permute.xlu0 %774
      %776 = vrot.lane.b32.xlu0 %v306, 117
      %v777 = vpop.permute.xlu0 %776
      %778 = vrot.lane.b32.xlu0 %v305, 117
      %v779 = vpop.permute.xlu0 %778
      %780 = vrot.lane.b32.xlu0 %v307, 117
      %v781 = vpop.permute.xlu0 %780
      %782 = vrot.lane.b32.xlu0 %v319, 117
      %v783 = vpop.permute.xlu0 %782
      %vm784 = vcmask 957440
      %v785 = vsel %vm784, %v775, %v777
      %v786 = vsel %vm784, %v777, %v779
      %v787 = vsel %vm784, %v779, %v781
      %v788 = vsel %vm784, %v781, %v783
      %v790 = vsel %vm340, %v773, 0
      %v793 = vsel %vm344, %v785, 0
      %v796 = vsel %vm344, %v786, 0
      %v799 = vsel %vm344, %v787, 0
      %v802 = vsel %vm344, %v788, 0
      %804 = vmatprep.subr.bf16.mxu0 %v796
      %805 = vmatpush1.bf16.msra.mxu0 %v793
      %806 = vmatprep.subr.bf16.mxu0 0
      %807 = vmatpush1.bf16.msra.mxu0 0
      %808 = vmatprep.subr.bf16.mxu0 0
      %809 = vmatpush1.bf16.msra.mxu0 0
      %810 = vmatprep.subr.bf16.mxu0 0
      %811 = vmatpush1.bf16.msra.mxu0 0
      %812 = vmatprep.subr.bf16.mxu0 0
      %813 = vmatpush1.bf16.msra.mxu0 0
      %814 = vmatprep.subr.bf16.mxu0 0
      %815 = vmatpush1.bf16.msra.mxu0 0
      %816 = vmatprep.subr.bf16.mxu0 0
      %817 = vmatpush1.bf16.msra.mxu0 0
      %818 = vmatprep.subr.bf16.mxu0 0
      %819 = vmatpush1.bf16.msra.mxu0 0
      %820 = vmatprep.subr.bf16.mxu0 0
      %821 = vmatpush1.bf16.msra.mxu0 0
      %822 = vmatprep.subr.bf16.mxu0 0
      %823 = vmatpush1.bf16.msra.mxu0 0
      %824 = vmatprep.subr.bf16.mxu0 0
      %825 = vmatpush1.bf16.msra.mxu0 0
      %826 = vmatprep.subr.bf16.mxu0 0
      %827 = vmatpush1.bf16.msra.mxu0 0
      %828 = vmatprep.subr.bf16.mxu0 0
      %829 = vmatpush1.bf16.msra.mxu0 0
      %830 = vmatprep.subr.bf16.mxu0 0
      %831 = vmatpush1.bf16.msra.mxu0 0
      %832 = vmatprep.subr.bf16.mxu0 0
      %833 = vmatpush1.bf16.msra.mxu0 0
      %834 = vmatprep.subr.bf16.mxu0 0
      %835 = vmatpush1.bf16.msra.mxu0 0
      %836 = vmatprep.mubr.bf16.mxu0 0
      %837 = vmatmul.mubr.bf16.gmra.mrb[0].mxu0 %v790
      %v838 = vpop.f32.mrb[0].mxu0
      %v839 = vadd.f32 0.0, %v838
      %v840 = vpop.f32.mrb[0].mxu0
      %v841 = vadd.f32 0.0, %v840
      %v842 = vpop.f32.mrb[0].mxu0
      %v843 = vpop.f32.mrb[0].mxu0
      %844 = vdwg.mxu0
      %845 = vmatprep.subr.bf16.mxu0 %v802
      %846 = vmatpush1.bf16.msra.mxu0 %v799
      %847 = vmatprep.subr.bf16.mxu0 0
      %848 = vmatpush1.bf16.msra.mxu0 0
      %849 = vmatprep.subr.bf16.mxu0 0
      %850 = vmatpush1.bf16.msra.mxu0 0
      %851 = vmatprep.subr.bf16.mxu0 0
      %852 = vmatpush1.bf16.msra.mxu0 0
      %853 = vmatprep.subr.bf16.mxu0 0
      %854 = vmatpush1.bf16.msra.mxu0 0
      %855 = vmatprep.subr.bf16.mxu0 0
      %856 = vmatpush1.bf16.msra.mxu0 0
      %857 = vmatprep.subr.bf16.mxu0 0
      %858 = vmatpush1.bf16.msra.mxu0 0
      %859 = vmatprep.subr.bf16.mxu0 0
      %860 = vmatpush1.bf16.msra.mxu0 0
      %861 = vmatprep.subr.bf16.mxu0 0
      %862 = vmatpush1.bf16.msra.mxu0 0
      %863 = vmatprep.subr.bf16.mxu0 0
      %864 = vmatpush1.bf16.msra.mxu0 0
      %865 = vmatprep.subr.bf16.mxu0 0
      %866 = vmatpush1.bf16.msra.mxu0 0
      %867 = vmatprep.subr.bf16.mxu0 0
      %868 = vmatpush1.bf16.msra.mxu0 0
      %869 = vmatprep.subr.bf16.mxu0 0
      %870 = vmatpush1.bf16.msra.mxu0 0
      %871 = vmatprep.subr.bf16.mxu0 0
      %872 = vmatpush1.bf16.msra.mxu0 0
      %873 = vmatprep.subr.bf16.mxu0 0
      %874 = vmatpush1.bf16.msra.mxu0 0
      %875 = vmatprep.subr.bf16.mxu0 0
      %876 = vmatpush1.bf16.msra.mxu0 0
      %877 = vmatprep.mubr.bf16.mxu0 0
      %878 = vmatmul.mubr.bf16.gmra.mrb[0].mxu0 %v790
      %v879 = vpop.f32.mrb[0].mxu0
      %v880 = vadd.f32 0.0, %v879
      %v881 = vpop.f32.mrb[0].mxu0
      %v882 = vadd.f32 0.0, %v881
      %v883 = vpop.f32.mrb[0].mxu0
      %v884 = vpop.f32.mrb[0].mxu0
      %885 = vdwg.mxu0
      %v886 = vadd.f32 %v768, %v839
      %v887 = vadd.f32 %v769, %v841
      %v888 = vadd.f32 %v770, %v880
      %v889 = vadd.f32 %v771, %v882
      %s890 = scalar_lea.vmem %s1, 20
      %v891 = vld [vmem:[%s890] sm:$0xf]
      %892 = vrot.lane.b32.xlu0 %v298, 116
      %v893 = vpop.permute.xlu0 %892
      %894 = vrot.lane.b32.xlu0 %v306, 116
      %v895 = vpop.permute.xlu0 %894
      %896 = vrot.lane.b32.xlu0 %v305, 116
      %v897 = vpop.permute.xlu0 %896
      %898 = vrot.lane.b32.xlu0 %v307, 116
      %v899 = vpop.permute.xlu0 %898
      %900 = vrot.lane.b32.xlu0 %v319, 116
      %v901 = vpop.permute.xlu0 %900
      %vm902 = vcmask 949248
      %v903 = vsel %vm902, %v893, %v895
      %v904 = vsel %vm902, %v895, %v897
      %v905 = vsel %vm902, %v897, %v899
      %v906 = vsel %vm902, %v899, %v901
      %v908 = vsel %vm340, %v891, 0
      %v911 = vsel %vm344, %v903, 0
      %v914 = vsel %vm344, %v904, 0
      %v917 = vsel %vm344, %v905, 0
      %v920 = vsel %vm344, %v906, 0
      %922 = vmatprep.subr.bf16.mxu0 %v914
      %923 = vmatpush1.bf16.msra.mxu0 %v911
      %924 = vmatprep.subr.bf16.mxu0 0
      %925 = vmatpush1.bf16.msra.mxu0 0
      %926 = vmatprep.subr.bf16.mxu0 0
      %927 = vmatpush1.bf16.msra.mxu0 0
      %928 = vmatprep.subr.bf16.mxu0 0
      %929 = vmatpush1.bf16.msra.mxu0 0
      %930 = vmatprep.subr.bf16.mxu0 0
      %931 = vmatpush1.bf16.msra.mxu0 0
      %932 = vmatprep.subr.bf16.mxu0 0
      %933 = vmatpush1.bf16.msra.mxu0 0
      %934 = vmatprep.subr.bf16.mxu0 0
      %935 = vmatpush1.bf16.msra.mxu0 0
      %936 = vmatprep.subr.bf16.mxu0 0
      %937 = vmatpush1.bf16.msra.mxu0 0
      %938 = vmatprep.subr.bf16.mxu0 0
      %939 = vmatpush1.bf16.msra.mxu0 0
      %940 = vmatprep.subr.bf16.mxu0 0
      %941 = vmatpush1.bf16.msra.mxu0 0
      %942 = vmatprep.subr.bf16.mxu0 0
      %943 = vmatpush1.bf16.msra.mxu0 0
      %944 = vmatprep.subr.bf16.mxu0 0
      %945 = vmatpush1.bf16.msra.mxu0 0
      %946 = vmatprep.subr.bf16.mxu0 0
      %947 = vmatpush1.bf16.msra.mxu0 0
      %948 = vmatprep.subr.bf16.mxu0 0
      %949 = vmatpush1.bf16.msra.mxu0 0
      %950 = vmatprep.subr.bf16.mxu0 0
      %951 = vmatpush1.bf16.msra.mxu0 0
      %952 = vmatprep.subr.bf16.mxu0 0
      %953 = vmatpush1.bf16.msra.mxu0 0
      %954 = vmatprep.mubr.bf16.mxu0 0
      %955 = vmatmul.mubr.bf16.gmra.mrb[0].mxu0 %v908
      %v956 = vpop.f32.mrb[0].mxu0
      %v957 = vadd.f32 0.0, %v956
      %v958 = vpop.f32.mrb[0].mxu0
      %v959 = vadd.f32 0.0, %v958
      %v960 = vpop.f32.mrb[0].mxu0
      %v961 = vpop.f32.mrb[0].mxu0
      %962 = vdwg.mxu0
      %963 = vmatprep.subr.bf16.mxu0 %v920
      %964 = vmatpush1.bf16.msra.mxu0 %v917
      %965 = vmatprep.subr.bf16.mxu0 0
      %966 = vmatpush1.bf16.msra.mxu0 0
      %967 = vmatprep.subr.bf16.mxu0 0
      %968 = vmatpush1.bf16.msra.mxu0 0
      %969 = vmatprep.subr.bf16.mxu0 0
      %970 = vmatpush1.bf16.msra.mxu0 0
      %971 = vmatprep.subr.bf16.mxu0 0
      %972 = vmatpush1.bf16.msra.mxu0 0
      %973 = vmatprep.subr.bf16.mxu0 0
      %974 = vmatpush1.bf16.msra.mxu0 0
      %975 = vmatprep.subr.bf16.mxu0 0
      %976 = vmatpush1.bf16.msra.mxu0 0
      %977 = vmatprep.subr.bf16.mxu0 0
      %978 = vmatpush1.bf16.msra.mxu0 0
      %979 = vmatprep.subr.bf16.mxu0 0
      %980 = vmatpush1.bf16.msra.mxu0 0
      %981 = vmatprep.subr.bf16.mxu0 0
      %982 = vmatpush1.bf16.msra.mxu0 0
      %983 = vmatprep.subr.bf16.mxu0 0
      %984 = vmatpush1.bf16.msra.mxu0 0
      %985 = vmatprep.subr.bf16.mxu0 0
      %986 = vmatpush1.bf16.msra.mxu0 0
      %987 = vmatprep.subr.bf16.mxu0 0
      %988 = vmatpush1.bf16.msra.mxu0 0
      %989 = vmatprep.subr.bf16.mxu0 0
      %990 = vmatpush1.bf16.msra.mxu0 0
      %991 = vmatprep.subr.bf16.mxu0 0
      %992 = vmatpush1.bf16.msra.mxu0 0
      %993 = vmatprep.subr.bf16.mxu0 0
      %994 = vmatpush1.bf16.msra.mxu0 0
      %995 = vmatprep.mubr.bf16.mxu0 0
      %996 = vmatmul.mubr.bf16.gmra.mrb[0].mxu0 %v908
      %v997 = vpop.f32.mrb[0].mxu0
      %v998 = vadd.f32 0.0, %v997
      %v999 = vpop.f32.mrb[0].mxu0
      %v1000 = vadd.f32 0.0, %v999
      %v1001 = vpop.f32.mrb[0].mxu0
      %v1002 = vpop.f32.mrb[0].mxu0
      %1003 = vdwg.mxu0
      %v1004 = vadd.f32 %v886, %v957
      %v1005 = vadd.f32 %v887, %v959
      %v1006 = vadd.f32 %v888, %v998
      %v1007 = vadd.f32 %v889, %v1000
      %s1008 = scalar_lea.vmem %s1, 24
      %v1009 = vld [vmem:[%s1008] sm:$0xf]
      %1010 = vrot.lane.b32.xlu0 %v298, 108
      %v1011 = vpop.permute.xlu0 %1010
      %1012 = vrot.lane.b32.xlu0 %v306, 108
      %v1013 = vpop.permute.xlu0 %1012
      %1014 = vrot.lane.b32.xlu0 %v305, 108
      %v1015 = vpop.permute.xlu0 %1014
      %1016 = vrot.lane.b32.xlu0 %v307, 108
      %v1017 = vpop.permute.xlu0 %1016
      %1018 = vrot.lane.b32.xlu0 %v319, 108
      %v1019 = vpop.permute.xlu0 %1018
      %vm1020 = vcmask 883712
      %v1021 = vsel %vm1020, %v1011, %v1013
      %v1022 = vsel %vm1020, %v1013, %v1015
      %v1023 = vsel %vm1020, %v1015, %v1017
      %v1024 = vsel %vm1020, %v1017, %v1019
      %v1026 = vsel %vm340, %v1009, 0
      %v1029 = vsel %vm344, %v1021, 0
      %v1032 = vsel %vm344, %v1022, 0
      %v1035 = vsel %vm344, %v1023, 0
      %v1038 = vsel %vm344, %v1024, 0
      %1040 = vmatprep.subr.bf16.mxu0 %v1032
      %1041 = vmatpush1.bf16.msra.mxu0 %v1029
      %1042 = vmatprep.subr.bf16.mxu0 0
      %1043 = vmatpush1.bf16.msra.mxu0 0
      %1044 = vmatprep.subr.bf16.mxu0 0
      %1045 = vmatpush1.bf16.msra.mxu0 0
      %1046 = vmatprep.subr.bf16.mxu0 0
      %1047 = vmatpush1.bf16.msra.mxu0 0
      %1048 = vmatprep.subr.bf16.mxu0 0
      %1049 = vmatpush1.bf16.msra.mxu0 0
      %1050 = vmatprep.subr.bf16.mxu0 0
      %1051 = vmatpush1.bf16.msra.mxu0 0
      %1052 = vmatprep.subr.bf16.mxu0 0
      %1053 = vmatpush1.bf16.msra.mxu0 0
      %1054 = vmatprep.subr.bf16.mxu0 0
      %1055 = vmatpush1.bf16.msra.mxu0 0
      %1056 = vmatprep.subr.bf16.mxu0 0
      %1057 = vmatpush1.bf16.msra.mxu0 0
      %1058 = vmatprep.subr.bf16.mxu0 0
      %1059 = vmatpush1.bf16.msra.mxu0 0
      %1060 = vmatprep.subr.bf16.mxu0 0
      %1061 = vmatpush1.bf16.msra.mxu0 0
      %1062 = vmatprep.subr.bf16.mxu0 0
      %1063 = vmatpush1.bf16.msra.mxu0 0
      %1064 = vmatprep.subr.bf16.mxu0 0
      %1065 = vmatpush1.bf16.msra.mxu0 0
      %1066 = vmatprep.subr.bf16.mxu0 0
      %1067 = vmatpush1.bf16.msra.mxu0 0
      %1068 = vmatprep.subr.bf16.mxu0 0
      %1069 = vmatpush1.bf16.msra.mxu0 0
      %1070 = vmatprep.subr.bf16.mxu0 0
      %1071 = vmatpush1.bf16.msra.mxu0 0
      %1072 = vmatprep.mubr.bf16.mxu0 0
      %1073 = vmatmul.mubr.bf16.gmra.mrb[0].mxu0 %v1026
      %v1074 = vpop.f32.mrb[0].mxu0
      %v1075 = vadd.f32 0.0, %v1074
      %v1076 = vpop.f32.mrb[0].mxu0
      %v1077 = vadd.f32 0.0, %v1076
      %v1078 = vpop.f32.mrb[0].mxu0
      %v1079 = vpop.f32.mrb[0].mxu0
      %1080 = vdwg.mxu0
      %1081 = vmatprep.subr.bf16.mxu0 %v1038
      %1082 = vmatpush1.bf16.msra.mxu0 %v1035
      %1083 = vmatprep.subr.bf16.mxu0 0
      %1084 = vmatpush1.bf16.msra.mxu0 0
      %1085 = vmatprep.subr.bf16.mxu0 0
      %1086 = vmatpush1.bf16.msra.mxu0 0
      %1087 = vmatprep.subr.bf16.mxu0 0
      %1088 = vmatpush1.bf16.msra.mxu0 0
      %1089 = vmatprep.subr.bf16.mxu0 0
      %1090 = vmatpush1.bf16.msra.mxu0 0
      %1091 = vmatprep.subr.bf16.mxu0 0
      %1092 = vmatpush1.bf16.msra.mxu0 0
      %1093 = vmatprep.subr.bf16.mxu0 0
      %1094 = vmatpush1.bf16.msra.mxu0 0
      %1095 = vmatprep.subr.bf16.mxu0 0
      %1096 = vmatpush1.bf16.msra.mxu0 0
      %1097 = vmatprep.subr.bf16.mxu0 0
      %1098 = vmatpush1.bf16.msra.mxu0 0
      %1099 = vmatprep.subr.bf16.mxu0 0
      %1100 = vmatpush1.bf16.msra.mxu0 0
      %1101 = vmatprep.subr.bf16.mxu0 0
      %1102 = vmatpush1.bf16.msra.mxu0 0
      %1103 = vmatprep.subr.bf16.mxu0 0
      %1104 = vmatpush1.bf16.msra.mxu0 0
      %1105 = vmatprep.subr.bf16.mxu0 0
      %1106 = vmatpush1.bf16.msra.mxu0 0
      %1107 = vmatprep.subr.bf16.mxu0 0
      %1108 = vmatpush1.bf16.msra.mxu0 0
      %1109 = vmatprep.subr.bf16.mxu0 0
      %1110 = vmatpush1.bf16.msra.mxu0 0
      %1111 = vmatprep.subr.bf16.mxu0 0
      %1112 = vmatpush1.bf16.msra.mxu0 0
      %1113 = vmatprep.mubr.bf16.mxu0 0
      %1114 = vmatmul.mubr.bf16.gmra.mrb[0].mxu0 %v1026
      %v1115 = vpop.f32.mrb[0].mxu0
      %v1116 = vadd.f32 0.0, %v1115
      %v1117 = vpop.f32.mrb[0].mxu0
      %v1118 = vadd.f32 0.0, %v1117
      %v1119 = vpop.f32.mrb[0].mxu0
      %v1120 = vpop.f32.mrb[0].mxu0
      %1121 = vdwg.mxu0
      %v1122 = vadd.f32 %v1004, %v1075
      %v1123 = vadd.f32 %v1005, %v1077
      %v1124 = vadd.f32 %v1006, %v1116
      %v1125 = vadd.f32 %v1007, %v1118
      %s1126 = scalar_lea.vmem %s1, 28
      %v1127 = vld [vmem:[%s1126] sm:$0xf]
      %1128 = vrot.lane.b32.xlu0 %v298, 107
      %v1129 = vpop.permute.xlu0 %1128
      %1130 = vrot.lane.b32.xlu0 %v306, 107
      %v1131 = vpop.permute.xlu0 %1130
      %1132 = vrot.lane.b32.xlu0 %v305, 107
      %v1133 = vpop.permute.xlu0 %1132
      %1134 = vrot.lane.b32.xlu0 %v307, 107
      %v1135 = vpop.permute.xlu0 %1134
      %1136 = vrot.lane.b32.xlu0 %v319, 107
      %v1137 = vpop.permute.xlu0 %1136
      %vm1138 = vcmask 875520
      %v1139 = vsel %vm1138, %v1129, %v1131
      %v1140 = vsel %vm1138, %v1131, %v1133
      %v1141 = vsel %vm1138, %v1133, %v1135
      %v1142 = vsel %vm1138, %v1135, %v1137
      %v1144 = vsel %vm340, %v1127, 0
      %v1147 = vsel %vm344, %v1139, 0
      %v1150 = vsel %vm344, %v1140, 0
      %v1153 = vsel %vm344, %v1141, 0
      %v1156 = vsel %vm344, %v1142, 0
      %1158 = vmatprep.subr.bf16.mxu0 %v1150
      %1159 = vmatpush1.bf16.msra.mxu0 %v1147
      %1160 = vmatprep.subr.bf16.mxu0 0
      %1161 = vmatpush1.bf16.msra.mxu0 0
      %1162 = vmatprep.subr.bf16.mxu0 0
      %1163 = vmatpush1.bf16.msra.mxu0 0
      %1164 = vmatprep.subr.bf16.mxu0 0
      %1165 = vmatpush1.bf16.msra.mxu0 0
      %1166 = vmatprep.subr.bf16.mxu0 0
      %1167 = vmatpush1.bf16.msra.mxu0 0
      %1168 = vmatprep.subr.bf16.mxu0 0
      %1169 = vmatpush1.bf16.msra.mxu0 0
      %1170 = vmatprep.subr.bf16.mxu0 0
      %1171 = vmatpush1.bf16.msra.mxu0 0
      %1172 = vmatprep.subr.bf16.mxu0 0
      %1173 = vmatpush1.bf16.msra.mxu0 0
      %1174 = vmatprep.subr.bf16.mxu0 0
      %1175 = vmatpush1.bf16.msra.mxu0 0
      %1176 = vmatprep.subr.bf16.mxu0 0
      %1177 = vmatpush1.bf16.msra.mxu0 0
      %1178 = vmatprep.subr.bf16.mxu0 0
      %1179 = vmatpush1.bf16.msra.mxu0 0
      %1180 = vmatprep.subr.bf16.mxu0 0
      %1181 = vmatpush1.bf16.msra.mxu0 0
      %1182 = vmatprep.subr.bf16.mxu0 0
      %1183 = vmatpush1.bf16.msra.mxu0 0
      %1184 = vmatprep.subr.bf16.mxu0 0
      %1185 = vmatpush1.bf16.msra.mxu0 0
      %1186 = vmatprep.subr.bf16.mxu0 0
      %1187 = vmatpush1.bf16.msra.mxu0 0
      %1188 = vmatprep.subr.bf16.mxu0 0
      %1189 = vmatpush1.bf16.msra.mxu0 0
      %1190 = vmatprep.mubr.bf16.mxu0 0
      %1191 = vmatmul.mubr.bf16.gmra.mrb[0].mxu0 %v1144
      %v1192 = vpop.f32.mrb[0].mxu0
      %v1193 = vadd.f32 0.0, %v1192
      %v1194 = vpop.f32.mrb[0].mxu0
      %v1195 = vadd.f32 0.0, %v1194
      %v1196 = vpop.f32.mrb[0].mxu0
      %v1197 = vpop.f32.mrb[0].mxu0
      %1198 = vdwg.mxu0
      %1199 = vmatprep.subr.bf16.mxu0 %v1156
      %1200 = vmatpush1.bf16.msra.mxu0 %v1153
      %1201 = vmatprep.subr.bf16.mxu0 0
      %1202 = vmatpush1.bf16.msra.mxu0 0
      %1203 = vmatprep.subr.bf16.mxu0 0
      %1204 = vmatpush1.bf16.msra.mxu0 0
      %1205 = vmatprep.subr.bf16.mxu0 0
      %1206 = vmatpush1.bf16.msra.mxu0 0
      %1207 = vmatprep.subr.bf16.mxu0 0
      %1208 = vmatpush1.bf16.msra.mxu0 0
      %1209 = vmatprep.subr.bf16.mxu0 0
      %1210 = vmatpush1.bf16.msra.mxu0 0
      %1211 = vmatprep.subr.bf16.mxu0 0
      %1212 = vmatpush1.bf16.msra.mxu0 0
      %1213 = vmatprep.subr.bf16.mxu0 0
      %1214 = vmatpush1.bf16.msra.mxu0 0
      %1215 = vmatprep.subr.bf16.mxu0 0
      %1216 = vmatpush1.bf16.msra.mxu0 0
      %1217 = vmatprep.subr.bf16.mxu0 0
      %1218 = vmatpush1.bf16.msra.mxu0 0
      %1219 = vmatprep.subr.bf16.mxu0 0
      %1220 = vmatpush1.bf16.msra.mxu0 0
      %1221 = vmatprep.subr.bf16.mxu0 0
      %1222 = vmatpush1.bf16.msra.mxu0 0
      %1223 = vmatprep.subr.bf16.mxu0 0
      %1224 = vmatpush1.bf16.msra.mxu0 0
      %1225 = vmatprep.subr.bf16.mxu0 0
      %1226 = vmatpush1.bf16.msra.mxu0 0
      %1227 = vmatprep.subr.bf16.mxu0 0
      %1228 = vmatpush1.bf16.msra.mxu0 0
      %1229 = vmatprep.subr.bf16.mxu0 0
      %1230 = vmatpush1.bf16.msra.mxu0 0
      %1231 = vmatprep.mubr.bf16.mxu0 0
      %1232 = vmatmul.mubr.bf16.gmra.mrb[0].mxu0 %v1144
      %v1233 = vpop.f32.mrb[0].mxu0
      %v1234 = vadd.f32 0.0, %v1233
      %v1235 = vpop.f32.mrb[0].mxu0
      %v1236 = vadd.f32 0.0, %v1235
      %v1237 = vpop.f32.mrb[0].mxu0
      %v1238 = vpop.f32.mrb[0].mxu0
      %1239 = vdwg.mxu0
      %v1240 = vadd.f32 %v1122, %v1193
      %v1241 = vadd.f32 %v1123, %v1195
      %v1242 = vadd.f32 %v1124, %v1234
      %v1243 = vadd.f32 %v1125, %v1236
      %s1244 = scalar_lea.vmem %s1, 32
      %v1245 = vld [vmem:[%s1244] sm:$0xf]
      %1246 = vrot.lane.b32.xlu0 %v298, 106
      %v1247 = vpop.permute.xlu0 %1246
      %1248 = vrot.lane.b32.xlu0 %v306, 106
      %v1249 = vpop.permute.xlu0 %1248
      %1250 = vrot.lane.b32.xlu0 %v305, 106
      %v1251 = vpop.permute.xlu0 %1250
      %1252 = vrot.lane.b32.xlu0 %v307, 106
      %v1253 = vpop.permute.xlu0 %1252
      %1254 = vrot.lane.b32.xlu0 %v319, 106
      %v1255 = vpop.permute.xlu0 %1254
      %vm1256 = vcmask 867328
      %v1257 = vsel %vm1256, %v1247, %v1249
      %v1258 = vsel %vm1256, %v1249, %v1251
      %v1259 = vsel %vm1256, %v1251, %v1253
      %v1260 = vsel %vm1256, %v1253, %v1255
      %v1262 = vsel %vm340, %v1245, 0
      %v1265 = vsel %vm344, %v1257, 0
      %v1268 = vsel %vm344, %v1258, 0
      %v1271 = vsel %vm344, %v1259, 0
      %v1274 = vsel %vm344, %v1260, 0
      %1276 = vmatprep.subr.bf16.mxu0 %v1268
      %1277 = vmatpush1.bf16.msra.mxu0 %v1265
      %1278 = vmatprep.subr.bf16.mxu0 0
      %1279 = vmatpush1.bf16.msra.mxu0 0
      %1280 = vmatprep.subr.bf16.mxu0 0
      %1281 = vmatpush1.bf16.msra.mxu0 0
      %1282 = vmatprep.subr.bf16.mxu0 0
      %1283 = vmatpush1.bf16.msra.mxu0 0
      %1284 = vmatprep.subr.bf16.mxu0 0
      %1285 = vmatpush1.bf16.msra.mxu0 0
      %1286 = vmatprep.subr.bf16.mxu0 0
      %1287 = vmatpush1.bf16.msra.mxu0 0
      %1288 = vmatprep.subr.bf16.mxu0 0
      %1289 = vmatpush1.bf16.msra.mxu0 0
      %1290 = vmatprep.subr.bf16.mxu0 0
      %1291 = vmatpush1.bf16.msra.mxu0 0
      %1292 = vmatprep.subr.bf16.mxu0 0
      %1293 = vmatpush1.bf16.msra.mxu0 0
      %1294 = vmatprep.subr.bf16.mxu0 0
      %1295 = vmatpush1.bf16.msra.mxu0 0
      %1296 = vmatprep.subr.bf16.mxu0 0
      %1297 = vmatpush1.bf16.msra.mxu0 0
      %1298 = vmatprep.subr.bf16.mxu0 0
      %1299 = vmatpush1.bf16.msra.mxu0 0
      %1300 = vmatprep.subr.bf16.mxu0 0
      %1301 = vmatpush1.bf16.msra.mxu0 0
      %1302 = vmatprep.subr.bf16.mxu0 0
      %1303 = vmatpush1.bf16.msra.mxu0 0
      %1304 = vmatprep.subr.bf16.mxu0 0
      %1305 = vmatpush1.bf16.msra.mxu0 0
      %1306 = vmatprep.subr.bf16.mxu0 0
      %1307 = vmatpush1.bf16.msra.mxu0 0
      %1308 = vmatprep.mubr.bf16.mxu0 0
      %1309 = vmatmul.mubr.bf16.gmra.mrb[0].mxu0 %v1262
      %v1310 = vpop.f32.mrb[0].mxu0
      %v1311 = vadd.f32 0.0, %v1310
      %v1312 = vpop.f32.mrb[0].mxu0
      %v1313 = vadd.f32 0.0, %v1312
      %v1314 = vpop.f32.mrb[0].mxu0
      %v1315 = vpop.f32.mrb[0].mxu0
      %1316 = vdwg.mxu0
      %1317 = vmatprep.subr.bf16.mxu0 %v1274
      %1318 = vmatpush1.bf16.msra.mxu0 %v1271
      %1319 = vmatprep.subr.bf16.mxu0 0
      %1320 = vmatpush1.bf16.msra.mxu0 0
      %1321 = vmatprep.subr.bf16.mxu0 0
      %1322 = vmatpush1.bf16.msra.mxu0 0
      %1323 = vmatprep.subr.bf16.mxu0 0
      %1324 = vmatpush1.bf16.msra.mxu0 0
      %1325 = vmatprep.subr.bf16.mxu0 0
      %1326 = vmatpush1.bf16.msra.mxu0 0
      %1327 = vmatprep.subr.bf16.mxu0 0
      %1328 = vmatpush1.bf16.msra.mxu0 0
      %1329 = vmatprep.subr.bf16.mxu0 0
      %1330 = vmatpush1.bf16.msra.mxu0 0
      %1331 = vmatprep.subr.bf16.mxu0 0
      %1332 = vmatpush1.bf16.msra.mxu0 0
      %1333 = vmatprep.subr.bf16.mxu0 0
      %1334 = vmatpush1.bf16.msra.mxu0 0
      %1335 = vmatprep.subr.bf16.mxu0 0
      %1336 = vmatpush1.bf16.msra.mxu0 0
      %1337 = vmatprep.subr.bf16.mxu0 0
      %1338 = vmatpush1.bf16.msra.mxu0 0
      %1339 = vmatprep.subr.bf16.mxu0 0
      %1340 = vmatpush1.bf16.msra.mxu0 0
      %1341 = vmatprep.subr.bf16.mxu0 0
      %1342 = vmatpush1.bf16.msra.mxu0 0
      %1343 = vmatprep.subr.bf16.mxu0 0
      %1344 = vmatpush1.bf16.msra.mxu0 0
      %1345 = vmatprep.subr.bf16.mxu0 0
      %1346 = vmatpush1.bf16.msra.mxu0 0
      %1347 = vmatprep.subr.bf16.mxu0 0
      %1348 = vmatpush1.bf16.msra.mxu0 0
      %1349 = vmatprep.mubr.bf16.mxu0 0
      %1350 = vmatmul.mubr.bf16.gmra.mrb[0].mxu0 %v1262
      %v1351 = vpop.f32.mrb[0].mxu0
      %v1352 = vadd.f32 0.0, %v1351
      %v1353 = vpop.f32.mrb[0].mxu0
      %v1354 = vadd.f32 0.0, %v1353
      %v1355 = vpop.f32.mrb[0].mxu0
      %v1356 = vpop.f32.mrb[0].mxu0
      %1357 = vdwg.mxu0
      %v1358 = vadd.f32 %v1240, %v1311
      %v1359 = vadd.f32 %v1241, %v1313
      %v1360 = vadd.f32 %v1242, %v1352
      %v1361 = vadd.f32 %v1243, %v1354
      %s1362 = scalar_lea.vmem %s1, 36
      %v1363 = vld [vmem:[%s1362] sm:$0xf]
      %1364 = vrot.lane.b32.xlu0 %v298, 28
      %v1365 = vpop.permute.xlu0 %1364
      %1366 = vrot.lane.b32.xlu0 %v306, 28
      %v1367 = vpop.permute.xlu0 %1366
      %1368 = vrot.lane.b32.xlu0 %v305, 28
      %v1369 = vpop.permute.xlu0 %1368
      %1370 = vrot.lane.b32.xlu0 %v307, 28
      %v1371 = vpop.permute.xlu0 %1370
      %1372 = vrot.lane.b32.xlu0 %v319, 28
      %v1373 = vpop.permute.xlu0 %1372
      %vm1374 = vcmask 228352
      %v1375 = vsel %vm1374, %v1365, %v1367
      %v1376 = vsel %vm1374, %v1367, %v1369
      %v1377 = vsel %vm1374, %v1369, %v1371
      %v1378 = vsel %vm1374, %v1371, %v1373
      %v1380 = vsel %vm340, %v1363, 0
      %v1383 = vsel %vm344, %v1375, 0
      %v1386 = vsel %vm344, %v1376, 0
      %v1389 = vsel %vm344, %v1377, 0
      %v1392 = vsel %vm344, %v1378, 0
      %1394 = vmatprep.subr.bf16.mxu0 %v1386
      %1395 = vmatpush1.bf16.msra.mxu0 %v1383
      %1396 = vmatprep.subr.bf16.mxu0 0
      %1397 = vmatpush1.bf16.msra.mxu0 0
      %1398 = vmatprep.subr.bf16.mxu0 0
      %1399 = vmatpush1.bf16.msra.mxu0 0
      %1400 = vmatprep.subr.bf16.mxu0 0
      %1401 = vmatpush1.bf16.msra.mxu0 0
      %1402 = vmatprep.subr.bf16.mxu0 0
      %1403 = vmatpush1.bf16.msra.mxu0 0
      %1404 = vmatprep.subr.bf16.mxu0 0
      %1405 = vmatpush1.bf16.msra.mxu0 0
      %1406 = vmatprep.subr.bf16.mxu0 0
      %1407 = vmatpush1.bf16.msra.mxu0 0
      %1408 = vmatprep.subr.bf16.mxu0 0
      %1409 = vmatpush1.bf16.msra.mxu0 0
      %1410 = vmatprep.subr.bf16.mxu0 0
      %1411 = vmatpush1.bf16.msra.mxu0 0
      %1412 = vmatprep.subr.bf16.mxu0 0
      %1413 = vmatpush1.bf16.msra.mxu0 0
      %1414 = vmatprep.subr.bf16.mxu0 0
      %1415 = vmatpush1.bf16.msra.mxu0 0
      %1416 = vmatprep.subr.bf16.mxu0 0
      %1417 = vmatpush1.bf16.msra.mxu0 0
      %1418 = vmatprep.subr.bf16.mxu0 0
      %1419 = vmatpush1.bf16.msra.mxu0 0
      %1420 = vmatprep.subr.bf16.mxu0 0
      %1421 = vmatpush1.bf16.msra.mxu0 0
      %1422 = vmatprep.subr.bf16.mxu0 0
      %1423 = vmatpush1.bf16.msra.mxu0 0
      %1424 = vmatprep.subr.bf16.mxu0 0
      %1425 = vmatpush1.bf16.msra.mxu0 0
      %1426 = vmatprep.mubr.bf16.mxu0 0
      %1427 = vmatmul.mubr.bf16.gmra.mrb[0].mxu0 %v1380
      %v1428 = vpop.f32.mrb[0].mxu0
      %v1429 = vadd.f32 0.0, %v1428
      %v1430 = vpop.f32.mrb[0].mxu0
      %v1431 = vadd.f32 0.0, %v1430
      %v1432 = vpop.f32.mrb[0].mxu0
      %v1433 = vpop.f32.mrb[0].mxu0
      %1434 = vdwg.mxu0
      %1435 = vmatprep.subr.bf16.mxu0 %v1392
      %1436 = vmatpush1.bf16.msra.mxu0 %v1389
      %1437 = vmatprep.subr.bf16.mxu0 0
      %1438 = vmatpush1.bf16.msra.mxu0 0
      %1439 = vmatprep.subr.bf16.mxu0 0
      %1440 = vmatpush1.bf16.msra.mxu0 0
      %1441 = vmatprep.subr.bf16.mxu0 0
      %1442 = vmatpush1.bf16.msra.mxu0 0
      %1443 = vmatprep.subr.bf16.mxu0 0
      %1444 = vmatpush1.bf16.msra.mxu0 0
      %1445 = vmatprep.subr.bf16.mxu0 0
      %1446 = vmatpush1.bf16.msra.mxu0 0
      %1447 = vmatprep.subr.bf16.mxu0 0
      %1448 = vmatpush1.bf16.msra.mxu0 0
      %1449 = vmatprep.subr.bf16.mxu0 0
      %1450 = vmatpush1.bf16.msra.mxu0 0
      %1451 = vmatprep.subr.bf16.mxu0 0
      %1452 = vmatpush1.bf16.msra.mxu0 0
      %1453 = vmatprep.subr.bf16.mxu0 0
      %1454 = vmatpush1.bf16.msra.mxu0 0
      %1455 = vmatprep.subr.bf16.mxu0 0
      %1456 = vmatpush1.bf16.msra.mxu0 0
      %1457 = vmatprep.subr.bf16.mxu0 0
      %1458 = vmatpush1.bf16.msra.mxu0 0
      %1459 = vmatprep.subr.bf16.mxu0 0
      %1460 = vmatpush1.bf16.msra.mxu0 0
      %1461 = vmatprep.subr.bf16.mxu0 0
      %1462 = vmatpush1.bf16.msra.mxu0 0
      %1463 = vmatprep.subr.bf16.mxu0 0
      %1464 = vmatpush1.bf16.msra.mxu0 0
      %1465 = vmatprep.subr.bf16.mxu0 0
      %1466 = vmatpush1.bf16.msra.mxu0 0
      %1467 = vmatprep.mubr.bf16.mxu0 0
      %1468 = vmatmul.mubr.bf16.gmra.mrb[0].mxu0 %v1380
      %v1469 = vpop.f32.mrb[0].mxu0
      %v1470 = vadd.f32 0.0, %v1469
      %v1471 = vpop.f32.mrb[0].mxu0
      %v1472 = vadd.f32 0.0, %v1471
      %v1473 = vpop.f32.mrb[0].mxu0
      %v1474 = vpop.f32.mrb[0].mxu0
      %1475 = vdwg.mxu0
      %v1476 = vadd.f32 %v1358, %v1429
      %v1477 = vadd.f32 %v1359, %v1431
      %v1478 = vadd.f32 %v1360, %v1470
      %v1479 = vadd.f32 %v1361, %v1472
      %s1480 = scalar_lea.vmem %s1, 40
      %v1481 = vld [vmem:[%s1480] sm:$0xf]
      %1482 = vrot.lane.b32.xlu0 %v298, 27
      %v1483 = vpop.permute.xlu0 %1482
      %1484 = vrot.lane.b32.xlu0 %v306, 27
      %v1485 = vpop.permute.xlu0 %1484
      %1486 = vrot.lane.b32.xlu0 %v305, 27
      %v1487 = vpop.permute.xlu0 %1486
      %1488 = vrot.lane.b32.xlu0 %v307, 27
      %v1489 = vpop.permute.xlu0 %1488
      %1490 = vrot.lane.b32.xlu0 %v319, 27
      %v1491 = vpop.permute.xlu0 %1490
      %vm1492 = vcmask 220160
      %v1493 = vsel %vm1492, %v1483, %v1485
      %v1494 = vsel %vm1492, %v1485, %v1487
      %v1495 = vsel %vm1492, %v1487, %v1489
      %v1496 = vsel %vm1492, %v1489, %v1491
      %v1498 = vsel %vm340, %v1481, 0
      %v1501 = vsel %vm344, %v1493, 0
      %v1504 = vsel %vm344, %v1494, 0
      %v1507 = vsel %vm344, %v1495, 0
      %v1510 = vsel %vm344, %v1496, 0
      %1512 = vmatprep.subr.bf16.mxu0 %v1504
      %1513 = vmatpush1.bf16.msra.mxu0 %v1501
      %1514 = vmatprep.subr.bf16.mxu0 0
      %1515 = vmatpush1.bf16.msra.mxu0 0
      %1516 = vmatprep.subr.bf16.mxu0 0
      %1517 = vmatpush1.bf16.msra.mxu0 0
      %1518 = vmatprep.subr.bf16.mxu0 0
      %1519 = vmatpush1.bf16.msra.mxu0 0
      %1520 = vmatprep.subr.bf16.mxu0 0
      %1521 = vmatpush1.bf16.msra.mxu0 0
      %1522 = vmatprep.subr.bf16.mxu0 0
      %1523 = vmatpush1.bf16.msra.mxu0 0
      %1524 = vmatprep.subr.bf16.mxu0 0
      %1525 = vmatpush1.bf16.msra.mxu0 0
      %1526 = vmatprep.subr.bf16.mxu0 0
      %1527 = vmatpush1.bf16.msra.mxu0 0
      %1528 = vmatprep.subr.bf16.mxu0 0
      %1529 = vmatpush1.bf16.msra.mxu0 0
      %1530 = vmatprep.subr.bf16.mxu0 0
      %1531 = vmatpush1.bf16.msra.mxu0 0
      %1532 = vmatprep.subr.bf16.mxu0 0
      %1533 = vmatpush1.bf16.msra.mxu0 0
      %1534 = vmatprep.subr.bf16.mxu0 0
      %1535 = vmatpush1.bf16.msra.mxu0 0
      %1536 = vmatprep.subr.bf16.mxu0 0
      %1537 = vmatpush1.bf16.msra.mxu0 0
      %1538 = vmatprep.subr.bf16.mxu0 0
      %1539 = vmatpush1.bf16.msra.mxu0 0
      %1540 = vmatprep.subr.bf16.mxu0 0
      %1541 = vmatpush1.bf16.msra.mxu0 0
      %1542 = vmatprep.subr.bf16.mxu0 0
      %1543 = vmatpush1.bf16.msra.mxu0 0
      %1544 = vmatprep.mubr.bf16.mxu0 0
      %1545 = vmatmul.mubr.bf16.gmra.mrb[0].mxu0 %v1498
      %v1546 = vpop.f32.mrb[0].mxu0
      %v1547 = vadd.f32 0.0, %v1546
      %v1548 = vpop.f32.mrb[0].mxu0
      %v1549 = vadd.f32 0.0, %v1548
      %v1550 = vpop.f32.mrb[0].mxu0
      %v1551 = vpop.f32.mrb[0].mxu0
      %1552 = vdwg.mxu0
      %1553 = vmatprep.subr.bf16.mxu0 %v1510
      %1554 = vmatpush1.bf16.msra.mxu0 %v1507
      %1555 = vmatprep.subr.bf16.mxu0 0
      %1556 = vmatpush1.bf16.msra.mxu0 0
      %1557 = vmatprep.subr.bf16.mxu0 0
      %1558 = vmatpush1.bf16.msra.mxu0 0
      %1559 = vmatprep.subr.bf16.mxu0 0
      %1560 = vmatpush1.bf16.msra.mxu0 0
      %1561 = vmatprep.subr.bf16.mxu0 0
      %1562 = vmatpush1.bf16.msra.mxu0 0
      %1563 = vmatprep.subr.bf16.mxu0 0
      %1564 = vmatpush1.bf16.msra.mxu0 0
      %1565 = vmatprep.subr.bf16.mxu0 0
      %1566 = vmatpush1.bf16.msra.mxu0 0
      %1567 = vmatprep.subr.bf16.mxu0 0
      %1568 = vmatpush1.bf16.msra.mxu0 0
      %1569 = vmatprep.subr.bf16.mxu0 0
      %1570 = vmatpush1.bf16.msra.mxu0 0
      %1571 = vmatprep.subr.bf16.mxu0 0
      %1572 = vmatpush1.bf16.msra.mxu0 0
      %1573 = vmatprep.subr.bf16.mxu0 0
      %1574 = vmatpush1.bf16.msra.mxu0 0
      %1575 = vmatprep.subr.bf16.mxu0 0
      %1576 = vmatpush1.bf16.msra.mxu0 0
      %1577 = vmatprep.subr.bf16.mxu0 0
      %1578 = vmatpush1.bf16.msra.mxu0 0
      %1579 = vmatprep.subr.bf16.mxu0 0
      %1580 = vmatpush1.bf16.msra.mxu0 0
      %1581 = vmatprep.subr.bf16.mxu0 0
      %1582 = vmatpush1.bf16.msra.mxu0 0
      %1583 = vmatprep.subr.bf16.mxu0 0
      %1584 = vmatpush1.bf16.msra.mxu0 0
      %1585 = vmatprep.mubr.bf16.mxu0 0
      %1586 = vmatmul.mubr.bf16.gmra.mrb[0].mxu0 %v1498
      %v1587 = vpop.f32.mrb[0].mxu0
      %v1588 = vadd.f32 0.0, %v1587
      %v1589 = vpop.f32.mrb[0].mxu0
      %v1590 = vadd.f32 0.0, %v1589
      %v1591 = vpop.f32.mrb[0].mxu0
      %v1592 = vpop.f32.mrb[0].mxu0
      %1593 = vdwg.mxu0
      %v1594 = vadd.f32 %v1476, %v1547
      %v1595 = vadd.f32 %v1477, %v1549
      %v1596 = vadd.f32 %v1478, %v1588
      %v1597 = vadd.f32 %v1479, %v1590
      %s1598 = scalar_lea.vmem %s1, 44
      %v1599 = vld [vmem:[%s1598] sm:$0xf]
      %1600 = vrot.lane.b32.xlu0 %v298, 26
      %v1601 = vpop.permute.xlu0 %1600
      %1602 = vrot.lane.b32.xlu0 %v306, 26
      %v1603 = vpop.permute.xlu0 %1602
      %1604 = vrot.lane.b32.xlu0 %v305, 26
      %v1605 = vpop.permute.xlu0 %1604
      %1606 = vrot.lane.b32.xlu0 %v307, 26
      %v1607 = vpop.permute.xlu0 %1606
      %1608 = vrot.lane.b32.xlu0 %v319, 26
      %v1609 = vpop.permute.xlu0 %1608
      %vm1610 = vcmask 211968
      %v1611 = vsel %vm1610, %v1601, %v1603
      %v1612 = vsel %vm1610, %v1603, %v1605
      %v1613 = vsel %vm1610, %v1605, %v1607
      %v1614 = vsel %vm1610, %v1607, %v1609
      %v1616 = vsel %vm340, %v1599, 0
      %v1619 = vsel %vm344, %v1611, 0
      %v1622 = vsel %vm344, %v1612, 0
      %v1625 = vsel %vm344, %v1613, 0
      %v1628 = vsel %vm344, %v1614, 0
      %1630 = vmatprep.subr.bf16.mxu0 %v1622
      %1631 = vmatpush1.bf16.msra.mxu0 %v1619
      %1632 = vmatprep.subr.bf16.mxu0 0
      %1633 = vmatpush1.bf16.msra.mxu0 0
      %1634 = vmatprep.subr.bf16.mxu0 0
      %1635 = vmatpush1.bf16.msra.mxu0 0
      %1636 = vmatprep.subr.bf16.mxu0 0
      %1637 = vmatpush1.bf16.msra.mxu0 0
      %1638 = vmatprep.subr.bf16.mxu0 0
      %1639 = vmatpush1.bf16.msra.mxu0 0
      %1640 = vmatprep.subr.bf16.mxu0 0
      %1641 = vmatpush1.bf16.msra.mxu0 0
      %1642 = vmatprep.subr.bf16.mxu0 0
      %1643 = vmatpush1.bf16.msra.mxu0 0
      %1644 = vmatprep.subr.bf16.mxu0 0
      %1645 = vmatpush1.bf16.msra.mxu0 0
      %1646 = vmatprep.subr.bf16.mxu0 0
      %1647 = vmatpush1.bf16.msra.mxu0 0
      %1648 = vmatprep.subr.bf16.mxu0 0
      %1649 = vmatpush1.bf16.msra.mxu0 0
      %1650 = vmatprep.subr.bf16.mxu0 0
      %1651 = vmatpush1.bf16.msra.mxu0 0
      %1652 = vmatprep.subr.bf16.mxu0 0
      %1653 = vmatpush1.bf16.msra.mxu0 0
      %1654 = vmatprep.subr.bf16.mxu0 0
      %1655 = vmatpush1.bf16.msra.mxu0 0
      %1656 = vmatprep.subr.bf16.mxu0 0
      %1657 = vmatpush1.bf16.msra.mxu0 0
      %1658 = vmatprep.subr.bf16.mxu0 0
      %1659 = vmatpush1.bf16.msra.mxu0 0
      %1660 = vmatprep.subr.bf16.mxu0 0
      %1661 = vmatpush1.bf16.msra.mxu0 0
      %1662 = vmatprep.mubr.bf16.mxu0 0
      %1663 = vmatmul.mubr.bf16.gmra.mrb[0].mxu0 %v1616
      %v1664 = vpop.f32.mrb[0].mxu0
      %v1665 = vadd.f32 0.0, %v1664
      %v1666 = vpop.f32.mrb[0].mxu0
      %v1667 = vadd.f32 0.0, %v1666
      %v1668 = vpop.f32.mrb[0].mxu0
      %v1669 = vpop.f32.mrb[0].mxu0
      %1670 = vdwg.mxu0
      %1671 = vmatprep.subr.bf16.mxu0 %v1628
      %1672 = vmatpush1.bf16.msra.mxu0 %v1625
      %1673 = vmatprep.subr.bf16.mxu0 0
      %1674 = vmatpush1.bf16.msra.mxu0 0
      %1675 = vmatprep.subr.bf16.mxu0 0
      %1676 = vmatpush1.bf16.msra.mxu0 0
      %1677 = vmatprep.subr.bf16.mxu0 0
      %1678 = vmatpush1.bf16.msra.mxu0 0
      %1679 = vmatprep.subr.bf16.mxu0 0
      %1680 = vmatpush1.bf16.msra.mxu0 0
      %1681 = vmatprep.subr.bf16.mxu0 0
      %1682 = vmatpush1.bf16.msra.mxu0 0
      %1683 = vmatprep.subr.bf16.mxu0 0
      %1684 = vmatpush1.bf16.msra.mxu0 0
      %1685 = vmatprep.subr.bf16.mxu0 0
      %1686 = vmatpush1.bf16.msra.mxu0 0
      %1687 = vmatprep.subr.bf16.mxu0 0
      %1688 = vmatpush1.bf16.msra.mxu0 0
      %1689 = vmatprep.subr.bf16.mxu0 0
      %1690 = vmatpush1.bf16.msra.mxu0 0
      %1691 = vmatprep.subr.bf16.mxu0 0
      %1692 = vmatpush1.bf16.msra.mxu0 0
      %1693 = vmatprep.subr.bf16.mxu0 0
      %1694 = vmatpush1.bf16.msra.mxu0 0
      %1695 = vmatprep.subr.bf16.mxu0 0
      %1696 = vmatpush1.bf16.msra.mxu0 0
      %1697 = vmatprep.subr.bf16.mxu0 0
      %1698 = vmatpush1.bf16.msra.mxu0 0
      %1699 = vmatprep.subr.bf16.mxu0 0
      %1700 = vmatpush1.bf16.msra.mxu0 0
      %1701 = vmatprep.subr.bf16.mxu0 0
      %1702 = vmatpush1.bf16.msra.mxu0 0
      %1703 = vmatprep.mubr.bf16.mxu0 0
      %1704 = vmatmul.mubr.bf16.gmra.mrb[0].mxu0 %v1616
      %v1705 = vpop.f32.mrb[0].mxu0
      %v1706 = vadd.f32 0.0, %v1705
      %v1707 = vpop.f32.mrb[0].mxu0
      %v1708 = vadd.f32 0.0, %v1707
      %v1709 = vpop.f32.mrb[0].mxu0
      %v1710 = vpop.f32.mrb[0].mxu0
      %1711 = vdwg.mxu0
      %v1712 = vadd.f32 %v1594, %v1665
      %v1713 = vadd.f32 %v1595, %v1667
      %v1714 = vadd.f32 %v1596, %v1706
      %v1715 = vadd.f32 %v1597, %v1708
      %s1716 = scalar_lea.vmem %s1, 48
      %v1717 = vld [vmem:[%s1716] sm:$0xf]
      %1718 = vrot.lane.b32.xlu0 %v298, 18
      %v1719 = vpop.permute.xlu0 %1718
      %1720 = vrot.lane.b32.xlu0 %v306, 18
      %v1721 = vpop.permute.xlu0 %1720
      %1722 = vrot.lane.b32.xlu0 %v305, 18
      %v1723 = vpop.permute.xlu0 %1722
      %1724 = vrot.lane.b32.xlu0 %v307, 18
      %v1725 = vpop.permute.xlu0 %1724
      %1726 = vrot.lane.b32.xlu0 %v319, 18
      %v1727 = vpop.permute.xlu0 %1726
      %vm1728 = vcmask 146432
      %v1729 = vsel %vm1728, %v1719, %v1721
      %v1730 = vsel %vm1728, %v1721, %v1723
      %v1731 = vsel %vm1728, %v1723, %v1725
      %v1732 = vsel %vm1728, %v1725, %v1727
      %v1734 = vsel %vm340, %v1717, 0
      %v1737 = vsel %vm344, %v1729, 0
      %v1740 = vsel %vm344, %v1730, 0
      %v1743 = vsel %vm344, %v1731, 0
      %v1746 = vsel %vm344, %v1732, 0
      %1748 = vmatprep.subr.bf16.mxu0 %v1740
      %1749 = vmatpush1.bf16.msra.mxu0 %v1737
      %1750 = vmatprep.subr.bf16.mxu0 0
      %1751 = vmatpush1.bf16.msra.mxu0 0
      %1752 = vmatprep.subr.bf16.mxu0 0
      %1753 = vmatpush1.bf16.msra.mxu0 0
      %1754 = vmatprep.subr.bf16.mxu0 0
      %1755 = vmatpush1.bf16.msra.mxu0 0
      %1756 = vmatprep.subr.bf16.mxu0 0
      %1757 = vmatpush1.bf16.msra.mxu0 0
      %1758 = vmatprep.subr.bf16.mxu0 0
      %1759 = vmatpush1.bf16.msra.mxu0 0
      %1760 = vmatprep.subr.bf16.mxu0 0
      %1761 = vmatpush1.bf16.msra.mxu0 0
      %1762 = vmatprep.subr.bf16.mxu0 0
      %1763 = vmatpush1.bf16.msra.mxu0 0
      %1764 = vmatprep.subr.bf16.mxu0 0
      %1765 = vmatpush1.bf16.msra.mxu0 0
      %1766 = vmatprep.subr.bf16.mxu0 0
      %1767 = vmatpush1.bf16.msra.mxu0 0
      %1768 = vmatprep.subr.bf16.mxu0 0
      %1769 = vmatpush1.bf16.msra.mxu0 0
      %1770 = vmatprep.subr.bf16.mxu0 0
      %1771 = vmatpush1.bf16.msra.mxu0 0
      %1772 = vmatprep.subr.bf16.mxu0 0
      %1773 = vmatpush1.bf16.msra.mxu0 0
      %1774 = vmatprep.subr.bf16.mxu0 0
      %1775 = vmatpush1.bf16.msra.mxu0 0
      %1776 = vmatprep.subr.bf16.mxu0 0
      %1777 = vmatpush1.bf16.msra.mxu0 0
      %1778 = vmatprep.subr.bf16.mxu0 0
      %1779 = vmatpush1.bf16.msra.mxu0 0
      %1780 = vmatprep.mubr.bf16.mxu0 0
      %1781 = vmatmul.mubr.bf16.gmra.mrb[0].mxu0 %v1734
      %v1782 = vpop.f32.mrb[0].mxu0
      %v1783 = vadd.f32 0.0, %v1782
      %v1784 = vpop.f32.mrb[0].mxu0
      %v1785 = vadd.f32 0.0, %v1784
      %v1786 = vpop.f32.mrb[0].mxu0
      %v1787 = vpop.f32.mrb[0].mxu0
      %1788 = vdwg.mxu0
      %1789 = vmatprep.subr.bf16.mxu0 %v1746
      %1790 = vmatpush1.bf16.msra.mxu0 %v1743
      %1791 = vmatprep.subr.bf16.mxu0 0
      %1792 = vmatpush1.bf16.msra.mxu0 0
      %1793 = vmatprep.subr.bf16.mxu0 0
      %1794 = vmatpush1.bf16.msra.mxu0 0
      %1795 = vmatprep.subr.bf16.mxu0 0
      %1796 = vmatpush1.bf16.msra.mxu0 0
      %1797 = vmatprep.subr.bf16.mxu0 0
      %1798 = vmatpush1.bf16.msra.mxu0 0
      %1799 = vmatprep.subr.bf16.mxu0 0
      %1800 = vmatpush1.bf16.msra.mxu0 0
      %1801 = vmatprep.subr.bf16.mxu0 0
      %1802 = vmatpush1.bf16.msra.mxu0 0
      %1803 = vmatprep.subr.bf16.mxu0 0
      %1804 = vmatpush1.bf16.msra.mxu0 0
      %1805 = vmatprep.subr.bf16.mxu0 0
      %1806 = vmatpush1.bf16.msra.mxu0 0
      %1807 = vmatprep.subr.bf16.mxu0 0
      %1808 = vmatpush1.bf16.msra.mxu0 0
      %1809 = vmatprep.subr.bf16.mxu0 0
      %1810 = vmatpush1.bf16.msra.mxu0 0
      %1811 = vmatprep.subr.bf16.mxu0 0
      %1812 = vmatpush1.bf16.msra.mxu0 0
      %1813 = vmatprep.subr.bf16.mxu0 0
      %1814 = vmatpush1.bf16.msra.mxu0 0
      %1815 = vmatprep.subr.bf16.mxu0 0
      %1816 = vmatpush1.bf16.msra.mxu0 0
      %1817 = vmatprep.subr.bf16.mxu0 0
      %1818 = vmatpush1.bf16.msra.mxu0 0
      %1819 = vmatprep.subr.bf16.mxu0 0
      %1820 = vmatpush1.bf16.msra.mxu0 0
      %1821 = vmatprep.mubr.bf16.mxu0 0
      %1822 = vmatmul.mubr.bf16.gmra.mrb[0].mxu0 %v1734
      %v1823 = vpop.f32.mrb[0].mxu0
      %v1824 = vadd.f32 0.0, %v1823
      %v1825 = vpop.f32.mrb[0].mxu0
      %v1826 = vadd.f32 0.0, %v1825
      %v1827 = vpop.f32.mrb[0].mxu0
      %v1828 = vpop.f32.mrb[0].mxu0
      %1829 = vdwg.mxu0
      %v1830 = vadd.f32 %v1712, %v1783
      %v1831 = vadd.f32 %v1713, %v1785
      %v1832 = vadd.f32 %v1714, %v1824
      %v1833 = vadd.f32 %v1715, %v1826
      %s1834 = scalar_lea.vmem %s1, 52
      %v1835 = vld [vmem:[%s1834] sm:$0xf]
      %1836 = vrot.lane.b32.xlu0 %v298, 17
      %v1837 = vpop.permute.xlu0 %1836
      %1838 = vrot.lane.b32.xlu0 %v306, 17
      %v1839 = vpop.permute.xlu0 %1838
      %1840 = vrot.lane.b32.xlu0 %v305, 17
      %v1841 = vpop.permute.xlu0 %1840
      %1842 = vrot.lane.b32.xlu0 %v307, 17
      %v1843 = vpop.permute.xlu0 %1842
      %1844 = vrot.lane.b32.xlu0 %v319, 17
      %v1845 = vpop.permute.xlu0 %1844
      %vm1846 = vcmask 138240
      %v1847 = vsel %vm1846, %v1837, %v1839
      %v1848 = vsel %vm1846, %v1839, %v1841
      %v1849 = vsel %vm1846, %v1841, %v1843
      %v1850 = vsel %vm1846, %v1843, %v1845
      %v1852 = vsel %vm340, %v1835, 0
      %v1855 = vsel %vm344, %v1847, 0
      %v1858 = vsel %vm344, %v1848, 0
      %v1861 = vsel %vm344, %v1849, 0
      %v1864 = vsel %vm344, %v1850, 0
      %1866 = vmatprep.subr.bf16.mxu0 %v1858
      %1867 = vmatpush1.bf16.msra.mxu0 %v1855
      %1868 = vmatprep.subr.bf16.mxu0 0
      %1869 = vmatpush1.bf16.msra.mxu0 0
      %1870 = vmatprep.subr.bf16.mxu0 0
      %1871 = vmatpush1.bf16.msra.mxu0 0
      %1872 = vmatprep.subr.bf16.mxu0 0
      %1873 = vmatpush1.bf16.msra.mxu0 0
      %1874 = vmatprep.subr.bf16.mxu0 0
      %1875 = vmatpush1.bf16.msra.mxu0 0
      %1876 = vmatprep.subr.bf16.mxu0 0
      %1877 = vmatpush1.bf16.msra.mxu0 0
      %1878 = vmatprep.subr.bf16.mxu0 0
      %1879 = vmatpush1.bf16.msra.mxu0 0
      %1880 = vmatprep.subr.bf16.mxu0 0
      %1881 = vmatpush1.bf16.msra.mxu0 0
      %1882 = vmatprep.subr.bf16.mxu0 0
      %1883 = vmatpush1.bf16.msra.mxu0 0
      %1884 = vmatprep.subr.bf16.mxu0 0
      %1885 = vmatpush1.bf16.msra.mxu0 0
      %1886 = vmatprep.subr.bf16.mxu0 0
      %1887 = vmatpush1.bf16.msra.mxu0 0
      %1888 = vmatprep.subr.bf16.mxu0 0
      %1889 = vmatpush1.bf16.msra.mxu0 0
      %1890 = vmatprep.subr.bf16.mxu0 0
      %1891 = vmatpush1.bf16.msra.mxu0 0
      %1892 = vmatprep.subr.bf16.mxu0 0
      %1893 = vmatpush1.bf16.msra.mxu0 0
      %1894 = vmatprep.subr.bf16.mxu0 0
      %1895 = vmatpush1.bf16.msra.mxu0 0
      %1896 = vmatprep.subr.bf16.mxu0 0
      %1897 = vmatpush1.bf16.msra.mxu0 0
      %1898 = vmatprep.mubr.bf16.mxu0 0
      %1899 = vmatmul.mubr.bf16.gmra.mrb[0].mxu0 %v1852
      %v1900 = vpop.f32.mrb[0].mxu0
      %v1901 = vadd.f32 0.0, %v1900
      %v1902 = vpop.f32.mrb[0].mxu0
      %v1903 = vadd.f32 0.0, %v1902
      %v1904 = vpop.f32.mrb[0].mxu0
      %v1905 = vpop.f32.mrb[0].mxu0
      %1906 = vdwg.mxu0
      %1907 = vmatprep.subr.bf16.mxu0 %v1864
      %1908 = vmatpush1.bf16.msra.mxu0 %v1861
      %1909 = vmatprep.subr.bf16.mxu0 0
      %1910 = vmatpush1.bf16.msra.mxu0 0
      %1911 = vmatprep.subr.bf16.mxu0 0
      %1912 = vmatpush1.bf16.msra.mxu0 0
      %1913 = vmatprep.subr.bf16.mxu0 0
      %1914 = vmatpush1.bf16.msra.mxu0 0
      %1915 = vmatprep.subr.bf16.mxu0 0
      %1916 = vmatpush1.bf16.msra.mxu0 0
      %1917 = vmatprep.subr.bf16.mxu0 0
      %1918 = vmatpush1.bf16.msra.mxu0 0
      %1919 = vmatprep.subr.bf16.mxu0 0
      %1920 = vmatpush1.bf16.msra.mxu0 0
      %1921 = vmatprep.subr.bf16.mxu0 0
      %1922 = vmatpush1.bf16.msra.mxu0 0
      %1923 = vmatprep.subr.bf16.mxu0 0
      %1924 = vmatpush1.bf16.msra.mxu0 0
      %1925 = vmatprep.subr.bf16.mxu0 0
      %1926 = vmatpush1.bf16.msra.mxu0 0
      %1927 = vmatprep.subr.bf16.mxu0 0
      %1928 = vmatpush1.bf16.msra.mxu0 0
      %1929 = vmatprep.subr.bf16.mxu0 0
      %1930 = vmatpush1.bf16.msra.mxu0 0
      %1931 = vmatprep.subr.bf16.mxu0 0
      %1932 = vmatpush1.bf16.msra.mxu0 0
      %1933 = vmatprep.subr.bf16.mxu0 0
      %1934 = vmatpush1.bf16.msra.mxu0 0
      %1935 = vmatprep.subr.bf16.mxu0 0
      %1936 = vmatpush1.bf16.msra.mxu0 0
      %1937 = vmatprep.subr.bf16.mxu0 0
      %1938 = vmatpush1.bf16.msra.mxu0 0
      %1939 = vmatprep.mubr.bf16.mxu0 0
      %1940 = vmatmul.mubr.bf16.gmra.mrb[0].mxu0 %v1852
      %v1941 = vpop.f32.mrb[0].mxu0
      %v1942 = vadd.f32 0.0, %v1941
      %v1943 = vpop.f32.mrb[0].mxu0
      %v1944 = vadd.f32 0.0, %v1943
      %v1945 = vpop.f32.mrb[0].mxu0
      %v1946 = vpop.f32.mrb[0].mxu0
      %1947 = vdwg.mxu0
      %v1948 = vadd.f32 %v1830, %v1901
      %v1949 = vadd.f32 %v1831, %v1903
      %v1950 = vadd.f32 %v1832, %v1942
      %v1951 = vadd.f32 %v1833, %v1944
      %s1952 = scalar_lea.vmem %s1, 56
      %v1953 = vld [vmem:[%s1952] sm:$0xf]
      %1954 = vrot.lane.b32.xlu0 %v298, 16
      %v1955 = vpop.permute.xlu0 %1954
      %1956 = vrot.lane.b32.xlu0 %v306, 16
      %v1957 = vpop.permute.xlu0 %1956
      %1958 = vrot.lane.b32.xlu0 %v305, 16
      %v1959 = vpop.permute.xlu0 %1958
      %1960 = vrot.lane.b32.xlu0 %v307, 16
      %v1961 = vpop.permute.xlu0 %1960
      %1962 = vrot.lane.b32.xlu0 %v319, 16
      %v1963 = vpop.permute.xlu0 %1962
      %vm1964 = vcmask 130048
      %v1965 = vsel %vm1964, %v1955, %v1957
      %v1966 = vsel %vm1964, %v1957, %v1959
      %v1967 = vsel %vm1964, %v1959, %v1961
      %v1968 = vsel %vm1964, %v1961, %v1963
      %v1970 = vsel %vm340, %v1953, 0
      %v1973 = vsel %vm344, %v1965, 0
      %v1976 = vsel %vm344, %v1966, 0
      %v1979 = vsel %vm344, %v1967, 0
      %v1982 = vsel %vm344, %v1968, 0
      %1984 = vmatprep.subr.bf16.mxu0 %v1976
      %1985 = vmatpush1.bf16.msra.mxu0 %v1973
      %1986 = vmatprep.subr.bf16.mxu0 0
      %1987 = vmatpush1.bf16.msra.mxu0 0
      %1988 = vmatprep.subr.bf16.mxu0 0
      %1989 = vmatpush1.bf16.msra.mxu0 0
      %1990 = vmatprep.subr.bf16.mxu0 0
      %1991 = vmatpush1.bf16.msra.mxu0 0
      %1992 = vmatprep.subr.bf16.mxu0 0
      %1993 = vmatpush1.bf16.msra.mxu0 0
      %1994 = vmatprep.subr.bf16.mxu0 0
      %1995 = vmatpush1.bf16.msra.mxu0 0
      %1996 = vmatprep.subr.bf16.mxu0 0
      %1997 = vmatpush1.bf16.msra.mxu0 0
      %1998 = vmatprep.subr.bf16.mxu0 0
      %1999 = vmatpush1.bf16.msra.mxu0 0
      %2000 = vmatprep.subr.bf16.mxu0 0
      %2001 = vmatpush1.bf16.msra.mxu0 0
      %2002 = vmatprep.subr.bf16.mxu0 0
      %2003 = vmatpush1.bf16.msra.mxu0 0
      %2004 = vmatprep.subr.bf16.mxu0 0
      %2005 = vmatpush1.bf16.msra.mxu0 0
      %2006 = vmatprep.subr.bf16.mxu0 0
      %2007 = vmatpush1.bf16.msra.mxu0 0
      %2008 = vmatprep.subr.bf16.mxu0 0
      %2009 = vmatpush1.bf16.msra.mxu0 0
      %2010 = vmatprep.subr.bf16.mxu0 0
      %2011 = vmatpush1.bf16.msra.mxu0 0
      %2012 = vmatprep.subr.bf16.mxu0 0
      %2013 = vmatpush1.bf16.msra.mxu0 0
      %2014 = vmatprep.subr.bf16.mxu0 0
      %2015 = vmatpush1.bf16.msra.mxu0 0
      %2016 = vmatprep.mubr.bf16.mxu0 0
      %2017 = vmatmul.mubr.bf16.gmra.mrb[0].mxu0 %v1970
      %v2018 = vpop.f32.mrb[0].mxu0
      %v2019 = vadd.f32 0.0, %v2018
      %v2020 = vpop.f32.mrb[0].mxu0
      %v2021 = vadd.f32 0.0, %v2020
      %v2022 = vpop.f32.mrb[0].mxu0
      %v2023 = vpop.f32.mrb[0].mxu0
      %2024 = vdwg.mxu0
      %2025 = vmatprep.subr.bf16.mxu0 %v1982
      %2026 = vmatpush1.bf16.msra.mxu0 %v1979
      %2027 = vmatprep.subr.bf16.mxu0 0
      %2028 = vmatpush1.bf16.msra.mxu0 0
      %2029 = vmatprep.subr.bf16.mxu0 0
      %2030 = vmatpush1.bf16.msra.mxu0 0
      %2031 = vmatprep.subr.bf16.mxu0 0
      %2032 = vmatpush1.bf16.msra.mxu0 0
      %2033 = vmatprep.subr.bf16.mxu0 0
      %2034 = vmatpush1.bf16.msra.mxu0 0
      %2035 = vmatprep.subr.bf16.mxu0 0
      %2036 = vmatpush1.bf16.msra.mxu0 0
      %2037 = vmatprep.subr.bf16.mxu0 0
      %2038 = vmatpush1.bf16.msra.mxu0 0
      %2039 = vmatprep.subr.bf16.mxu0 0
      %2040 = vmatpush1.bf16.msra.mxu0 0
      %2041 = vmatprep.subr.bf16.mxu0 0
      %2042 = vmatpush1.bf16.msra.mxu0 0
      %2043 = vmatprep.subr.bf16.mxu0 0
      %2044 = vmatpush1.bf16.msra.mxu0 0
      %2045 = vmatprep.subr.bf16.mxu0 0
      %2046 = vmatpush1.bf16.msra.mxu0 0
      %2047 = vmatprep.subr.bf16.mxu0 0
      %2048 = vmatpush1.bf16.msra.mxu0 0
      %2049 = vmatprep.subr.bf16.mxu0 0
      %2050 = vmatpush1.bf16.msra.mxu0 0
      %2051 = vmatprep.subr.bf16.mxu0 0
      %2052 = vmatpush1.bf16.msra.mxu0 0
      %2053 = vmatprep.subr.bf16.mxu0 0
      %2054 = vmatpush1.bf16.msra.mxu0 0
      %2055 = vmatprep.subr.bf16.mxu0 0
      %2056 = vmatpush1.bf16.msra.mxu0 0
      %2057 = vmatprep.mubr.bf16.mxu0 0
      %2058 = vmatmul.mubr.bf16.gmra.mrb[0].mxu0 %v1970
      %v2059 = vpop.f32.mrb[0].mxu0
      %v2060 = vadd.f32 0.0, %v2059
      %v2061 = vpop.f32.mrb[0].mxu0
      %v2062 = vadd.f32 0.0, %v2061
      %v2063 = vpop.f32.mrb[0].mxu0
      %v2064 = vpop.f32.mrb[0].mxu0
      %2065 = vdwg.mxu0
      %v2066 = vadd.f32 %v1948, %v2019
      %v2067 = vadd.f32 %v1949, %v2021
      %v2068 = vadd.f32 %v1950, %v2060
      %v2069 = vadd.f32 %v1951, %v2062
      %s2070 = scalar_lea.vmem %s1, 60
      %v2071 = vld [vmem:[%s2070] sm:$0xf]
      %2072 = vrot.lane.b32.xlu0 %v298, 8
      %v2073 = vpop.permute.xlu0 %2072
      %2074 = vrot.lane.b32.xlu0 %v306, 8
      %v2075 = vpop.permute.xlu0 %2074
      %2076 = vrot.lane.b32.xlu0 %v305, 8
      %v2077 = vpop.permute.xlu0 %2076
      %2078 = vrot.lane.b32.xlu0 %v307, 8
      %v2079 = vpop.permute.xlu0 %2078
      %2080 = vrot.lane.b32.xlu0 %v319, 8
      %v2081 = vpop.permute.xlu0 %2080
      %vm2082 = vcmask 64512
      %v2083 = vsel %vm2082, %v2073, %v2075
      %v2084 = vsel %vm2082, %v2075, %v2077
      %v2085 = vsel %vm2082, %v2077, %v2079
      %v2086 = vsel %vm2082, %v2079, %v2081
      %v2088 = vsel %vm340, %v2071, 0
      %v2091 = vsel %vm344, %v2083, 0
      %v2094 = vsel %vm344, %v2084, 0
      %v2097 = vsel %vm344, %v2085, 0
      %v2100 = vsel %vm344, %v2086, 0
      %2102 = vmatprep.subr.bf16.mxu0 %v2094
      %2103 = vmatpush1.bf16.msra.mxu0 %v2091
      %2104 = vmatprep.subr.bf16.mxu0 0
      %2105 = vmatpush1.bf16.msra.mxu0 0
      %2106 = vmatprep.subr.bf16.mxu0 0
      %2107 = vmatpush1.bf16.msra.mxu0 0
      %2108 = vmatprep.subr.bf16.mxu0 0
      %2109 = vmatpush1.bf16.msra.mxu0 0
      %2110 = vmatprep.subr.bf16.mxu0 0
      %2111 = vmatpush1.bf16.msra.mxu0 0
      %2112 = vmatprep.subr.bf16.mxu0 0
      %2113 = vmatpush1.bf16.msra.mxu0 0
      %2114 = vmatprep.subr.bf16.mxu0 0
      %2115 = vmatpush1.bf16.msra.mxu0 0
      %2116 = vmatprep.subr.bf16.mxu0 0
      %2117 = vmatpush1.bf16.msra.mxu0 0
      %2118 = vmatprep.subr.bf16.mxu0 0
      %2119 = vmatpush1.bf16.msra.mxu0 0
      %2120 = vmatprep.subr.bf16.mxu0 0
      %2121 = vmatpush1.bf16.msra.mxu0 0
      %2122 = vmatprep.subr.bf16.mxu0 0
      %2123 = vmatpush1.bf16.msra.mxu0 0
      %2124 = vmatprep.subr.bf16.mxu0 0
      %2125 = vmatpush1.bf16.msra.mxu0 0
      %2126 = vmatprep.subr.bf16.mxu0 0
      %2127 = vmatpush1.bf16.msra.mxu0 0
      %2128 = vmatprep.subr.bf16.mxu0 0
      %2129 = vmatpush1.bf16.msra.mxu0 0
      %2130 = vmatprep.subr.bf16.mxu0 0
      %2131 = vmatpush1.bf16.msra.mxu0 0
      %2132 = vmatprep.subr.bf16.mxu0 0
      %2133 = vmatpush1.bf16.msra.mxu0 0
      %2134 = vmatprep.mubr.bf16.mxu0 0
      %2135 = vmatmul.mubr.bf16.gmra.mrb[0].mxu0 %v2088
      %v2136 = vpop.f32.mrb[0].mxu0
      %v2137 = vadd.f32 0.0, %v2136
      %v2138 = vpop.f32.mrb[0].mxu0
      %v2139 = vadd.f32 0.0, %v2138
      %v2140 = vpop.f32.mrb[0].mxu0
      %v2141 = vpop.f32.mrb[0].mxu0
      %2142 = vdwg.mxu0
      %2143 = vmatprep.subr.bf16.mxu0 %v2100
      %2144 = vmatpush1.bf16.msra.mxu0 %v2097
      %2145 = vmatprep.subr.bf16.mxu0 0
      %2146 = vmatpush1.bf16.msra.mxu0 0
      %2147 = vmatprep.subr.bf16.mxu0 0
      %2148 = vmatpush1.bf16.msra.mxu0 0
      %2149 = vmatprep.subr.bf16.mxu0 0
      %2150 = vmatpush1.bf16.msra.mxu0 0
      %2151 = vmatprep.subr.bf16.mxu0 0
      %2152 = vmatpush1.bf16.msra.mxu0 0
      %2153 = vmatprep.subr.bf16.mxu0 0
      %2154 = vmatpush1.bf16.msra.mxu0 0
      %2155 = vmatprep.subr.bf16.mxu0 0
      %2156 = vmatpush1.bf16.msra.mxu0 0
      %2157 = vmatprep.subr.bf16.mxu0 0
      %2158 = vmatpush1.bf16.msra.mxu0 0
      %2159 = vmatprep.subr.bf16.mxu0 0
      %2160 = vmatpush1.bf16.msra.mxu0 0
      %2161 = vmatprep.subr.bf16.mxu0 0
      %2162 = vmatpush1.bf16.msra.mxu0 0
      %2163 = vmatprep.subr.bf16.mxu0 0
      %2164 = vmatpush1.bf16.msra.mxu0 0
      %2165 = vmatprep.subr.bf16.mxu0 0
      %2166 = vmatpush1.bf16.msra.mxu0 0
      %2167 = vmatprep.subr.bf16.mxu0 0
      %2168 = vmatpush1.bf16.msra.mxu0 0
      %2169 = vmatprep.subr.bf16.mxu0 0
      %2170 = vmatpush1.bf16.msra.mxu0 0
      %2171 = vmatprep.subr.bf16.mxu0 0
      %2172 = vmatpush1.bf16.msra.mxu0 0
      %2173 = vmatprep.subr.bf16.mxu0 0
      %2174 = vmatpush1.bf16.msra.mxu0 0
      %2175 = vmatprep.mubr.bf16.mxu0 0
      %2176 = vmatmul.mubr.bf16.gmra.mrb[0].mxu0 %v2088
      %v2177 = vpop.f32.mrb[0].mxu0
      %v2178 = vadd.f32 0.0, %v2177
      %v2179 = vpop.f32.mrb[0].mxu0
      %v2180 = vadd.f32 0.0, %v2179
      %v2181 = vpop.f32.mrb[0].mxu0
      %v2182 = vpop.f32.mrb[0].mxu0
      %2183 = vdwg.mxu0
      %v2184 = vadd.f32 %v2066, %v2137
      %v2185 = vadd.f32 %v2067, %v2139
      %v2186 = vadd.f32 %v2068, %v2178
      %v2187 = vadd.f32 %v2069, %v2180
      %s2188 = scalar_lea.vmem %s1, 64
      %v2189 = vld [vmem:[%s2188] sm:$0xf]
      %2190 = vrot.lane.b32.xlu0 %v298, 7
      %v2191 = vpop.permute.xlu0 %2190
      %2192 = vrot.lane.b32.xlu0 %v306, 7
      %v2193 = vpop.permute.xlu0 %2192
      %2194 = vrot.lane.b32.xlu0 %v305, 7
      %v2195 = vpop.permute.xlu0 %2194
      %2196 = vrot.lane.b32.xlu0 %v307, 7
      %v2197 = vpop.permute.xlu0 %2196
      %2198 = vrot.lane.b32.xlu0 %v319, 7
      %v2199 = vpop.permute.xlu0 %2198
      %vm2200 = vcmask 56320
      %v2201 = vsel %vm2200, %v2191, %v2193
      %v2202 = vsel %vm2200, %v2193, %v2195
      %v2203 = vsel %vm2200, %v2195, %v2197
      %v2204 = vsel %vm2200, %v2197, %v2199
      %v2206 = vsel %vm340, %v2189, 0
      %v2209 = vsel %vm344, %v2201, 0
      %v2212 = vsel %vm344, %v2202, 0
      %v2215 = vsel %vm344, %v2203, 0
      %v2218 = vsel %vm344, %v2204, 0
      %2220 = vmatprep.subr.bf16.mxu0 %v2212
      %2221 = vmatpush1.bf16.msra.mxu0 %v2209
      %2222 = vmatprep.subr.bf16.mxu0 0
      %2223 = vmatpush1.bf16.msra.mxu0 0
      %2224 = vmatprep.subr.bf16.mxu0 0
      %2225 = vmatpush1.bf16.msra.mxu0 0
      %2226 = vmatprep.subr.bf16.mxu0 0
      %2227 = vmatpush1.bf16.msra.mxu0 0
      %2228 = vmatprep.subr.bf16.mxu0 0
      %2229 = vmatpush1.bf16.msra.mxu0 0
      %2230 = vmatprep.subr.bf16.mxu0 0
      %2231 = vmatpush1.bf16.msra.mxu0 0
      %2232 = vmatprep.subr.bf16.mxu0 0
      %2233 = vmatpush1.bf16.msra.mxu0 0
      %2234 = vmatprep.subr.bf16.mxu0 0
      %2235 = vmatpush1.bf16.msra.mxu0 0
      %2236 = vmatprep.subr.bf16.mxu0 0
      %2237 = vmatpush1.bf16.msra.mxu0 0
      %2238 = vmatprep.subr.bf16.mxu0 0
      %2239 = vmatpush1.bf16.msra.mxu0 0
      %2240 = vmatprep.subr.bf16.mxu0 0
      %2241 = vmatpush1.bf16.msra.mxu0 0
      %2242 = vmatprep.subr.bf16.mxu0 0
      %2243 = vmatpush1.bf16.msra.mxu0 0
      %2244 = vmatprep.subr.bf16.mxu0 0
      %2245 = vmatpush1.bf16.msra.mxu0 0
      %2246 = vmatprep.subr.bf16.mxu0 0
      %2247 = vmatpush1.bf16.msra.mxu0 0
      %2248 = vmatprep.subr.bf16.mxu0 0
      %2249 = vmatpush1.bf16.msra.mxu0 0
      %2250 = vmatprep.subr.bf16.mxu0 0
      %2251 = vmatpush1.bf16.msra.mxu0 0
      %2252 = vmatprep.mubr.bf16.mxu0 0
      %2253 = vmatmul.mubr.bf16.gmra.mrb[0].mxu0 %v2206
      %v2254 = vpop.f32.mrb[0].mxu0
      %v2255 = vadd.f32 0.0, %v2254
      %v2256 = vpop.f32.mrb[0].mxu0
      %v2257 = vadd.f32 0.0, %v2256
      %v2258 = vpop.f32.mrb[0].mxu0
      %v2259 = vpop.f32.mrb[0].mxu0
      %2260 = vdwg.mxu0
      %2261 = vmatprep.subr.bf16.mxu0 %v2218
      %2262 = vmatpush1.bf16.msra.mxu0 %v2215
      %2263 = vmatprep.subr.bf16.mxu0 0
      %2264 = vmatpush1.bf16.msra.mxu0 0
      %2265 = vmatprep.subr.bf16.mxu0 0
      %2266 = vmatpush1.bf16.msra.mxu0 0
      %2267 = vmatprep.subr.bf16.mxu0 0
      %2268 = vmatpush1.bf16.msra.mxu0 0
      %2269 = vmatprep.subr.bf16.mxu0 0
      %2270 = vmatpush1.bf16.msra.mxu0 0
      %2271 = vmatprep.subr.bf16.mxu0 0
      %2272 = vmatpush1.bf16.msra.mxu0 0
      %2273 = vmatprep.subr.bf16.mxu0 0
      %2274 = vmatpush1.bf16.msra.mxu0 0
      %2275 = vmatprep.subr.bf16.mxu0 0
      %2276 = vmatpush1.bf16.msra.mxu0 0
      %2277 = vmatprep.subr.bf16.mxu0 0
      %2278 = vmatpush1.bf16.msra.mxu0 0
      %2279 = vmatprep.subr.bf16.mxu0 0
      %2280 = vmatpush1.bf16.msra.mxu0 0
      %2281 = vmatprep.subr.bf16.mxu0 0
      %2282 = vmatpush1.bf16.msra.mxu0 0
      %2283 = vmatprep.subr.bf16.mxu0 0
      %2284 = vmatpush1.bf16.msra.mxu0 0
      %2285 = vmatprep.subr.bf16.mxu0 0
      %2286 = vmatpush1.bf16.msra.mxu0 0
      %2287 = vmatprep.subr.bf16.mxu0 0
      %2288 = vmatpush1.bf16.msra.mxu0 0
      %2289 = vmatprep.subr.bf16.mxu0 0
      %2290 = vmatpush1.bf16.msra.mxu0 0
      %2291 = vmatprep.subr.bf16.mxu0 0
      %2292 = vmatpush1.bf16.msra.mxu0 0
      %2293 = vmatprep.mubr.bf16.mxu0 0
      %2294 = vmatmul.mubr.bf16.gmra.mrb[0].mxu0 %v2206
      %v2295 = vpop.f32.mrb[0].mxu0
      %v2296 = vadd.f32 0.0, %v2295
      %v2297 = vpop.f32.mrb[0].mxu0
      %v2298 = vadd.f32 0.0, %v2297
      %v2299 = vpop.f32.mrb[0].mxu0
      %v2300 = vpop.f32.mrb[0].mxu0
      %2301 = vdwg.mxu0
      %v2302 = vadd.f32 %v2184, %v2255
      %v2303 = vadd.f32 %v2185, %v2257
      %v2304 = vadd.f32 %v2186, %v2296
      %v2305 = vadd.f32 %v2187, %v2298
      %s2306 = scalar_lea.vmem %s1, 68
      %v2307 = vld [vmem:[%s2306] sm:$0xf]
      %2308 = vrot.lane.b32.xlu0 %v298, 6
      %v2309 = vpop.permute.xlu0 %2308
      %2310 = vrot.lane.b32.xlu0 %v306, 6
      %v2311 = vpop.permute.xlu0 %2310
      %2312 = vrot.lane.b32.xlu0 %v305, 6
      %v2313 = vpop.permute.xlu0 %2312
      %2314 = vrot.lane.b32.xlu0 %v307, 6
      %v2315 = vpop.permute.xlu0 %2314
      %2316 = vrot.lane.b32.xlu0 %v319, 6
      %v2317 = vpop.permute.xlu0 %2316
      %vm2318 = vcmask 48128
      %v2319 = vsel %vm2318, %v2309, %v2311
      %v2320 = vsel %vm2318, %v2311, %v2313
      %v2321 = vsel %vm2318, %v2313, %v2315
      %v2322 = vsel %vm2318, %v2315, %v2317
      %v2324 = vsel %vm340, %v2307, 0
      %v2327 = vsel %vm344, %v2319, 0
      %v2330 = vsel %vm344, %v2320, 0
      %v2333 = vsel %vm344, %v2321, 0
      %v2336 = vsel %vm344, %v2322, 0
      %2338 = vmatprep.subr.bf16.mxu0 %v2330
      %2339 = vmatpush1.bf16.msra.mxu0 %v2327
      %2340 = vmatprep.subr.bf16.mxu0 0
      %2341 = vmatpush1.bf16.msra.mxu0 0
      %2342 = vmatprep.subr.bf16.mxu0 0
      %2343 = vmatpush1.bf16.msra.mxu0 0
      %2344 = vmatprep.subr.bf16.mxu0 0
      %2345 = vmatpush1.bf16.msra.mxu0 0
      %2346 = vmatprep.subr.bf16.mxu0 0
      %2347 = vmatpush1.bf16.msra.mxu0 0
      %2348 = vmatprep.subr.bf16.mxu0 0
      %2349 = vmatpush1.bf16.msra.mxu0 0
      %2350 = vmatprep.subr.bf16.mxu0 0
      %2351 = vmatpush1.bf16.msra.mxu0 0
      %2352 = vmatprep.subr.bf16.mxu0 0
      %2353 = vmatpush1.bf16.msra.mxu0 0
      %2354 = vmatprep.subr.bf16.mxu0 0
      %2355 = vmatpush1.bf16.msra.mxu0 0
      %2356 = vmatprep.subr.bf16.mxu0 0
      %2357 = vmatpush1.bf16.msra.mxu0 0
      %2358 = vmatprep.subr.bf16.mxu0 0
      %2359 = vmatpush1.bf16.msra.mxu0 0
      %2360 = vmatprep.subr.bf16.mxu0 0
      %2361 = vmatpush1.bf16.msra.mxu0 0
      %2362 = vmatprep.subr.bf16.mxu0 0
      %2363 = vmatpush1.bf16.msra.mxu0 0
      %2364 = vmatprep.subr.bf16.mxu0 0
      %2365 = vmatpush1.bf16.msra.mxu0 0
      %2366 = vmatprep.subr.bf16.mxu0 0
      %2367 = vmatpush1.bf16.msra.mxu0 0
      %2368 = vmatprep.subr.bf16.mxu0 0
      %2369 = vmatpush1.bf16.msra.mxu0 0
      %2370 = vmatprep.mubr.bf16.mxu0 0
      %2371 = vmatmul.mubr.bf16.gmra.mrb[0].mxu0 %v2324
      %v2372 = vpop.f32.mrb[0].mxu0
      %v2373 = vadd.f32 0.0, %v2372
      %v2374 = vpop.f32.mrb[0].mxu0
      %v2375 = vadd.f32 0.0, %v2374
      %v2376 = vpop.f32.mrb[0].mxu0
      %v2377 = vpop.f32.mrb[0].mxu0
      %2378 = vdwg.mxu0
      %2379 = vmatprep.subr.bf16.mxu0 %v2336
      %2380 = vmatpush1.bf16.msra.mxu0 %v2333
      %2381 = vmatprep.subr.bf16.mxu0 0
      %2382 = vmatpush1.bf16.msra.mxu0 0
      %2383 = vmatprep.subr.bf16.mxu0 0
      %2384 = vmatpush1.bf16.msra.mxu0 0
      %2385 = vmatprep.subr.bf16.mxu0 0
      %2386 = vmatpush1.bf16.msra.mxu0 0
      %2387 = vmatprep.subr.bf16.mxu0 0
      %2388 = vmatpush1.bf16.msra.mxu0 0
      %2389 = vmatprep.subr.bf16.mxu0 0
      %2390 = vmatpush1.bf16.msra.mxu0 0
      %2391 = vmatprep.subr.bf16.mxu0 0
      %2392 = vmatpush1.bf16.msra.mxu0 0
      %2393 = vmatprep.subr.bf16.mxu0 0
      %2394 = vmatpush1.bf16.msra.mxu0 0
      %2395 = vmatprep.subr.bf16.mxu0 0
      %2396 = vmatpush1.bf16.msra.mxu0 0
      %2397 = vmatprep.subr.bf16.mxu0 0
      %2398 = vmatpush1.bf16.msra.mxu0 0
      %2399 = vmatprep.subr.bf16.mxu0 0
      %2400 = vmatpush1.bf16.msra.mxu0 0
      %2401 = vmatprep.subr.bf16.mxu0 0
      %2402 = vmatpush1.bf16.msra.mxu0 0
      %2403 = vmatprep.subr.bf16.mxu0 0
      %2404 = vmatpush1.bf16.msra.mxu0 0
      %2405 = vmatprep.subr.bf16.mxu0 0
      %2406 = vmatpush1.bf16.msra.mxu0 0
      %2407 = vmatprep.subr.bf16.mxu0 0
      %2408 = vmatpush1.bf16.msra.mxu0 0
      %2409 = vmatprep.subr.bf16.mxu0 0
      %2410 = vmatpush1.bf16.msra.mxu0 0
      %2411 = vmatprep.mubr.bf16.mxu0 0
      %2412 = vmatmul.mubr.bf16.gmra.mrb[0].mxu0 %v2324
      %v2413 = vpop.f32.mrb[0].mxu0
      %v2414 = vadd.f32 0.0, %v2413
      %v2415 = vpop.f32.mrb[0].mxu0
      %v2416 = vadd.f32 0.0, %v2415
      %v2417 = vpop.f32.mrb[0].mxu0
      %v2418 = vpop.f32.mrb[0].mxu0
      %2419 = vdwg.mxu0
      %v2420 = vadd.f32 %v2302, %v2373
      %v2421 = vadd.f32 %v2303, %v2375
      %v2422 = vadd.f32 %v2304, %v2414
      %v2423 = vadd.f32 %v2305, %v2416
      %s2424 = scalar_lea.vmem %s1, 72
      %v2425 = vld [vmem:[%s2424] sm:$0xf]
      %2426 = vrot.lane.b32.xlu0 %v306, 56
      %v2427 = vpop.permute.xlu0 %2426
      %2428 = vrot.lane.b32.xlu0 %v305, 56
      %v2429 = vpop.permute.xlu0 %2428
      %2430 = vrot.lane.b32.xlu0 %v307, 56
      %v2431 = vpop.permute.xlu0 %2430
      %2432 = vrot.lane.b32.xlu0 %v319, 56
      %v2433 = vpop.permute.xlu0 %2432
      %2434 = vrot.lane.b32.xlu0 %v320, 56
      %v2435 = vpop.permute.xlu0 %2434
      %vm2436 = vcmask 457728
      %v2437 = vsel %vm2436, %v2427, %v2429
      %v2438 = vsel %vm2436, %v2429, %v2431
      %v2439 = vsel %vm2436, %v2431, %v2433
      %v2440 = vsel %vm2436, %v2433, %v2435
      %v2442 = vsel %vm340, %v2425, 0
      %v2445 = vsel %vm344, %v2437, 0
      %v2448 = vsel %vm344, %v2438, 0
      %v2451 = vsel %vm344, %v2439, 0
      %v2454 = vsel %vm344, %v2440, 0
      %2456 = vmatprep.subr.bf16.mxu0 %v2448
      %2457 = vmatpush1.bf16.msra.mxu0 %v2445
      %2458 = vmatprep.subr.bf16.mxu0 0
      %2459 = vmatpush1.bf16.msra.mxu0 0
      %2460 = vmatprep.subr.bf16.mxu0 0
      %2461 = vmatpush1.bf16.msra.mxu0 0
      %2462 = vmatprep.subr.bf16.mxu0 0
      %2463 = vmatpush1.bf16.msra.mxu0 0
      %2464 = vmatprep.subr.bf16.mxu0 0
      %2465 = vmatpush1.bf16.msra.mxu0 0
      %2466 = vmatprep.subr.bf16.mxu0 0
      %2467 = vmatpush1.bf16.msra.mxu0 0
      %2468 = vmatprep.subr.bf16.mxu0 0
      %2469 = vmatpush1.bf16.msra.mxu0 0
      %2470 = vmatprep.subr.bf16.mxu0 0
      %2471 = vmatpush1.bf16.msra.mxu0 0
      %2472 = vmatprep.subr.bf16.mxu0 0
      %2473 = vmatpush1.bf16.msra.mxu0 0
      %2474 = vmatprep.subr.bf16.mxu0 0
      %2475 = vmatpush1.bf16.msra.mxu0 0
      %2476 = vmatprep.subr.bf16.mxu0 0
      %2477 = vmatpush1.bf16.msra.mxu0 0
      %2478 = vmatprep.subr.bf16.mxu0 0
      %2479 = vmatpush1.bf16.msra.mxu0 0
      %2480 = vmatprep.subr.bf16.mxu0 0
      %2481 = vmatpush1.bf16.msra.mxu0 0
      %2482 = vmatprep.subr.bf16.mxu0 0
      %2483 = vmatpush1.bf16.msra.mxu0 0
      %2484 = vmatprep.subr.bf16.mxu0 0
      %2485 = vmatpush1.bf16.msra.mxu0 0
      %2486 = vmatprep.subr.bf16.mxu0 0
      %2487 = vmatpush1.bf16.msra.mxu0 0
      %2488 = vmatprep.mubr.bf16.mxu0 0
      %2489 = vmatmul.mubr.bf16.gmra.mrb[0].mxu0 %v2442
      %v2490 = vpop.f32.mrb[0].mxu0
      %v2491 = vadd.f32 0.0, %v2490
      %v2492 = vpop.f32.mrb[0].mxu0
      %v2493 = vadd.f32 0.0, %v2492
      %v2494 = vpop.f32.mrb[0].mxu0
      %v2495 = vpop.f32.mrb[0].mxu0
      %2496 = vdwg.mxu0
      %2497 = vmatprep.subr.bf16.mxu0 %v2454
      %2498 = vmatpush1.bf16.msra.mxu0 %v2451
      %2499 = vmatprep.subr.bf16.mxu0 0
      %2500 = vmatpush1.bf16.msra.mxu0 0
      %2501 = vmatprep.subr.bf16.mxu0 0
      %2502 = vmatpush1.bf16.msra.mxu0 0
      %2503 = vmatprep.subr.bf16.mxu0 0
      %2504 = vmatpush1.bf16.msra.mxu0 0
      %2505 = vmatprep.subr.bf16.mxu0 0
      %2506 = vmatpush1.bf16.msra.mxu0 0
      %2507 = vmatprep.subr.bf16.mxu0 0
      %2508 = vmatpush1.bf16.msra.mxu0 0
      %2509 = vmatprep.subr.bf16.mxu0 0
      %2510 = vmatpush1.bf16.msra.mxu0 0
      %2511 = vmatprep.subr.bf16.mxu0 0
      %2512 = vmatpush1.bf16.msra.mxu0 0
      %2513 = vmatprep.subr.bf16.mxu0 0
      %2514 = vmatpush1.bf16.msra.mxu0 0
      %2515 = vmatprep.subr.bf16.mxu0 0
      %2516 = vmatpush1.bf16.msra.mxu0 0
      %2517 = vmatprep.subr.bf16.mxu0 0
      %2518 = vmatpush1.bf16.msra.mxu0 0
      %2519 = vmatprep.subr.bf16.mxu0 0
      %2520 = vmatpush1.bf16.msra.mxu0 0
      %2521 = vmatprep.subr.bf16.mxu0 0
      %2522 = vmatpush1.bf16.msra.mxu0 0
      %2523 = vmatprep.subr.bf16.mxu0 0
      %2524 = vmatpush1.bf16.msra.mxu0 0
      %2525 = vmatprep.subr.bf16.mxu0 0
      %2526 = vmatpush1.bf16.msra.mxu0 0
      %2527 = vmatprep.subr.bf16.mxu0 0
      %2528 = vmatpush1.bf16.msra.mxu0 0
      %2529 = vmatprep.mubr.bf16.mxu0 0
      %2530 = vmatmul.mubr.bf16.gmra.mrb[0].mxu0 %v2442
      %v2531 = vpop.f32.mrb[0].mxu0
      %v2532 = vadd.f32 0.0, %v2531
      %v2533 = vpop.f32.mrb[0].mxu0
      %v2534 = vadd.f32 0.0, %v2533
      %v2535 = vpop.f32.mrb[0].mxu0
      %v2536 = vpop.f32.mrb[0].mxu0
      %2537 = vdwg.mxu0
      %v2538 = vadd.f32 %v2420, %v2491
      %v2539 = vadd.f32 %v2421, %v2493
      %v2540 = vadd.f32 %v2422, %v2532
      %v2541 = vadd.f32 %v2423, %v2534
      %s2542 = scalar_lea.vmem %s1, 76
      %v2543 = vld [vmem:[%s2542] sm:$0xf]
      %2544 = vrot.lane.b32.xlu0 %v306, 55
      %v2545 = vpop.permute.xlu0 %2544
      %2546 = vrot.lane.b32.xlu0 %v305, 55
      %v2547 = vpop.permute.xlu0 %2546
      %2548 = vrot.lane.b32.xlu0 %v307, 55
      %v2549 = vpop.permute.xlu0 %2548
      %2550 = vrot.lane.b32.xlu0 %v319, 55
      %v2551 = vpop.permute.xlu0 %2550
      %2552 = vrot.lane.b32.xlu0 %v320, 55
      %v2553 = vpop.permute.xlu0 %2552
      %vm2554 = vcmask 449536
      %v2555 = vsel %vm2554, %v2545, %v2547
      %v2556 = vsel %vm2554, %v2547, %v2549
      %v2557 = vsel %vm2554, %v2549, %v2551
      %v2558 = vsel %vm2554, %v2551, %v2553
      %v2560 = vsel %vm340, %v2543, 0
      %v2563 = vsel %vm344, %v2555, 0
      %v2566 = vsel %vm344, %v2556, 0
      %v2569 = vsel %vm344, %v2557, 0
      %v2572 = vsel %vm344, %v2558, 0
      %2574 = vmatprep.subr.bf16.mxu0 %v2566
      %2575 = vmatpush1.bf16.msra.mxu0 %v2563
      %2576 = vmatprep.subr.bf16.mxu0 0
      %2577 = vmatpush1.bf16.msra.mxu0 0
      %2578 = vmatprep.subr.bf16.mxu0 0
      %2579 = vmatpush1.bf16.msra.mxu0 0
      %2580 = vmatprep.subr.bf16.mxu0 0
      %2581 = vmatpush1.bf16.msra.mxu0 0
      %2582 = vmatprep.subr.bf16.mxu0 0
      %2583 = vmatpush1.bf16.msra.mxu0 0
      %2584 = vmatprep.subr.bf16.mxu0 0
      %2585 = vmatpush1.bf16.msra.mxu0 0
      %2586 = vmatprep.subr.bf16.mxu0 0
      %2587 = vmatpush1.bf16.msra.mxu0 0
      %2588 = vmatprep.subr.bf16.mxu0 0
      %2589 = vmatpush1.bf16.msra.mxu0 0
      %2590 = vmatprep.subr.bf16.mxu0 0
      %2591 = vmatpush1.bf16.msra.mxu0 0
      %2592 = vmatprep.subr.bf16.mxu0 0
      %2593 = vmatpush1.bf16.msra.mxu0 0
      %2594 = vmatprep.subr.bf16.mxu0 0
      %2595 = vmatpush1.bf16.msra.mxu0 0
      %2596 = vmatprep.subr.bf16.mxu0 0
      %2597 = vmatpush1.bf16.msra.mxu0 0
      %2598 = vmatprep.subr.bf16.mxu0 0
      %2599 = vmatpush1.bf16.msra.mxu0 0
      %2600 = vmatprep.subr.bf16.mxu0 0
      %2601 = vmatpush1.bf16.msra.mxu0 0
      %2602 = vmatprep.subr.bf16.mxu0 0
      %2603 = vmatpush1.bf16.msra.mxu0 0
      %2604 = vmatprep.subr.bf16.mxu0 0
      %2605 = vmatpush1.bf16.msra.mxu0 0
      %2606 = vmatprep.mubr.bf16.mxu0 0
      %2607 = vmatmul.mubr.bf16.gmra.mrb[0].mxu0 %v2560
      %v2608 = vpop.f32.mrb[0].mxu0
      %v2609 = vadd.f32 0.0, %v2608
      %v2610 = vpop.f32.mrb[0].mxu0
      %v2611 = vadd.f32 0.0, %v2610
      %v2612 = vpop.f32.mrb[0].mxu0
      %v2613 = vpop.f32.mrb[0].mxu0
      %2614 = vdwg.mxu0
      %2615 = vmatprep.subr.bf16.mxu0 %v2572
      %2616 = vmatpush1.bf16.msra.mxu0 %v2569
      %2617 = vmatprep.subr.bf16.mxu0 0
      %2618 = vmatpush1.bf16.msra.mxu0 0
      %2619 = vmatprep.subr.bf16.mxu0 0
      %2620 = vmatpush1.bf16.msra.mxu0 0
      %2621 = vmatprep.subr.bf16.mxu0 0
      %2622 = vmatpush1.bf16.msra.mxu0 0
      %2623 = vmatprep.subr.bf16.mxu0 0
      %2624 = vmatpush1.bf16.msra.mxu0 0
      %2625 = vmatprep.subr.bf16.mxu0 0
      %2626 = vmatpush1.bf16.msra.mxu0 0
      %2627 = vmatprep.subr.bf16.mxu0 0
      %2628 = vmatpush1.bf16.msra.mxu0 0
      %2629 = vmatprep.subr.bf16.mxu0 0
      %2630 = vmatpush1.bf16.msra.mxu0 0
      %2631 = vmatprep.subr.bf16.mxu0 0
      %2632 = vmatpush1.bf16.msra.mxu0 0
      %2633 = vmatprep.subr.bf16.mxu0 0
      %2634 = vmatpush1.bf16.msra.mxu0 0
      %2635 = vmatprep.subr.bf16.mxu0 0
      %2636 = vmatpush1.bf16.msra.mxu0 0
      %2637 = vmatprep.subr.bf16.mxu0 0
      %2638 = vmatpush1.bf16.msra.mxu0 0
      %2639 = vmatprep.subr.bf16.mxu0 0
      %2640 = vmatpush1.bf16.msra.mxu0 0
      %2641 = vmatprep.subr.bf16.mxu0 0
      %2642 = vmatpush1.bf16.msra.mxu0 0
      %2643 = vmatprep.subr.bf16.mxu0 0
      %2644 = vmatpush1.bf16.msra.mxu0 0
      %2645 = vmatprep.subr.bf16.mxu0 0
      %2646 = vmatpush1.bf16.msra.mxu0 0
      %2647 = vmatprep.mubr.bf16.mxu0 0
      %2648 = vmatmul.mubr.bf16.gmra.mrb[0].mxu0 %v2560
      %v2649 = vpop.f32.mrb[0].mxu0
      %v2650 = vadd.f32 0.0, %v2649
      %v2651 = vpop.f32.mrb[0].mxu0
      %v2652 = vadd.f32 0.0, %v2651
      %v2653 = vpop.f32.mrb[0].mxu0
      %v2654 = vpop.f32.mrb[0].mxu0
      %2655 = vdwg.mxu0
      %v2656 = vadd.f32 %v2538, %v2609
      %v2657 = vadd.f32 %v2539, %v2611
      %v2658 = vadd.f32 %v2540, %v2650
      %v2659 = vadd.f32 %v2541, %v2652
      %s2660 = scalar_lea.vmem %s1, 80
      %v2661 = vld [vmem:[%s2660] sm:$0xf]
      %2662 = vrot.lane.b32.xlu0 %v306, 54
      %v2663 = vpop.permute.xlu0 %2662
      %2664 = vrot.lane.b32.xlu0 %v305, 54
      %v2665 = vpop.permute.xlu0 %2664
      %2666 = vrot.lane.b32.xlu0 %v307, 54
      %v2667 = vpop.permute.xlu0 %2666
      %2668 = vrot.lane.b32.xlu0 %v319, 54
      %v2669 = vpop.permute.xlu0 %2668
      %2670 = vrot.lane.b32.xlu0 %v320, 54
      %v2671 = vpop.permute.xlu0 %2670
      %vm2672 = vcmask 441344
      %v2673 = vsel %vm2672, %v2663, %v2665
      %v2674 = vsel %vm2672, %v2665, %v2667
      %v2675 = vsel %vm2672, %v2667, %v2669
      %v2676 = vsel %vm2672, %v2669, %v2671
      %v2678 = vsel %vm340, %v2661, 0
      %v2681 = vsel %vm344, %v2673, 0
      %v2684 = vsel %vm344, %v2674, 0
      %v2687 = vsel %vm344, %v2675, 0
      %v2690 = vsel %vm344, %v2676, 0
      %2692 = vmatprep.subr.bf16.mxu0 %v2684
      %2693 = vmatpush1.bf16.msra.mxu0 %v2681
      %2694 = vmatprep.subr.bf16.mxu0 0
      %2695 = vmatpush1.bf16.msra.mxu0 0
      %2696 = vmatprep.subr.bf16.mxu0 0
      %2697 = vmatpush1.bf16.msra.mxu0 0
      %2698 = vmatprep.subr.bf16.mxu0 0
      %2699 = vmatpush1.bf16.msra.mxu0 0
      %2700 = vmatprep.subr.bf16.mxu0 0
      %2701 = vmatpush1.bf16.msra.mxu0 0
      %2702 = vmatprep.subr.bf16.mxu0 0
      %2703 = vmatpush1.bf16.msra.mxu0 0
      %2704 = vmatprep.subr.bf16.mxu0 0
      %2705 = vmatpush1.bf16.msra.mxu0 0
      %2706 = vmatprep.subr.bf16.mxu0 0
      %2707 = vmatpush1.bf16.msra.mxu0 0
      %2708 = vmatprep.subr.bf16.mxu0 0
      %2709 = vmatpush1.bf16.msra.mxu0 0
      %2710 = vmatprep.subr.bf16.mxu0 0
      %2711 = vmatpush1.bf16.msra.mxu0 0
      %2712 = vmatprep.subr.bf16.mxu0 0
      %2713 = vmatpush1.bf16.msra.mxu0 0
      %2714 = vmatprep.subr.bf16.mxu0 0
      %2715 = vmatpush1.bf16.msra.mxu0 0
      %2716 = vmatprep.subr.bf16.mxu0 0
      %2717 = vmatpush1.bf16.msra.mxu0 0
      %2718 = vmatprep.subr.bf16.mxu0 0
      %2719 = vmatpush1.bf16.msra.mxu0 0
      %2720 = vmatprep.subr.bf16.mxu0 0
      %2721 = vmatpush1.bf16.msra.mxu0 0
      %2722 = vmatprep.subr.bf16.mxu0 0
      %2723 = vmatpush1.bf16.msra.mxu0 0
      %2724 = vmatprep.mubr.bf16.mxu0 0
      %2725 = vmatmul.mubr.bf16.gmra.mrb[0].mxu0 %v2678
      %v2726 = vpop.f32.mrb[0].mxu0
      %v2727 = vadd.f32 0.0, %v2726
      %v2728 = vpop.f32.mrb[0].mxu0
      %v2729 = vadd.f32 0.0, %v2728
      %v2730 = vpop.f32.mrb[0].mxu0
      %v2731 = vpop.f32.mrb[0].mxu0
      %2732 = vdwg.mxu0
      %2733 = vmatprep.subr.bf16.mxu0 %v2690
      %2734 = vmatpush1.bf16.msra.mxu0 %v2687
      %2735 = vmatprep.subr.bf16.mxu0 0
      %2736 = vmatpush1.bf16.msra.mxu0 0
      %2737 = vmatprep.subr.bf16.mxu0 0
      %2738 = vmatpush1.bf16.msra.mxu0 0
      %2739 = vmatprep.subr.bf16.mxu0 0
      %2740 = vmatpush1.bf16.msra.mxu0 0
      %2741 = vmatprep.subr.bf16.mxu0 0
      %2742 = vmatpush1.bf16.msra.mxu0 0
      %2743 = vmatprep.subr.bf16.mxu0 0
      %2744 = vmatpush1.bf16.msra.mxu0 0
      %2745 = vmatprep.subr.bf16.mxu0 0
      %2746 = vmatpush1.bf16.msra.mxu0 0
      %2747 = vmatprep.subr.bf16.mxu0 0
      %2748 = vmatpush1.bf16.msra.mxu0 0
      %2749 = vmatprep.subr.bf16.mxu0 0
      %2750 = vmatpush1.bf16.msra.mxu0 0
      %2751 = vmatprep.subr.bf16.mxu0 0
      %2752 = vmatpush1.bf16.msra.mxu0 0
      %2753 = vmatprep.subr.bf16.mxu0 0
      %2754 = vmatpush1.bf16.msra.mxu0 0
      %2755 = vmatprep.subr.bf16.mxu0 0
      %2756 = vmatpush1.bf16.msra.mxu0 0
      %2757 = vmatprep.subr.bf16.mxu0 0
      %2758 = vmatpush1.bf16.msra.mxu0 0
      %2759 = vmatprep.subr.bf16.mxu0 0
      %2760 = vmatpush1.bf16.msra.mxu0 0
      %2761 = vmatprep.subr.bf16.mxu0 0
      %2762 = vmatpush1.bf16.msra.mxu0 0
      %2763 = vmatprep.subr.bf16.mxu0 0
      %2764 = vmatpush1.bf16.msra.mxu0 0
      %2765 = vmatprep.mubr.bf16.mxu0 0
      %2766 = vmatmul.mubr.bf16.gmra.mrb[0].mxu0 %v2678
      %v2767 = vpop.f32.mrb[0].mxu0
      %v2768 = vadd.f32 0.0, %v2767
      %v2769 = vpop.f32.mrb[0].mxu0
      %v2770 = vadd.f32 0.0, %v2769
      %v2771 = vpop.f32.mrb[0].mxu0
      %v2772 = vpop.f32.mrb[0].mxu0
      %2773 = vdwg.mxu0
      %v2774 = vadd.f32 %v2656, %v2727
      %v2775 = vadd.f32 %v2657, %v2729
      %v2776 = vadd.f32 %v2658, %v2768
      %v2777 = vadd.f32 %v2659, %v2770
      %s2778 = scalar_lea.vmem %s1, 84
      %v2779 = vld [vmem:[%s2778] sm:$0xf]
      %2780 = vrot.lane.b32.xlu0 %v306, 46
      %v2781 = vpop.permute.xlu0 %2780
      %2782 = vrot.lane.b32.xlu0 %v305, 46
      %v2783 = vpop.permute.xlu0 %2782
      %2784 = vrot.lane.b32.xlu0 %v307, 46
      %v2785 = vpop.permute.xlu0 %2784
      %2786 = vrot.lane.b32.xlu0 %v319, 46
      %v2787 = vpop.permute.xlu0 %2786
      %2788 = vrot.lane.b32.xlu0 %v320, 46
      %v2789 = vpop.permute.xlu0 %2788
      %vm2790 = vcmask 375808
      %v2791 = vsel %vm2790, %v2781, %v2783
      %v2792 = vsel %vm2790, %v2783, %v2785
      %v2793 = vsel %vm2790, %v2785, %v2787
      %v2794 = vsel %vm2790, %v2787, %v2789
      %v2796 = vsel %vm340, %v2779, 0
      %v2799 = vsel %vm344, %v2791, 0
      %v2802 = vsel %vm344, %v2792, 0
      %v2805 = vsel %vm344, %v2793, 0
      %v2808 = vsel %vm344, %v2794, 0
      %2810 = vmatprep.subr.bf16.mxu0 %v2802
      %2811 = vmatpush1.bf16.msra.mxu0 %v2799
      %2812 = vmatprep.subr.bf16.mxu0 0
      %2813 = vmatpush1.bf16.msra.mxu0 0
      %2814 = vmatprep.subr.bf16.mxu0 0
      %2815 = vmatpush1.bf16.msra.mxu0 0
      %2816 = vmatprep.subr.bf16.mxu0 0
      %2817 = vmatpush1.bf16.msra.mxu0 0
      %2818 = vmatprep.subr.bf16.mxu0 0
      %2819 = vmatpush1.bf16.msra.mxu0 0
      %2820 = vmatprep.subr.bf16.mxu0 0
      %2821 = vmatpush1.bf16.msra.mxu0 0
      %2822 = vmatprep.subr.bf16.mxu0 0
      %2823 = vmatpush1.bf16.msra.mxu0 0
      %2824 = vmatprep.subr.bf16.mxu0 0
      %2825 = vmatpush1.bf16.msra.mxu0 0
      %2826 = vmatprep.subr.bf16.mxu0 0
      %2827 = vmatpush1.bf16.msra.mxu0 0
      %2828 = vmatprep.subr.bf16.mxu0 0
      %2829 = vmatpush1.bf16.msra.mxu0 0
      %2830 = vmatprep.subr.bf16.mxu0 0
      %2831 = vmatpush1.bf16.msra.mxu0 0
      %2832 = vmatprep.subr.bf16.mxu0 0
      %2833 = vmatpush1.bf16.msra.mxu0 0
      %2834 = vmatprep.subr.bf16.mxu0 0
      %2835 = vmatpush1.bf16.msra.mxu0 0
      %2836 = vmatprep.subr.bf16.mxu0 0
      %2837 = vmatpush1.bf16.msra.mxu0 0
      %2838 = vmatprep.subr.bf16.mxu0 0
      %2839 = vmatpush1.bf16.msra.mxu0 0
      %2840 = vmatprep.subr.bf16.mxu0 0
      %2841 = vmatpush1.bf16.msra.mxu0 0
      %2842 = vmatprep.mubr.bf16.mxu0 0
      %2843 = vmatmul.mubr.bf16.gmra.mrb[0].mxu0 %v2796
      %v2844 = vpop.f32.mrb[0].mxu0
      %v2845 = vadd.f32 0.0, %v2844
      %v2846 = vpop.f32.mrb[0].mxu0
      %v2847 = vadd.f32 0.0, %v2846
      %v2848 = vpop.f32.mrb[0].mxu0
      %v2849 = vpop.f32.mrb[0].mxu0
      %2850 = vdwg.mxu0
      %2851 = vmatprep.subr.bf16.mxu0 %v2808
      %2852 = vmatpush1.bf16.msra.mxu0 %v2805
      %2853 = vmatprep.subr.bf16.mxu0 0
      %2854 = vmatpush1.bf16.msra.mxu0 0
      %2855 = vmatprep.subr.bf16.mxu0 0
      %2856 = vmatpush1.bf16.msra.mxu0 0
      %2857 = vmatprep.subr.bf16.mxu0 0
      %2858 = vmatpush1.bf16.msra.mxu0 0
      %2859 = vmatprep.subr.bf16.mxu0 0
      %2860 = vmatpush1.bf16.msra.mxu0 0
      %2861 = vmatprep.subr.bf16.mxu0 0
      %2862 = vmatpush1.bf16.msra.mxu0 0
      %2863 = vmatprep.subr.bf16.mxu0 0
      %2864 = vmatpush1.bf16.msra.mxu0 0
      %2865 = vmatprep.subr.bf16.mxu0 0
      %2866 = vmatpush1.bf16.msra.mxu0 0
      %2867 = vmatprep.subr.bf16.mxu0 0
      %2868 = vmatpush1.bf16.msra.mxu0 0
      %2869 = vmatprep.subr.bf16.mxu0 0
      %2870 = vmatpush1.bf16.msra.mxu0 0
      %2871 = vmatprep.subr.bf16.mxu0 0
      %2872 = vmatpush1.bf16.msra.mxu0 0
      %2873 = vmatprep.subr.bf16.mxu0 0
      %2874 = vmatpush1.bf16.msra.mxu0 0
      %2875 = vmatprep.subr.bf16.mxu0 0
      %2876 = vmatpush1.bf16.msra.mxu0 0
      %2877 = vmatprep.subr.bf16.mxu0 0
      %2878 = vmatpush1.bf16.msra.mxu0 0
      %2879 = vmatprep.subr.bf16.mxu0 0
      %2880 = vmatpush1.bf16.msra.mxu0 0
      %2881 = vmatprep.subr.bf16.mxu0 0
      %2882 = vmatpush1.bf16.msra.mxu0 0
      %2883 = vmatprep.mubr.bf16.mxu0 0
      %2884 = vmatmul.mubr.bf16.gmra.mrb[0].mxu0 %v2796
      %v2885 = vpop.f32.mrb[0].mxu0
      %v2886 = vadd.f32 0.0, %v2885
      %v2887 = vpop.f32.mrb[0].mxu0
      %v2888 = vadd.f32 0.0, %v2887
      %v2889 = vpop.f32.mrb[0].mxu0
      %v2890 = vpop.f32.mrb[0].mxu0
      %2891 = vdwg.mxu0
      %v2892 = vadd.f32 %v2774, %v2845
      %v2893 = vadd.f32 %v2775, %v2847
      %v2894 = vadd.f32 %v2776, %v2886
      %v2895 = vadd.f32 %v2777, %v2888
      %s2896 = scalar_lea.vmem %s1, 88
      %v2897 = vld [vmem:[%s2896] sm:$0xf]
      %2898 = vrot.lane.b32.xlu0 %v306, 45
      %v2899 = vpop.permute.xlu0 %2898
      %2900 = vrot.lane.b32.xlu0 %v305, 45
      %v2901 = vpop.permute.xlu0 %2900
      %2902 = vrot.lane.b32.xlu0 %v307, 45
      %v2903 = vpop.permute.xlu0 %2902
      %2904 = vrot.lane.b32.xlu0 %v319, 45
      %v2905 = vpop.permute.xlu0 %2904
      %2906 = vrot.lane.b32.xlu0 %v320, 45
      %v2907 = vpop.permute.xlu0 %2906
      %vm2908 = vcmask 367616
      %v2909 = vsel %vm2908, %v2899, %v2901
      %v2910 = vsel %vm2908, %v2901, %v2903
      %v2911 = vsel %vm2908, %v2903, %v2905
      %v2912 = vsel %vm2908, %v2905, %v2907
      %v2914 = vsel %vm340, %v2897, 0
      %v2917 = vsel %vm344, %v2909, 0
      %v2920 = vsel %vm344, %v2910, 0
      %v2923 = vsel %vm344, %v2911, 0
      %v2926 = vsel %vm344, %v2912, 0
      %2928 = vmatprep.subr.bf16.mxu0 %v2920
      %2929 = vmatpush1.bf16.msra.mxu0 %v2917
      %2930 = vmatprep.subr.bf16.mxu0 0
      %2931 = vmatpush1.bf16.msra.mxu0 0
      %2932 = vmatprep.subr.bf16.mxu0 0
      %2933 = vmatpush1.bf16.msra.mxu0 0
      %2934 = vmatprep.subr.bf16.mxu0 0
      %2935 = vmatpush1.bf16.msra.mxu0 0
      %2936 = vmatprep.subr.bf16.mxu0 0
      %2937 = vmatpush1.bf16.msra.mxu0 0
      %2938 = vmatprep.subr.bf16.mxu0 0
      %2939 = vmatpush1.bf16.msra.mxu0 0
      %2940 = vmatprep.subr.bf16.mxu0 0
      %2941 = vmatpush1.bf16.msra.mxu0 0
      %2942 = vmatprep.subr.bf16.mxu0 0
      %2943 = vmatpush1.bf16.msra.mxu0 0
      %2944 = vmatprep.subr.bf16.mxu0 0
      %2945 = vmatpush1.bf16.msra.mxu0 0
      %2946 = vmatprep.subr.bf16.mxu0 0
      %2947 = vmatpush1.bf16.msra.mxu0 0
      %2948 = vmatprep.subr.bf16.mxu0 0
      %2949 = vmatpush1.bf16.msra.mxu0 0
      %2950 = vmatprep.subr.bf16.mxu0 0
      %2951 = vmatpush1.bf16.msra.mxu0 0
      %2952 = vmatprep.subr.bf16.mxu0 0
      %2953 = vmatpush1.bf16.msra.mxu0 0
      %2954 = vmatprep.subr.bf16.mxu0 0
      %2955 = vmatpush1.bf16.msra.mxu0 0
      %2956 = vmatprep.subr.bf16.mxu0 0
      %2957 = vmatpush1.bf16.msra.mxu0 0
      %2958 = vmatprep.subr.bf16.mxu0 0
      %2959 = vmatpush1.bf16.msra.mxu0 0
      %2960 = vmatprep.mubr.bf16.mxu0 0
      %2961 = vmatmul.mubr.bf16.gmra.mrb[0].mxu0 %v2914
      %v2962 = vpop.f32.mrb[0].mxu0
      %v2963 = vadd.f32 0.0, %v2962
      %v2964 = vpop.f32.mrb[0].mxu0
      %v2965 = vadd.f32 0.0, %v2964
      %v2966 = vpop.f32.mrb[0].mxu0
      %v2967 = vpop.f32.mrb[0].mxu0
      %2968 = vdwg.mxu0
      %2969 = vmatprep.subr.bf16.mxu0 %v2926
      %2970 = vmatpush1.bf16.msra.mxu0 %v2923
      %2971 = vmatprep.subr.bf16.mxu0 0
      %2972 = vmatpush1.bf16.msra.mxu0 0
      %2973 = vmatprep.subr.bf16.mxu0 0
      %2974 = vmatpush1.bf16.msra.mxu0 0
      %2975 = vmatprep.subr.bf16.mxu0 0
      %2976 = vmatpush1.bf16.msra.mxu0 0
      %2977 = vmatprep.subr.bf16.mxu0 0
      %2978 = vmatpush1.bf16.msra.mxu0 0
      %2979 = vmatprep.subr.bf16.mxu0 0
      %2980 = vmatpush1.bf16.msra.mxu0 0
      %2981 = vmatprep.subr.bf16.mxu0 0
      %2982 = vmatpush1.bf16.msra.mxu0 0
      %2983 = vmatprep.subr.bf16.mxu0 0
      %2984 = vmatpush1.bf16.msra.mxu0 0
      %2985 = vmatprep.subr.bf16.mxu0 0
      %2986 = vmatpush1.bf16.msra.mxu0 0
      %2987 = vmatprep.subr.bf16.mxu0 0
      %2988 = vmatpush1.bf16.msra.mxu0 0
      %2989 = vmatprep.subr.bf16.mxu0 0
      %2990 = vmatpush1.bf16.msra.mxu0 0
      %2991 = vmatprep.subr.bf16.mxu0 0
      %2992 = vmatpush1.bf16.msra.mxu0 0
      %2993 = vmatprep.subr.bf16.mxu0 0
      %2994 = vmatpush1.bf16.msra.mxu0 0
      %2995 = vmatprep.subr.bf16.mxu0 0
      %2996 = vmatpush1.bf16.msra.mxu0 0
      %2997 = vmatprep.subr.bf16.mxu0 0
      %2998 = vmatpush1.bf16.msra.mxu0 0
      %2999 = vmatprep.subr.bf16.mxu0 0
      %3000 = vmatpush1.bf16.msra.mxu0 0
      %3001 = vmatprep.mubr.bf16.mxu0 0
      %3002 = vmatmul.mubr.bf16.gmra.mrb[0].mxu0 %v2914
      %v3003 = vpop.f32.mrb[0].mxu0
      %v3004 = vadd.f32 0.0, %v3003
      %v3005 = vpop.f32.mrb[0].mxu0
      %v3006 = vadd.f32 0.0, %v3005
      %v3007 = vpop.f32.mrb[0].mxu0
      %v3008 = vpop.f32.mrb[0].mxu0
      %3009 = vdwg.mxu0
      %v3010 = vadd.f32 %v2892, %v2963
      %v3011 = vadd.f32 %v2893, %v2965
      %v3012 = vadd.f32 %v2894, %v3004
      %v3013 = vadd.f32 %v2895, %v3006
      %s3014 = scalar_lea.vmem %s1, 92
      %v3015 = vld [vmem:[%s3014] sm:$0xf]
      %3016 = vrot.lane.b32.xlu0 %v306, 44
      %v3017 = vpop.permute.xlu0 %3016
      %3018 = vrot.lane.b32.xlu0 %v305, 44
      %v3019 = vpop.permute.xlu0 %3018
      %3020 = vrot.lane.b32.xlu0 %v307, 44
      %v3021 = vpop.permute.xlu0 %3020
      %3022 = vrot.lane.b32.xlu0 %v319, 44
      %v3023 = vpop.permute.xlu0 %3022
      %3024 = vrot.lane.b32.xlu0 %v320, 44
      %v3025 = vpop.permute.xlu0 %3024
      %vm3026 = vcmask 359424
      %v3027 = vsel %vm3026, %v3017, %v3019
      %v3028 = vsel %vm3026, %v3019, %v3021
      %v3029 = vsel %vm3026, %v3021, %v3023
      %v3030 = vsel %vm3026, %v3023, %v3025
      %v3032 = vsel %vm340, %v3015, 0
      %v3035 = vsel %vm344, %v3027, 0
      %v3038 = vsel %vm344, %v3028, 0
      %v3041 = vsel %vm344, %v3029, 0
      %v3044 = vsel %vm344, %v3030, 0
      %3046 = vmatprep.subr.bf16.mxu0 %v3038
      %3047 = vmatpush1.bf16.msra.mxu0 %v3035
      %3048 = vmatprep.subr.bf16.mxu0 0
      %3049 = vmatpush1.bf16.msra.mxu0 0
      %3050 = vmatprep.subr.bf16.mxu0 0
      %3051 = vmatpush1.bf16.msra.mxu0 0
      %3052 = vmatprep.subr.bf16.mxu0 0
      %3053 = vmatpush1.bf16.msra.mxu0 0
      %3054 = vmatprep.subr.bf16.mxu0 0
      %3055 = vmatpush1.bf16.msra.mxu0 0
      %3056 = vmatprep.subr.bf16.mxu0 0
      %3057 = vmatpush1.bf16.msra.mxu0 0
      %3058 = vmatprep.subr.bf16.mxu0 0
      %3059 = vmatpush1.bf16.msra.mxu0 0
      %3060 = vmatprep.subr.bf16.mxu0 0
      %3061 = vmatpush1.bf16.msra.mxu0 0
      %3062 = vmatprep.subr.bf16.mxu0 0
      %3063 = vmatpush1.bf16.msra.mxu0 0
      %3064 = vmatprep.subr.bf16.mxu0 0
      %3065 = vmatpush1.bf16.msra.mxu0 0
      %3066 = vmatprep.subr.bf16.mxu0 0
      %3067 = vmatpush1.bf16.msra.mxu0 0
      %3068 = vmatprep.subr.bf16.mxu0 0
      %3069 = vmatpush1.bf16.msra.mxu0 0
      %3070 = vmatprep.subr.bf16.mxu0 0
      %3071 = vmatpush1.bf16.msra.mxu0 0
      %3072 = vmatprep.subr.bf16.mxu0 0
      %3073 = vmatpush1.bf16.msra.mxu0 0
      %3074 = vmatprep.subr.bf16.mxu0 0
      %3075 = vmatpush1.bf16.msra.mxu0 0
      %3076 = vmatprep.subr.bf16.mxu0 0
      %3077 = vmatpush1.bf16.msra.mxu0 0
      %3078 = vmatprep.mubr.bf16.mxu0 0
      %3079 = vmatmul.mubr.bf16.gmra.mrb[0].mxu0 %v3032
      %v3080 = vpop.f32.mrb[0].mxu0
      %v3081 = vadd.f32 0.0, %v3080
      %v3082 = vpop.f32.mrb[0].mxu0
      %v3083 = vadd.f32 0.0, %v3082
      %v3084 = vpop.f32.mrb[0].mxu0
      %v3085 = vpop.f32.mrb[0].mxu0
      %3086 = vdwg.mxu0
      %3087 = vmatprep.subr.bf16.mxu0 %v3044
      %3088 = vmatpush1.bf16.msra.mxu0 %v3041
      %3089 = vmatprep.subr.bf16.mxu0 0
      %3090 = vmatpush1.bf16.msra.mxu0 0
      %3091 = vmatprep.subr.bf16.mxu0 0
      %3092 = vmatpush1.bf16.msra.mxu0 0
      %3093 = vmatprep.subr.bf16.mxu0 0
      %3094 = vmatpush1.bf16.msra.mxu0 0
      %3095 = vmatprep.subr.bf16.mxu0 0
      %3096 = vmatpush1.bf16.msra.mxu0 0
      %3097 = vmatprep.subr.bf16.mxu0 0
      %3098 = vmatpush1.bf16.msra.mxu0 0
      %3099 = vmatprep.subr.bf16.mxu0 0
      %3100 = vmatpush1.bf16.msra.mxu0 0
      %3101 = vmatprep.subr.bf16.mxu0 0
      %3102 = vmatpush1.bf16.msra.mxu0 0
      %3103 = vmatprep.subr.bf16.mxu0 0
      %3104 = vmatpush1.bf16.msra.mxu0 0
      %3105 = vmatprep.subr.bf16.mxu0 0
      %3106 = vmatpush1.bf16.msra.mxu0 0
      %3107 = vmatprep.subr.bf16.mxu0 0
      %3108 = vmatpush1.bf16.msra.mxu0 0
      %3109 = vmatprep.subr.bf16.mxu0 0
      %3110 = vmatpush1.bf16.msra.mxu0 0
      %3111 = vmatprep.subr.bf16.mxu0 0
      %3112 = vmatpush1.bf16.msra.mxu0 0
      %3113 = vmatprep.subr.bf16.mxu0 0
      %3114 = vmatpush1.bf16.msra.mxu0 0
      %3115 = vmatprep.subr.bf16.mxu0 0
      %3116 = vmatpush1.bf16.msra.mxu0 0
      %3117 = vmatprep.subr.bf16.mxu0 0
      %3118 = vmatpush1.bf16.msra.mxu0 0
      %3119 = vmatprep.mubr.bf16.mxu0 0
      %3120 = vmatmul.mubr.bf16.gmra.mrb[0].mxu0 %v3032
      %v3121 = vpop.f32.mrb[0].mxu0
      %v3122 = vadd.f32 0.0, %v3121
      %v3123 = vpop.f32.mrb[0].mxu0
      %v3124 = vadd.f32 0.0, %v3123
      %v3125 = vpop.f32.mrb[0].mxu0
      %v3126 = vpop.f32.mrb[0].mxu0
      %3127 = vdwg.mxu0
      %v3128 = vadd.f32 %v3010, %v3081
      %v3129 = vadd.f32 %v3011, %v3083
      %v3130 = vadd.f32 %v3012, %v3122
      %v3131 = vadd.f32 %v3013, %v3124
      %s3132 = scalar_lea.vmem %s1, 96
      %v3133 = vld [vmem:[%s3132] sm:$0xf]
      %3134 = vrot.lane.b32.xlu0 %v306, 36
      %v3135 = vpop.permute.xlu0 %3134
      %3136 = vrot.lane.b32.xlu0 %v305, 36
      %v3137 = vpop.permute.xlu0 %3136
      %3138 = vrot.lane.b32.xlu0 %v307, 36
      %v3139 = vpop.permute.xlu0 %3138
      %3140 = vrot.lane.b32.xlu0 %v319, 36
      %v3141 = vpop.permute.xlu0 %3140
      %3142 = vrot.lane.b32.xlu0 %v320, 36
      %v3143 = vpop.permute.xlu0 %3142
      %vm3144 = vcmask 293888
      %v3145 = vsel %vm3144, %v3135, %v3137
      %v3146 = vsel %vm3144, %v3137, %v3139
      %v3147 = vsel %vm3144, %v3139, %v3141
      %v3148 = vsel %vm3144, %v3141, %v3143
      %v3150 = vsel %vm340, %v3133, 0
      %v3153 = vsel %vm344, %v3145, 0
      %v3156 = vsel %vm344, %v3146, 0
      %v3159 = vsel %vm344, %v3147, 0
      %v3162 = vsel %vm344, %v3148, 0
      %3164 = vmatprep.subr.bf16.mxu0 %v3156
      %3165 = vmatpush1.bf16.msra.mxu0 %v3153
      %3166 = vmatprep.subr.bf16.mxu0 0
      %3167 = vmatpush1.bf16.msra.mxu0 0
      %3168 = vmatprep.subr.bf16.mxu0 0
      %3169 = vmatpush1.bf16.msra.mxu0 0
      %3170 = vmatprep.subr.bf16.mxu0 0
      %3171 = vmatpush1.bf16.msra.mxu0 0
      %3172 = vmatprep.subr.bf16.mxu0 0
      %3173 = vmatpush1.bf16.msra.mxu0 0
      %3174 = vmatprep.subr.bf16.mxu0 0
      %3175 = vmatpush1.bf16.msra.mxu0 0
      %3176 = vmatprep.subr.bf16.mxu0 0
      %3177 = vmatpush1.bf16.msra.mxu0 0
      %3178 = vmatprep.subr.bf16.mxu0 0
      %3179 = vmatpush1.bf16.msra.mxu0 0
      %3180 = vmatprep.subr.bf16.mxu0 0
      %3181 = vmatpush1.bf16.msra.mxu0 0
      %3182 = vmatprep.subr.bf16.mxu0 0
      %3183 = vmatpush1.bf16.msra.mxu0 0
      %3184 = vmatprep.subr.bf16.mxu0 0
      %3185 = vmatpush1.bf16.msra.mxu0 0
      %3186 = vmatprep.subr.bf16.mxu0 0
      %3187 = vmatpush1.bf16.msra.mxu0 0
      %3188 = vmatprep.subr.bf16.mxu0 0
      %3189 = vmatpush1.bf16.msra.mxu0 0
      %3190 = vmatprep.subr.bf16.mxu0 0
      %3191 = vmatpush1.bf16.msra.mxu0 0
      %3192 = vmatprep.subr.bf16.mxu0 0
      %3193 = vmatpush1.bf16.msra.mxu0 0
      %3194 = vmatprep.subr.bf16.mxu0 0
      %3195 = vmatpush1.bf16.msra.mxu0 0
      %3196 = vmatprep.mubr.bf16.mxu0 0
      %3197 = vmatmul.mubr.bf16.gmra.mrb[0].mxu0 %v3150
      %v3198 = vpop.f32.mrb[0].mxu0
      %v3199 = vadd.f32 0.0, %v3198
      %v3200 = vpop.f32.mrb[0].mxu0
      %v3201 = vadd.f32 0.0, %v3200
      %v3202 = vpop.f32.mrb[0].mxu0
      %v3203 = vpop.f32.mrb[0].mxu0
      %3204 = vdwg.mxu0
      %3205 = vmatprep.subr.bf16.mxu0 %v3162
      %3206 = vmatpush1.bf16.msra.mxu0 %v3159
      %3207 = vmatprep.subr.bf16.mxu0 0
      %3208 = vmatpush1.bf16.msra.mxu0 0
      %3209 = vmatprep.subr.bf16.mxu0 0
      %3210 = vmatpush1.bf16.msra.mxu0 0
      %3211 = vmatprep.subr.bf16.mxu0 0
      %3212 = vmatpush1.bf16.msra.mxu0 0
      %3213 = vmatprep.subr.bf16.mxu0 0
      %3214 = vmatpush1.bf16.msra.mxu0 0
      %3215 = vmatprep.subr.bf16.mxu0 0
      %3216 = vmatpush1.bf16.msra.mxu0 0
      %3217 = vmatprep.subr.bf16.mxu0 0
      %3218 = vmatpush1.bf16.msra.mxu0 0
      %3219 = vmatprep.subr.bf16.mxu0 0
      %3220 = vmatpush1.bf16.msra.mxu0 0
      %3221 = vmatprep.subr.bf16.mxu0 0
      %3222 = vmatpush1.bf16.msra.mxu0 0
      %3223 = vmatprep.subr.bf16.mxu0 0
      %3224 = vmatpush1.bf16.msra.mxu0 0
      %3225 = vmatprep.subr.bf16.mxu0 0
      %3226 = vmatpush1.bf16.msra.mxu0 0
      %3227 = vmatprep.subr.bf16.mxu0 0
      %3228 = vmatpush1.bf16.msra.mxu0 0
      %3229 = vmatprep.subr.bf16.mxu0 0
      %3230 = vmatpush1.bf16.msra.mxu0 0
      %3231 = vmatprep.subr.bf16.mxu0 0
      %3232 = vmatpush1.bf16.msra.mxu0 0
      %3233 = vmatprep.subr.bf16.mxu0 0
      %3234 = vmatpush1.bf16.msra.mxu0 0
      %3235 = vmatprep.subr.bf16.mxu0 0
      %3236 = vmatpush1.bf16.msra.mxu0 0
      %3237 = vmatprep.mubr.bf16.mxu0 0
      %3238 = vmatmul.mubr.bf16.gmra.mrb[0].mxu0 %v3150
      %v3239 = vpop.f32.mrb[0].mxu0
      %v3240 = vadd.f32 0.0, %v3239
      %v3241 = vpop.f32.mrb[0].mxu0
      %v3242 = vadd.f32 0.0, %v3241
      %v3243 = vpop.f32.mrb[0].mxu0
      %v3244 = vpop.f32.mrb[0].mxu0
      %3245 = vdwg.mxu0
      %v3246 = vadd.f32 %v3128, %v3199
      %v3247 = vadd.f32 %v3129, %v3201
      %v3248 = vadd.f32 %v3130, %v3240
      %v3249 = vadd.f32 %v3131, %v3242
      %s3250 = scalar_lea.vmem %s1, 100
      %v3251 = vld [vmem:[%s3250] sm:$0xf]
      %3252 = vrot.lane.b32.xlu0 %v306, 35
      %v3253 = vpop.permute.xlu0 %3252
      %3254 = vrot.lane.b32.xlu0 %v305, 35
      %v3255 = vpop.permute.xlu0 %3254
      %3256 = vrot.lane.b32.xlu0 %v307, 35
      %v3257 = vpop.permute.xlu0 %3256
      %3258 = vrot.lane.b32.xlu0 %v319, 35
      %v3259 = vpop.permute.xlu0 %3258
      %3260 = vrot.lane.b32.xlu0 %v320, 35
      %v3261 = vpop.permute.xlu0 %3260
      %vm3262 = vcmask 285696
      %v3263 = vsel %vm3262, %v3253, %v3255
      %v3264 = vsel %vm3262, %v3255, %v3257
      %v3265 = vsel %vm3262, %v3257, %v3259
      %v3266 = vsel %vm3262, %v3259, %v3261
      %v3268 = vsel %vm340, %v3251, 0
      %v3271 = vsel %vm344, %v3263, 0
      %v3274 = vsel %vm344, %v3264, 0
      %v3277 = vsel %vm344, %v3265, 0
      %v3280 = vsel %vm344, %v3266, 0
      %3282 = vmatprep.subr.bf16.mxu0 %v3274
      %3283 = vmatpush1.bf16.msra.mxu0 %v3271
      %3284 = vmatprep.subr.bf16.mxu0 0
      %3285 = vmatpush1.bf16.msra.mxu0 0
      %3286 = vmatprep.subr.bf16.mxu0 0
      %3287 = vmatpush1.bf16.msra.mxu0 0
      %3288 = vmatprep.subr.bf16.mxu0 0
      %3289 = vmatpush1.bf16.msra.mxu0 0
      %3290 = vmatprep.subr.bf16.mxu0 0
      %3291 = vmatpush1.bf16.msra.mxu0 0
      %3292 = vmatprep.subr.bf16.mxu0 0
      %3293 = vmatpush1.bf16.msra.mxu0 0
      %3294 = vmatprep.subr.bf16.mxu0 0
      %3295 = vmatpush1.bf16.msra.mxu0 0
      %3296 = vmatprep.subr.bf16.mxu0 0
      %3297 = vmatpush1.bf16.msra.mxu0 0
      %3298 = vmatprep.subr.bf16.mxu0 0
      %3299 = vmatpush1.bf16.msra.mxu0 0
      %3300 = vmatprep.subr.bf16.mxu0 0
      %3301 = vmatpush1.bf16.msra.mxu0 0
      %3302 = vmatprep.subr.bf16.mxu0 0
      %3303 = vmatpush1.bf16.msra.mxu0 0
      %3304 = vmatprep.subr.bf16.mxu0 0
      %3305 = vmatpush1.bf16.msra.mxu0 0
      %3306 = vmatprep.subr.bf16.mxu0 0
      %3307 = vmatpush1.bf16.msra.mxu0 0
      %3308 = vmatprep.subr.bf16.mxu0 0
      %3309 = vmatpush1.bf16.msra.mxu0 0
      %3310 = vmatprep.subr.bf16.mxu0 0
      %3311 = vmatpush1.bf16.msra.mxu0 0
      %3312 = vmatprep.subr.bf16.mxu0 0
      %3313 = vmatpush1.bf16.msra.mxu0 0
      %3314 = vmatprep.mubr.bf16.mxu0 0
      %3315 = vmatmul.mubr.bf16.gmra.mrb[0].mxu0 %v3268
      %v3316 = vpop.f32.mrb[0].mxu0
      %v3317 = vadd.f32 0.0, %v3316
      %v3318 = vpop.f32.mrb[0].mxu0
      %v3319 = vadd.f32 0.0, %v3318
      %v3320 = vpop.f32.mrb[0].mxu0
      %v3321 = vpop.f32.mrb[0].mxu0
      %3322 = vdwg.mxu0
      %3323 = vmatprep.subr.bf16.mxu0 %v3280
      %3324 = vmatpush1.bf16.msra.mxu0 %v3277
      %3325 = vmatprep.subr.bf16.mxu0 0
      %3326 = vmatpush1.bf16.msra.mxu0 0
      %3327 = vmatprep.subr.bf16.mxu0 0
      %3328 = vmatpush1.bf16.msra.mxu0 0
      %3329 = vmatprep.subr.bf16.mxu0 0
      %3330 = vmatpush1.bf16.msra.mxu0 0
      %3331 = vmatprep.subr.bf16.mxu0 0
      %3332 = vmatpush1.bf16.msra.mxu0 0
      %3333 = vmatprep.subr.bf16.mxu0 0
      %3334 = vmatpush1.bf16.msra.mxu0 0
      %3335 = vmatprep.subr.bf16.mxu0 0
      %3336 = vmatpush1.bf16.msra.mxu0 0
      %3337 = vmatprep.subr.bf16.mxu0 0
      %3338 = vmatpush1.bf16.msra.mxu0 0
      %3339 = vmatprep.subr.bf16.mxu0 0
      %3340 = vmatpush1.bf16.msra.mxu0 0
      %3341 = vmatprep.subr.bf16.mxu0 0
      %3342 = vmatpush1.bf16.msra.mxu0 0
      %3343 = vmatprep.subr.bf16.mxu0 0
      %3344 = vmatpush1.bf16.msra.mxu0 0
      %3345 = vmatprep.subr.bf16.mxu0 0
      %3346 = vmatpush1.bf16.msra.mxu0 0
      %3347 = vmatprep.subr.bf16.mxu0 0
      %3348 = vmatpush1.bf16.msra.mxu0 0
      %3349 = vmatprep.subr.bf16.mxu0 0
      %3350 = vmatpush1.bf16.msra.mxu0 0
      %3351 = vmatprep.subr.bf16.mxu0 0
      %3352 = vmatpush1.bf16.msra.mxu0 0
      %3353 = vmatprep.subr.bf16.mxu0 0
      %3354 = vmatpush1.bf16.msra.mxu0 0
      %3355 = vmatprep.mubr.bf16.mxu0 0
      %3356 = vmatmul.mubr.bf16.gmra.mrb[0].mxu0 %v3268
      %v3357 = vpop.f32.mrb[0].mxu0
      %v3358 = vadd.f32 0.0, %v3357
      %v3359 = vpop.f32.mrb[0].mxu0
      %v3360 = vadd.f32 0.0, %v3359
      %v3361 = vpop.f32.mrb[0].mxu0
      %v3362 = vpop.f32.mrb[0].mxu0
      %3363 = vdwg.mxu0
      %v3364 = vadd.f32 %v3246, %v3317
      %v3365 = vadd.f32 %v3247, %v3319
      %v3366 = vadd.f32 %v3248, %v3358
      %v3367 = vadd.f32 %v3249, %v3360
      %s3368 = scalar_lea.vmem %s1, 104
      %v3369 = vld [vmem:[%s3368] sm:$0xf]
      %3370 = vrot.lane.b32.xlu0 %v306, 34
      %v3371 = vpop.permute.xlu0 %3370
      %3372 = vrot.lane.b32.xlu0 %v305, 34
      %v3373 = vpop.permute.xlu0 %3372
      %3374 = vrot.lane.b32.xlu0 %v307, 34
      %v3375 = vpop.permute.xlu0 %3374
      %3376 = vrot.lane.b32.xlu0 %v319, 34
      %v3377 = vpop.permute.xlu0 %3376
      %3378 = vrot.lane.b32.xlu0 %v320, 34
      %v3379 = vpop.permute.xlu0 %3378
      %vm3380 = vcmask 277504
      %v3381 = vsel %vm3380, %v3371, %v3373
      %v3382 = vsel %vm3380, %v3373, %v3375
      %v3383 = vsel %vm3380, %v3375, %v3377
      %v3384 = vsel %vm3380, %v3377, %v3379
      %v3386 = vsel %vm340, %v3369, 0
      %v3389 = vsel %vm344, %v3381, 0
      %v3392 = vsel %vm344, %v3382, 0
      %v3395 = vsel %vm344, %v3383, 0
      %v3398 = vsel %vm344, %v3384, 0
      %3400 = vmatprep.subr.bf16.mxu0 %v3392
      %3401 = vmatpush1.bf16.msra.mxu0 %v3389
      %3402 = vmatprep.subr.bf16.mxu0 0
      %3403 = vmatpush1.bf16.msra.mxu0 0
      %3404 = vmatprep.subr.bf16.mxu0 0
      %3405 = vmatpush1.bf16.msra.mxu0 0
      %3406 = vmatprep.subr.bf16.mxu0 0
      %3407 = vmatpush1.bf16.msra.mxu0 0
      %3408 = vmatprep.subr.bf16.mxu0 0
      %3409 = vmatpush1.bf16.msra.mxu0 0
      %3410 = vmatprep.subr.bf16.mxu0 0
      %3411 = vmatpush1.bf16.msra.mxu0 0
      %3412 = vmatprep.subr.bf16.mxu0 0
      %3413 = vmatpush1.bf16.msra.mxu0 0
      %3414 = vmatprep.subr.bf16.mxu0 0
      %3415 = vmatpush1.bf16.msra.mxu0 0
      %3416 = vmatprep.subr.bf16.mxu0 0
      %3417 = vmatpush1.bf16.msra.mxu0 0
      %3418 = vmatprep.subr.bf16.mxu0 0
      %3419 = vmatpush1.bf16.msra.mxu0 0
      %3420 = vmatprep.subr.bf16.mxu0 0
      %3421 = vmatpush1.bf16.msra.mxu0 0
      %3422 = vmatprep.subr.bf16.mxu0 0
      %3423 = vmatpush1.bf16.msra.mxu0 0
      %3424 = vmatprep.subr.bf16.mxu0 0
      %3425 = vmatpush1.bf16.msra.mxu0 0
      %3426 = vmatprep.subr.bf16.mxu0 0
      %3427 = vmatpush1.bf16.msra.mxu0 0
      %3428 = vmatprep.subr.bf16.mxu0 0
      %3429 = vmatpush1.bf16.msra.mxu0 0
      %3430 = vmatprep.subr.bf16.mxu0 0
      %3431 = vmatpush1.bf16.msra.mxu0 0
      %3432 = vmatprep.mubr.bf16.mxu0 0
      %3433 = vmatmul.mubr.bf16.gmra.mrb[0].mxu0 %v3386
      %v3434 = vpop.f32.mrb[0].mxu0
      %v3435 = vadd.f32 0.0, %v3434
      %v3436 = vpop.f32.mrb[0].mxu0
      %v3437 = vadd.f32 0.0, %v3436
      %v3438 = vpop.f32.mrb[0].mxu0
      %v3439 = vpop.f32.mrb[0].mxu0
      %3440 = vdwg.mxu0
      %3441 = vmatprep.subr.bf16.mxu0 %v3398
      %3442 = vmatpush1.bf16.msra.mxu0 %v3395
      %3443 = vmatprep.subr.bf16.mxu0 0
      %3444 = vmatpush1.bf16.msra.mxu0 0
      %3445 = vmatprep.subr.bf16.mxu0 0
      %3446 = vmatpush1.bf16.msra.mxu0 0
      %3447 = vmatprep.subr.bf16.mxu0 0
      %3448 = vmatpush1.bf16.msra.mxu0 0
      %3449 = vmatprep.subr.bf16.mxu0 0
      %3450 = vmatpush1.bf16.msra.mxu0 0
      %3451 = vmatprep.subr.bf16.mxu0 0
      %3452 = vmatpush1.bf16.msra.mxu0 0
      %3453 = vmatprep.subr.bf16.mxu0 0
      %3454 = vmatpush1.bf16.msra.mxu0 0
      %3455 = vmatprep.subr.bf16.mxu0 0
      %3456 = vmatpush1.bf16.msra.mxu0 0
      %3457 = vmatprep.subr.bf16.mxu0 0
      %3458 = vmatpush1.bf16.msra.mxu0 0
      %3459 = vmatprep.subr.bf16.mxu0 0
      %3460 = vmatpush1.bf16.msra.mxu0 0
      %3461 = vmatprep.subr.bf16.mxu0 0
      %3462 = vmatpush1.bf16.msra.mxu0 0
      %3463 = vmatprep.subr.bf16.mxu0 0
      %3464 = vmatpush1.bf16.msra.mxu0 0
      %3465 = vmatprep.subr.bf16.mxu0 0
      %3466 = vmatpush1.bf16.msra.mxu0 0
      %3467 = vmatprep.subr.bf16.mxu0 0
      %3468 = vmatpush1.bf16.msra.mxu0 0
      %3469 = vmatprep.subr.bf16.mxu0 0
      %3470 = vmatpush1.bf16.msra.mxu0 0
      %3471 = vmatprep.subr.bf16.mxu0 0
      %3472 = vmatpush1.bf16.msra.mxu0 0
      %3473 = vmatprep.mubr.bf16.mxu0 0
      %3474 = vmatmul.mubr.bf16.gmra.mrb[0].mxu0 %v3386
      %v3475 = vpop.f32.mrb[0].mxu0
      %v3476 = vadd.f32 0.0, %v3475
      %v3477 = vpop.f32.mrb[0].mxu0
      %v3478 = vadd.f32 0.0, %v3477
      %v3479 = vpop.f32.mrb[0].mxu0
      %v3480 = vpop.f32.mrb[0].mxu0
      %3481 = vdwg.mxu0
      %v3482 = vadd.f32 %v3364, %v3435
      %v3483 = vadd.f32 %v3365, %v3437
      %v3484 = vadd.f32 %v3366, %v3476
      %v3485 = vadd.f32 %v3367, %v3478
      %v3486 = vld [vmem:[%s2] sm:$0xff]
      %3488 = vset.pattern.permute.xlu0 0
      %3489 = vperm.xlu0 %3488, %v3486
      %v3490 = vpop.permute.xlu0 %3489
      %v3492 = vadd.f32 %v3482, %v3490
      %v3493 = vadd.f32 %v3483, %v3490
      %v3494 = vadd.f32 %v3484, %v3490
      %v3495 = vadd.f32 %v3485, %v3490
      %v3496 = vand.u32 2147483647, %v3492
      %v3497 = vand.u32 2147483647, %v3493
      %v3498 = vand.u32 2147483647, %v3494
      %v3499 = vand.u32 2147483647, %v3495
      %v3500 = vsub.f32 0.0, %v3496
      %v3501 = vsub.f32 0.0, %v3497
      %v3502 = vsub.f32 0.0, %v3498
      %v3503 = vsub.f32 0.0, %v3499
      %v3504 = vmul.f32 %v3500, 1.442695
      %v3505 = vpow.pop %v3504
      %v3506 = vmul.f32 %v3501, 1.442695
      %v3507 = vpow.pop %v3506
      %v3508 = vmul.f32 %v3502, 1.442695
      %v3509 = vpow.pop %v3508
      %v3510 = vmul.f32 %v3503, 1.442695
      %v3511 = vpow.pop %v3510
      %v3512 = vsub.f32 %v3505, 1.0
      %v3513 = vsub.f32 %v3507, 1.0
      %v3514 = vsub.f32 %v3509, 1.0
      %v3515 = vsub.f32 %v3511, 1.0
      %vm3516 = vcmp.gt.f32.partialorder %v3492, 0.0
      %vm3517 = vcmp.gt.f32.partialorder %v3493, 0.0
      %vm3518 = vcmp.gt.f32.partialorder %v3494, 0.0
      %vm3519 = vcmp.gt.f32.partialorder %v3495, 0.0
      %v3520 = vsel %vm3516, %v3492, %v3512
      %v3521 = vsel %vm3517, %v3493, %v3513
      %v3522 = vsel %vm3518, %v3494, %v3514
      %v3523 = vsel %vm3519, %v3495, %v3515
      %v3524 = vpack.c.bf16 %v3520, %v3520
      %v3525 = vpack.c.bf16 %v3521, %v3521
      %v3526 = vpack.c.bf16 %v3522, %v3522
      %v3527 = vpack.c.bf16 %v3523, %v3523
      %v3528 = vsub.f32 0.0, %v3492
      %v3529 = vsub.f32 0.0, %v3493
      %v3530 = vsub.f32 0.0, %v3494
      %v3531 = vsub.f32 0.0, %v3495
      %v3532 = vsel %vm3516, %v3512, %v3528
      %v3533 = vsel %vm3517, %v3513, %v3529
      %v3534 = vsel %vm3518, %v3514, %v3530
      %v3535 = vsel %vm3519, %v3515, %v3531
      %v3536 = vpack.c.bf16 %v3532, %v3532
      %v3537 = vpack.c.bf16 %v3533, %v3533
      %v3538 = vpack.c.bf16 %v3534, %v3534
      %v3539 = vpack.c.bf16 %v3535, %v3535
      %v3540 = vld [vmem:[%s3] sm:$0xf]
      %v3541 = vld [vmem:[%s4] sm:$0xf]
      %vm3542 = vcmask 64512
      %v3544 = vsel %vm3542, %v3541, 0
      %vm3546 = vcmask 1043456
      %v3548 = vsel %vm3546, %v3536, 0
      %v3551 = vsel %vm3546, %v3537, 0
      %v3554 = vsel %vm3546, %v3538, 0
      %v3557 = vsel %vm3546, %v3539, 0
      %3559 = vmatprep.subr.bf16.mxu0 %v3551
      %3560 = vmatpush1.bf16.msra.mxu0 %v3548
      %3561 = vmatprep.subr.bf16.mxu0 0
      %3562 = vmatpush1.bf16.msra.mxu0 0
      %3563 = vmatprep.subr.bf16.mxu0 0
      %3564 = vmatpush1.bf16.msra.mxu0 0
      %3565 = vmatprep.subr.bf16.mxu0 0
      %3566 = vmatpush1.bf16.msra.mxu0 0
      %3567 = vmatprep.subr.bf16.mxu0 0
      %3568 = vmatpush1.bf16.msra.mxu0 0
      %3569 = vmatprep.subr.bf16.mxu0 0
      %3570 = vmatpush1.bf16.msra.mxu0 0
      %3571 = vmatprep.subr.bf16.mxu0 0
      %3572 = vmatpush1.bf16.msra.mxu0 0
      %3573 = vmatprep.subr.bf16.mxu0 0
      %3574 = vmatpush1.bf16.msra.mxu0 0
      %3575 = vmatprep.subr.bf16.mxu0 0
      %3576 = vmatpush1.bf16.msra.mxu0 0
      %3577 = vmatprep.subr.bf16.mxu0 0
      %3578 = vmatpush1.bf16.msra.mxu0 0
      %3579 = vmatprep.subr.bf16.mxu0 0
      %3580 = vmatpush1.bf16.msra.mxu0 0
      %3581 = vmatprep.subr.bf16.mxu0 0
      %3582 = vmatpush1.bf16.msra.mxu0 0
      %3583 = vmatprep.subr.bf16.mxu0 0
      %3584 = vmatpush1.bf16.msra.mxu0 0
      %3585 = vmatprep.subr.bf16.mxu0 0
      %3586 = vmatpush1.bf16.msra.mxu0 0
      %3587 = vmatprep.subr.bf16.mxu0 0
      %3588 = vmatpush1.bf16.msra.mxu0 0
      %3589 = vmatprep.subr.bf16.mxu0 0
      %3590 = vmatpush1.bf16.msra.mxu0 0
      %3591 = vmatprep.mubr.bf16.mxu0 0
      %3592 = vmatmul.mubr.bf16.gmra.mrb[0].mxu0 %v3544
      %v3593 = vpop.f32.mrb[0].mxu0
      %v3594 = vadd.f32 0.0, %v3593
      %v3595 = vpop.f32.mrb[0].mxu0
      %v3596 = vadd.f32 0.0, %v3595
      %v3597 = vpop.f32.mrb[0].mxu0
      %v3598 = vpop.f32.mrb[0].mxu0
      %3599 = vdwg.mxu0
      %3600 = vmatprep.subr.bf16.mxu0 %v3557
      %3601 = vmatpush1.bf16.msra.mxu0 %v3554
      %3602 = vmatprep.subr.bf16.mxu0 0
      %3603 = vmatpush1.bf16.msra.mxu0 0
      %3604 = vmatprep.subr.bf16.mxu0 0
      %3605 = vmatpush1.bf16.msra.mxu0 0
      %3606 = vmatprep.subr.bf16.mxu0 0
      %3607 = vmatpush1.bf16.msra.mxu0 0
      %3608 = vmatprep.subr.bf16.mxu0 0
      %3609 = vmatpush1.bf16.msra.mxu0 0
      %3610 = vmatprep.subr.bf16.mxu0 0
      %3611 = vmatpush1.bf16.msra.mxu0 0
      %3612 = vmatprep.subr.bf16.mxu0 0
      %3613 = vmatpush1.bf16.msra.mxu0 0
      %3614 = vmatprep.subr.bf16.mxu0 0
      %3615 = vmatpush1.bf16.msra.mxu0 0
      %3616 = vmatprep.subr.bf16.mxu0 0
      %3617 = vmatpush1.bf16.msra.mxu0 0
      %3618 = vmatprep.subr.bf16.mxu0 0
      %3619 = vmatpush1.bf16.msra.mxu0 0
      %3620 = vmatprep.subr.bf16.mxu0 0
      %3621 = vmatpush1.bf16.msra.mxu0 0
      %3622 = vmatprep.subr.bf16.mxu0 0
      %3623 = vmatpush1.bf16.msra.mxu0 0
      %3624 = vmatprep.subr.bf16.mxu0 0
      %3625 = vmatpush1.bf16.msra.mxu0 0
      %3626 = vmatprep.subr.bf16.mxu0 0
      %3627 = vmatpush1.bf16.msra.mxu0 0
      %3628 = vmatprep.subr.bf16.mxu0 0
      %3629 = vmatpush1.bf16.msra.mxu0 0
      %3630 = vmatprep.subr.bf16.mxu0 0
      %3631 = vmatpush1.bf16.msra.mxu0 0
      %3632 = vmatprep.mubr.bf16.mxu0 0
      %3633 = vmatmul.mubr.bf16.gmra.mrb[0].mxu0 %v3544
      %v3634 = vpop.f32.mrb[0].mxu0
      %v3635 = vadd.f32 0.0, %v3634
      %v3636 = vpop.f32.mrb[0].mxu0
      %v3637 = vadd.f32 0.0, %v3636
      %v3638 = vpop.f32.mrb[0].mxu0
      %v3639 = vpop.f32.mrb[0].mxu0
      %3640 = vdwg.mxu0
      %v3642 = vsel %vm3542, %v3540, 0
      %v3645 = vsel %vm3546, %v3524, 0
      %v3648 = vsel %vm3546, %v3525, 0
      %v3651 = vsel %vm3546, %v3526, 0
      %v3654 = vsel %vm3546, %v3527, 0
      %3656 = vmatprep.subr.bf16.mxu0 %v3648
      %3657 = vmatpush1.bf16.msra.mxu0 %v3645
      %3658 = vmatprep.subr.bf16.mxu0 0
      %3659 = vmatpush1.bf16.msra.mxu0 0
      %3660 = vmatprep.subr.bf16.mxu0 0
      %3661 = vmatpush1.bf16.msra.mxu0 0
      %3662 = vmatprep.subr.bf16.mxu0 0
      %3663 = vmatpush1.bf16.msra.mxu0 0
      %3664 = vmatprep.subr.bf16.mxu0 0
      %3665 = vmatpush1.bf16.msra.mxu0 0
      %3666 = vmatprep.subr.bf16.mxu0 0
      %3667 = vmatpush1.bf16.msra.mxu0 0
      %3668 = vmatprep.subr.bf16.mxu0 0
      %3669 = vmatpush1.bf16.msra.mxu0 0
      %3670 = vmatprep.subr.bf16.mxu0 0
      %3671 = vmatpush1.bf16.msra.mxu0 0
      %3672 = vmatprep.subr.bf16.mxu0 0
      %3673 = vmatpush1.bf16.msra.mxu0 0
      %3674 = vmatprep.subr.bf16.mxu0 0
      %3675 = vmatpush1.bf16.msra.mxu0 0
      %3676 = vmatprep.subr.bf16.mxu0 0
      %3677 = vmatpush1.bf16.msra.mxu0 0
      %3678 = vmatprep.subr.bf16.mxu0 0
      %3679 = vmatpush1.bf16.msra.mxu0 0
      %3680 = vmatprep.subr.bf16.mxu0 0
      %3681 = vmatpush1.bf16.msra.mxu0 0
      %3682 = vmatprep.subr.bf16.mxu0 0
      %3683 = vmatpush1.bf16.msra.mxu0 0
      %3684 = vmatprep.subr.bf16.mxu0 0
      %3685 = vmatpush1.bf16.msra.mxu0 0
      %3686 = vmatprep.subr.bf16.mxu0 0
      %3687 = vmatpush1.bf16.msra.mxu0 0
      %3688 = vmatprep.mubr.bf16.mxu0 0
      %3689 = vmatmul.mubr.bf16.gmra.mrb[0].mxu0 %v3642
      %v3690 = vpop.f32.mrb[0].mxu0
      %v3691 = vadd.f32 %v3594, %v3690
      %v3692 = vpop.f32.mrb[0].mxu0
      %v3693 = vadd.f32 %v3596, %v3692
      %v3694 = vpop.f32.mrb[0].mxu0
      %v3695 = vpop.f32.mrb[0].mxu0
      %3696 = vdwg.mxu0
      %3697 = vmatprep.subr.bf16.mxu0 %v3654
      %3698 = vmatpush1.bf16.msra.mxu0 %v3651
      %3699 = vmatprep.subr.bf16.mxu0 0
      %3700 = vmatpush1.bf16.msra.mxu0 0
      %3701 = vmatprep.subr.bf16.mxu0 0
      %3702 = vmatpush1.bf16.msra.mxu0 0
      %3703 = vmatprep.subr.bf16.mxu0 0
      %3704 = vmatpush1.bf16.msra.mxu0 0
      %3705 = vmatprep.subr.bf16.mxu0 0
      %3706 = vmatpush1.bf16.msra.mxu0 0
      %3707 = vmatprep.subr.bf16.mxu0 0
      %3708 = vmatpush1.bf16.msra.mxu0 0
      %3709 = vmatprep.subr.bf16.mxu0 0
      %3710 = vmatpush1.bf16.msra.mxu0 0
      %3711 = vmatprep.subr.bf16.mxu0 0
      %3712 = vmatpush1.bf16.msra.mxu0 0
      %3713 = vmatprep.subr.bf16.mxu0 0
      %3714 = vmatpush1.bf16.msra.mxu0 0
      %3715 = vmatprep.subr.bf16.mxu0 0
      %3716 = vmatpush1.bf16.msra.mxu0 0
      %3717 = vmatprep.subr.bf16.mxu0 0
      %3718 = vmatpush1.bf16.msra.mxu0 0
      %3719 = vmatprep.subr.bf16.mxu0 0
      %3720 = vmatpush1.bf16.msra.mxu0 0
      %3721 = vmatprep.subr.bf16.mxu0 0
      %3722 = vmatpush1.bf16.msra.mxu0 0
      %3723 = vmatprep.subr.bf16.mxu0 0
      %3724 = vmatpush1.bf16.msra.mxu0 0
      %3725 = vmatprep.subr.bf16.mxu0 0
      %3726 = vmatpush1.bf16.msra.mxu0 0
      %3727 = vmatprep.subr.bf16.mxu0 0
      %3728 = vmatpush1.bf16.msra.mxu0 0
      %3729 = vmatprep.mubr.bf16.mxu0 0
      %3730 = vmatmul.mubr.bf16.gmra.mrb[0].mxu0 %v3642
      %v3731 = vpop.f32.mrb[0].mxu0
      %v3732 = vadd.f32 %v3635, %v3731
      %v3733 = vpop.f32.mrb[0].mxu0
      %v3734 = vadd.f32 %v3637, %v3733
      %v3735 = vpop.f32.mrb[0].mxu0
      %v3736 = vpop.f32.mrb[0].mxu0
      %3737 = vdwg.mxu0
      %v3738 = vld [vmem:[%s5] sm:$0xff]
      %3740 = vset.pattern.permute.xlu0 0
      %3741 = vperm.xlu0 %3740, %v3738
      %v3742 = vpop.permute.xlu0 %3741
      %v3744 = vadd.f32 %v3691, %v3742
      %v3745 = vadd.f32 %v3693, %v3742
      %v3746 = vadd.f32 %v3732, %v3742
      %v3747 = vadd.f32 %v3734, %v3742
      %v3748 = vsub.f32 0.0, %v3744
      %v3749 = vsub.f32 0.0, %v3745
      %v3750 = vsub.f32 0.0, %v3746
      %v3751 = vsub.f32 0.0, %v3747
      %v3752 = vmin.f32 %v3748, 80.0
      %v3753 = vmin.f32 %v3749, 80.0
      %v3754 = vmin.f32 %v3750, 80.0
      %v3755 = vmin.f32 %v3751, 80.0
      %v3756 = vmul.f32 %v3752, 1.442695
      %v3757 = vpow.pop %v3756
      %v3758 = vmul.f32 %v3753, 1.442695
      %v3759 = vpow.pop %v3758
      %v3760 = vmul.f32 %v3754, 1.442695
      %v3761 = vpow.pop %v3760
      %v3762 = vmul.f32 %v3755, 1.442695
      %v3763 = vpow.pop %v3762
      %v3764 = vadd.f32 %v3757, 1.0
      %v3765 = vadd.f32 %v3759, 1.0
      %v3766 = vadd.f32 %v3761, 1.0
      %v3767 = vadd.f32 %v3763, 1.0
      %v3768 = vrcp.pop %v3764
      %v3769 = vrcp.pop %v3765
      %v3770 = vrcp.pop %v3766
      %v3771 = vrcp.pop %v3767
      %v3772 = vunpack.c.l.bf16 %v298
      %v3773 = vunpack.c.l.bf16 %v306
      %v3774 = vunpack.c.l.bf16 %v305
      %v3775 = vunpack.c.l.bf16 %v307
      %v3776 = vunpack.c.l.bf16 %v319
      %v3781 = vrot.slane %v3768, 4
      %v3782 = vrot.slane %v3769, 4
      %v3783 = vrot.slane %v3770, 4
      %v3784 = vrot.slane %v3771, 4
      %v3789 = vmul.f32 %v3744, %v3781
      %v3790 = vmul.f32 %v3745, %v3782
      %v3791 = vmul.f32 %v3746, %v3783
      %v3792 = vmul.f32 %v3747, %v3784
      %3797 = vrot.lane.b32.xlu0 %v3789, 111
      %v3798 = vpop.permute.xlu0 %3797
      %3799 = vrot.lane.b32.xlu0 %v3790, 111
      %v3800 = vpop.permute.xlu0 %3799
      %3801 = vrot.lane.b32.xlu0 %v3791, 111
      %v3802 = vpop.permute.xlu0 %3801
      %3803 = vrot.lane.b32.xlu0 %v3792, 111
      %v3804 = vpop.permute.xlu0 %3803
      %vm3805 = vcmask 908288
      %v3806 = vsel %vm3805, %v3798, %v3800
      %v3807 = vsel %vm3805, %v3800, %v3802
      %v3808 = vsel %vm3805, %v3802, %v3804
      %v3814 = vadd.f32 %v3772, %v3798
      %v3815 = vadd.f32 %v3773, %v3806
      %v3816 = vadd.f32 %v3774, %v3807
      %v3817 = vadd.f32 %v3775, %v3808
      %v3818 = vadd.f32 %v3776, %v3804
      %v3824 = vcombine.low %v3814, %v3815
      %v3825 = vcombine.low %v3816, %v3817
      %3826 = vrot.lane.b32.xlu0 %v3824, 17
      %v3827 = vpop.permute.xlu0 %3826
      %3828 = vrot.lane.b32.xlu0 %v3825, 17
      %v3829 = vpop.permute.xlu0 %3828
      %3830 = vrot.lane.b32.xlu0 %v3818, 17
      %v3831 = vpop.permute.xlu0 %3830
      %v3832 = vrot.slane %v3827, 4
      %v3833 = vrot.slane %v3829, 4
      %v3834 = vrot.slane %v3831, 4
      %v3835 = vsel %vm3546, %v3832, %v3833
      %vm3836 = vcmask 138240
      %v3837 = vsel %vm3836, %v3827, %v3835
      %v3838 = vsel %vm3546, %v3833, %v3834
      %v3839 = vsel %vm3836, %v3829, %v3838
      %3842 = vst [vmem:[%s278] sm:$0xff] %v3837
      %3843 = vst [vmem:[%s278 + $0x8] sm:$0xff] %v3839
      %s3844 = smul.u32 4, %s22
      %p3845 = scmp.lt.s32.totalorder %s21, 1
      %s3846 = scalar_select %p3845, %s21, 1
      %p3847 = scmp.lt.s32.totalorder %s3844, 7
      %s3848 = scalar_select %p3847, %s3844, 7
      %s3849 = smul.addr %s3846, 8
      %s3850 = sadd.s32 %s3848, %s3849
      %s3851 = smul.addr %s3850, 4
      %s3852 = scalar_lea.vmem %s6, %s3851
      // Predicated region
      $region45: #{gated_conv.1} parent=43 // pred_check
        %p3853 = pneg %p180
      $region46: #{gated_conv.1} parent=43 // pred_check_branch
        %3855 = sbr.rel (%p3853) target = $region48
      $region47: #{gated_conv.1} parent=43 // pred_region
        %s3856 = smul.u32 4, %s22
      $region48: #{gated_conv.1} parent=43 // pred_fallthru
        _
    $region44: #{gated_conv.1} parent=5 // pred_fallthru
      _
    %p3857 = scmp.le.s32.totalorder 2, %s12
    // Predicated region
    $region49: #{gated_conv.1} parent=5 // pred_check
      %p3858 = pneg %p3857
    $region50: #{gated_conv.1} parent=5 // pred_check_branch
      %3860 = sbr.rel (%p3858) target = $region52
    $region51: #{gated_conv.1} parent=5 // pred_region
      %s3861 = ssub.s32 %s12, 2
      // Predicated region
      $region53: #{gated_conv.1} parent=51 // pred_check
        %p3862 = pneg %p186
      $region54: #{gated_conv.1} parent=51 // pred_check_branch
        %3864 = sbr.rel (%p3862) target = $region56
      $region55: #{gated_conv.1} parent=51 // pred_region
        %s3865 = smul.u32 4, %s24
        %p3866 = scmp.lt.s32.totalorder %s23, 1
        %s3867 = scalar_select %p3866, %s23, 1
        %p3868 = scmp.lt.s32.totalorder %s3865, 7
        %s3869 = scalar_select %p3868, %s3865, 7
        %s3870 = smul.addr %s3867, 8
        %s3871 = sadd.s32 %s3869, %s3870
        %s3872 = smul.addr %s3871, 4
        %s3873 = scalar_lea.vmem %s6, %s3872
      $region56: #{gated_conv.1} parent=51 // pred_fallthru
        _
    $region52: #{gated_conv.1} parent=5 // pred_fallthru
      _
  $region6: #{gated_conv.1} parent=0 // loop_footer
    %s16 = sadd.s32 1, %s12
  $region7: #{gated_conv.1} parent=0 // loop_footer_branch
    %11 = sbr.rel target = $region3
  $region8: #{gated_conv.1} parent=0 // loop_exit
    _

</llo_original>
